<compile_context>
chip_gen: v6e
topology: v6e:2x2x1
jax: 0.10.0
libtpu: 0.0.40
codegen_flags: <defaults>
</compile_context>

<pallas_src>
import jax
import jax.numpy as jnp
from jax import lax
from jax.experimental import pallas as pl
from jax.experimental.pallas import tpu as pltpu


def make_tempcnn_kernel(Bt, T, H, K):
    assert K % 2 == 1, "'same' padding via K//2 requires an odd kernel size"
    P = K // 2
    R = Bt * T  # rows fed to every matmul

    def kernel(xu_ref,                 # (R, K*D)   matmul dtype (bf16 or f32)
               w1_ref, t1_ref,         # (K*D, H)   mm dtype,  (1, H) f32
               w2_ref, t2_ref,         # (K, H, H)  mm dtype,  (1, H) f32
               w3_ref, t3_ref,         # (K, H, H)  mm dtype,  (1, H) f32
               wd_ref, td_ref,         # (H, 4H)    mm dtype,  (1, 4H) f32
               wf_ref, bf_ref,         # (4H, H)    mm dtype,  (1, H) f32
               o_ref,                  # (R, H) f32
               pad_h):                 # scratch (Bt, T+2P, H) f32
        f32 = jnp.float32
        mmdt = w1_ref.dtype            # matmul operand dtype (bf16 or f32)

        # Re-zero only the 2*P halo rows of the persistent pad scratch every step;
        # the interior is always fully overwritten below.  Re-zeroing per step
        # (instead of only at program_id()==0) keeps the kernel correct under
        # megacore "parallel" sharding, where a core may never see grid index 0.
        zh = jnp.zeros((Bt, P, H), f32)
        pad_h[:, 0:P, :] = zh
        pad_h[:, T + P:T + 2 * P, :] = zh

        # conv1 + BN + ReLU: im2col was done in the wrapper -> one matmul.
        # (BN scale and conv bias are folded into w1 / t1.)
        h = jnp.dot(xu_ref[...], w1_ref[...], preferred_element_type=f32)
        h = jnp.maximum(h + t1_ref[...], 0.0)                        # (R, H) f32

        def conv_bn_relu(h_prev, w_ref, t_ref):
            # K-tap accumulation: for each tap, a sublane-shifted slice of the
            # padded activations against one (H, H) weight slab, accumulated in
            # f32.  No lane concat, no (R, K*H) temporary.
            pad_h[:, P:P + T, :] = h_prev.reshape(Bt, T, H)          # f32 store
            acc = jnp.dot(pad_h[:, 0:T, :].astype(mmdt).reshape(R, H),
                          w_ref[0], preferred_element_type=f32)
            for k in range(1, K):                                    # unrolled
                lhs = pad_h[:, k:k + T, :].astype(mmdt).reshape(R, H)
                acc = acc + jnp.dot(lhs, w_ref[k], preferred_element_type=f32)
            return jnp.maximum(acc + t_ref[...], 0.0)                # (R, H) f32

        h = conv_bn_relu(h, w2_ref, t2_ref)
        h = conv_bn_relu(h, w3_ref, t3_ref)

        # Dense block (per timestep, as in the PyTorch model): Linear + BN + ReLU
        # (BN scale + bias folded).  Dropout layers are identity in eval mode.
        d = jnp.dot(h.astype(mmdt), wd_ref[...], preferred_element_type=f32)
        d = jnp.maximum(d + td_ref[...], 0.0)                        # (R, 4H) f32

        # Classifier: Linear(4H -> H) + LogSoftmax(dim=-1), all-f32 epilogue.
        logits = jnp.dot(d.astype(mmdt), wf_ref[...], preferred_element_type=f32)
        logits = logits + bf_ref[...]
        z = logits - jnp.max(logits, axis=-1, keepdims=True)
        lse = jnp.log(jnp.sum(jnp.exp(z), axis=-1, keepdims=True))
        o_ref[...] = (z - lse).astype(o_ref.dtype)

    return kernel


def _tensorcores_per_chip():
    """Best-effort guess: 2 TensorCores per chip on v4/v5p/v7x-class parts, 1 on
    v5e/v6e.  Only used for tiling heuristics; never affects correctness."""
    try:
        kind = jax.devices()[0].device_kind.lower()
    except Exception:
        return 1
    return 2 if any(tag in kind for tag in ("v7", "v5p", "v4")) else 1


def _pick_block_batch(B, T, max_rows=2048, min_steps=1):
    """Largest batch tile that (a) divides B, (b) keeps M = Bt*T <= max_rows, and
    (c) leaves at least `min_steps` grid steps when possible.  Single-TC chips
    (v5e/v6e) want min_steps=1 (grid of 1 halves the ~0.35us per-step overhead);
    2-TC chips want >= 2 steps per core so each core's pipeline double-buffers."""
    divisors = [bt for bt in range(1, B + 1) if B % bt == 0 and bt * T <= max_rows]
    if not divisors:
        return 1
    ok = [bt for bt in divisors if B // bt >= min_steps]
    return max(ok) if ok else max(divisors)


def tempcnn_forward(x, kparams, K, block_batch=None, use_bf16=True):
    B, T, D = x.shape
    H = kparams["t1"].shape[-1]
    DH = kparams["td"].shape[-1]
    P = K // 2
    mm_dtype = jnp.bfloat16 if use_bf16 else jnp.float32

    if block_batch is None:
        cores = _tensorcores_per_chip()
        min_steps = 1 if cores == 1 else 2 * cores
        Bt = _pick_block_batch(B, T, max_rows=2048, min_steps=min_steps)
    else:
        Bt = block_batch
    assert B % Bt == 0, "batch tile must divide the batch"
    R = Bt * T

    # conv1 im2col in the wrapper (a cheap XLA gather on the smallest operand):
    # xu[b*T + t, k*D + d] = xpad[b, t + k, d], matching w1's (K*D, H) flattening.
    xp = jnp.pad(x, ((0, 0), (P, P), (0, 0)))
    cols = jnp.stack([xp[:, k:k + T, :] for k in range(K)], axis=2)  # (B, T, K, D)
    xu = cols.reshape(B * T, K * D).astype(mm_dtype)

    mm = lambda name: kparams[name].astype(mm_dtype)   # matmul operands only
    f32p = lambda name: kparams[name]                  # shifts/bias stay f32

    kernel = make_tempcnn_kernel(Bt, T, H, K)

    def const_spec(shape):
        n = len(shape)
        return pl.BlockSpec(shape, lambda b, _n=n: (0,) * _n)

    in_specs = [
        pl.BlockSpec((R, K * D), lambda b: (b, 0)),            # unfolded x block
        const_spec((K * D, H)), const_spec((1, H)),            # conv1 (folded BN)
        const_spec((K, H, H)), const_spec((1, H)),             # conv2
        const_spec((K, H, H)), const_spec((1, H)),             # conv3
        const_spec((H, DH)), const_spec((1, DH)),              # dense
        const_spec((DH, H)), const_spec((1, H)),               # classifier
    ]
    out_spec = pl.BlockSpec((R, H), lambda b: (b, 0))

    # VMEM budget: double-buffered (R, K*D)/(R, H) blocks, resident weights, one
    # f32 pad scratch and the (R, 4H) temporaries total well under 2 MiB at these
    # shapes, so the default scoped limit is fine on every chip (incl. v7x's
    # 64 MiB physical / 32 MiB scoped).  Re-derive Bt / set vmem_limit_bytes via
    # pltpu.CompilerParams if T, H or max_rows grow substantially.
    grid_spec = pltpu.PrefetchScalarGridSpec(
        num_scalar_prefetch=0,
        grid=(B // Bt,),
        in_specs=in_specs,
        out_specs=out_spec,
        scratch_shapes=[
            pltpu.VMEM((Bt, T + 2 * P, H), jnp.float32),   # padded hidden buffer
        ],
    )

    out = pl.pallas_call(
        kernel,
        out_shape=jax.ShapeDtypeStruct((B * T, H), jnp.float32),
        grid_spec=grid_spec,
        compiler_params=pltpu.CompilerParams(dimension_semantics=("parallel",)),
    )(xu,
      mm("w1"), f32p("t1"),
      mm("w2"), f32p("t2"),
      mm("w3"), f32p("t3"),
      mm("wd"), f32p("td"),
      mm("wf"), f32p("bf"))

    return out.reshape(B, T, H)


# ----------------------------------------------------------------------------
# Deterministic parameter construction (PyTorch layouts) + conversion + ref.
# ----------------------------------------------------------------------------
def init_params(key, D, H, K):
    DH = 4 * H
    ks = jax.random.split(key, 32)
    it = iter(ks)

    def rnd(shape, scale=0.1):
        return scale * jax.random.normal(next(it), shape, jnp.float32)

    def bn(C):
        gamma = 1.0 + rnd((C,))
        beta = rnd((C,))
        mean = rnd((C,))
        var = 1.0 + jnp.abs(rnd((C,)))
        return gamma, beta, mean, var

    p = {}
    # Conv1d weights in PyTorch layout (Cout, Cin, K)
    p["conv1_w"], p["conv1_b"] = rnd((H, D, K)), rnd((H,))
    p["bn1"] = bn(H)
    p["conv2_w"], p["conv2_b"] = rnd((H, H, K)), rnd((H,))
    p["bn2"] = bn(H)
    p["conv3_w"], p["conv3_b"] = rnd((H, H, K)), rnd((H,))
    p["bn3"] = bn(H)
    # Linear weights in PyTorch layout (out, in)
    p["dense_w"], p["dense_b"] = rnd((DH, H)), rnd((DH,))
    p["bnd"] = bn(DH)
    p["final_w"], p["final_b"] = rnd((H, DH)), rnd((H,))
    return p


def to_kernel_params(p, eps=1e-5):
    """Fold eval-mode BatchNorm and the conv/linear bias into the weights:
       ((x @ w + b) - mean)/sqrt(var+eps)*gamma + beta == x @ (w*s) + (b*s + t),
       with s = gamma/sqrt(var+eps), t = beta - mean*s.
       conv1 weight is flattened to (K*D, H) (im2col matmul); conv2/3 stay
       (K, Cin, Cout) for in-kernel tap accumulation."""
    def fold(bn):
        gamma, beta, mean, var = bn
        s = gamma / jnp.sqrt(var + eps)
        return s, beta - mean * s

    kp = {}
    for i, name in ((1, "conv1"), (2, "conv2"), (3, "conv3")):
        w = jnp.transpose(p[f"{name}_w"], (2, 1, 0))          # (K, Cin, Cout)
        s, t = fold(p[f"bn{i}"])
        w = w * s[None, None, :]
        kp[f"w{i}"] = w.reshape(-1, w.shape[-1]) if i == 1 else w
        kp[f"t{i}"] = (p[f"{name}_b"] * s + t)[None, :]
    sd, td = fold(p["bnd"])
    kp["wd"] = p["dense_w"].T * sd[None, :]                   # (H, 4H)
    kp["td"] = (p["dense_b"] * sd + td)[None, :]
    kp["wf"] = p["final_w"].T                                 # (4H, H)
    kp["bf"] = p["final_b"][None, :]
    return kp


def reference_forward(x, p, K, eps=1e-5):
    P = K // 2

    def conv_block(xc, w, b, bn):
        gamma, beta, mean, var = bn
        y = lax.conv_general_dilated(xc, w, (1,), [(P, P)],
                                     dimension_numbers=("NCH", "OIH", "NCH"))
        y = y + b[None, :, None]
        y = (y - mean[None, :, None]) / jnp.sqrt(var[None, :, None] + eps)
        y = y * gamma[None, :, None] + beta[None, :, None]
        return jnp.maximum(y, 0.0)

    xc = jnp.transpose(x, (0, 2, 1))                       # (B, D, T)
    xc = conv_block(xc, p["conv1_w"], p["conv1_b"], p["bn1"])
    xc = conv_block(xc, p["conv2_w"], p["conv2_b"], p["bn2"])
    xc = conv_block(xc, p["conv3_w"], p["conv3_b"], p["bn3"])
    h = jnp.transpose(xc, (0, 2, 1))                       # (B, T, H)

    d = h @ p["dense_w"].T + p["dense_b"]                  # (B, T, 4H)
    gamma, beta, mean, var = p["bnd"]
    d = (d - mean) / jnp.sqrt(var + eps) * gamma + beta    # eval-mode BN1d(4H)
    d = jnp.maximum(d, 0.0)

    logits = d @ p["final_w"].T + p["final_b"]             # (B, T, H)
    return jax.nn.log_softmax(logits, axis=-1)


if __name__ == "__main__":
    # small TempCNN: input_dim=4, seq=16, hidden=32, kernel=5, batch 16
    # (single-TC chips pick Bt=16 -> grid of 1 with M=256 rows per matmul).
    B, T, D, H, K = 16, 16, 4, 32, 5

    key = jax.random.PRNGKey(0)
    kx, kparam = jax.random.split(key)
    x = jax.random.normal(kx, (B, T, D), jnp.float32)

    params = init_params(kparam, D, H, K)
    kparams = to_kernel_params(params)
    ref = reference_forward(x, params, K)

    # f32-operand path: exact-semantics check vs. the f32 JAX reference.
    out_f32 = jax.block_until_ready(tempcnn_forward(x, kparams, K, use_bf16=False))
    assert out_f32.shape == (B, T, H)
    assert jnp.allclose(out_f32, ref, rtol=1e-4, atol=1e-4), "f32 path mismatch"

    # bf16-operand path (default; f32 accumulate + f32 epilogue): looser tolerance.
    out_bf16 = jax.block_until_ready(tempcnn_forward(x, kparams, K, use_bf16=True))
    assert out_bf16.shape == (B, T, H)
    assert jnp.allclose(out_bf16, ref, rtol=5e-2, atol=5e-2), "bf16 path mismatch"

    print("KERNEL_OK")
</pallas_src>

<mosaic_0001>
module attributes {stable_mosaic.version = 11 : i64} {
  func.func @kernel(%arg0: i32, %arg1: memref<256x20xf32, #tpu.memory_space<vmem>>, %arg2: memref<20x32xf32, #tpu.memory_space<vmem>>, %arg3: memref<1x32xf32, #tpu.memory_space<vmem>>, %arg4: memref<5x32x32xf32, #tpu.memory_space<vmem>>, %arg5: memref<1x32xf32, #tpu.memory_space<vmem>>, %arg6: memref<5x32x32xf32, #tpu.memory_space<vmem>>, %arg7: memref<1x32xf32, #tpu.memory_space<vmem>>, %arg8: memref<32x128xf32, #tpu.memory_space<vmem>>, %arg9: memref<1x128xf32, #tpu.memory_space<vmem>>, %arg10: memref<128x32xf32, #tpu.memory_space<vmem>>, %arg11: memref<1x32xf32, #tpu.memory_space<vmem>>, %arg12: memref<256x32xf32, #tpu.memory_space<vmem>>, %arg13: memref<16x20x32xf32, #tpu.memory_space<vmem>>) attributes {dimension_semantics = [#tpu.dimension_semantics<parallel>], iteration_bounds = array<i64: 1>, scalar_prefetch = 0 : i64, scratch_operands = 1 : i64, tpu.core_type = #tpu.core_type<tc>, window_params = [{transform_indices = @transform_0, window_bounds = array<i64: 256, 20>}, {pipeline_mode = #tpu.pipeline_mode<synchronous>, transform_indices = @transform_1, window_bounds = array<i64: 20, 32>}, {pipeline_mode = #tpu.pipeline_mode<synchronous>, transform_indices = @transform_2, window_bounds = array<i64: 1, 32>}, {pipeline_mode = #tpu.pipeline_mode<synchronous>, transform_indices = @transform_3, window_bounds = array<i64: 5, 32, 32>}, {pipeline_mode = #tpu.pipeline_mode<synchronous>, transform_indices = @transform_4, window_bounds = array<i64: 1, 32>}, {pipeline_mode = #tpu.pipeline_mode<synchronous>, transform_indices = @transform_5, window_bounds = array<i64: 5, 32, 32>}, {pipeline_mode = #tpu.pipeline_mode<synchronous>, transform_indices = @transform_6, window_bounds = array<i64: 1, 32>}, {pipeline_mode = #tpu.pipeline_mode<synchronous>, transform_indices = @transform_7, window_bounds = array<i64: 32, 128>}, {pipeline_mode = #tpu.pipeline_mode<synchronous>, transform_indices = @transform_8, window_bounds = array<i64: 1, 128>}, {pipeline_mode = #tpu.pipeline_mode<synchronous>, transform_indices = @transform_9, window_bounds = array<i64: 128, 32>}, {pipeline_mode = #tpu.pipeline_mode<synchronous>, transform_indices = @transform_10, window_bounds = array<i64: 1, 32>}, {transform_indices = @transform_11, window_bounds = array<i64: 256, 32>}]} {
    %cst = arith.constant 0.000000e+00 : f32
    %0 = vector.broadcast %cst : f32 to vector<16x2x32xf32>
    %c0 = arith.constant 0 : index
    %c0_0 = arith.constant 0 : index
    %c0_1 = arith.constant 0 : index
    %1 = vector.load %arg13[%c0, %c0_0, %c0_1] : memref<16x20x32xf32, #tpu.memory_space<vmem>>, vector<16x2x32xf32>
    tpu.vector_store %arg13[%c0, %c0_0, %c0_1], %0 {strides = array<i32>} : memref<16x20x32xf32, #tpu.memory_space<vmem>>, vector<16x2x32xf32>,
    %c0_2 = arith.constant 0 : index
    %c18 = arith.constant 18 : index
    %c0_3 = arith.constant 0 : index
    %2 = vector.load %arg13[%c0_2, %c18, %c0_3] : memref<16x20x32xf32, #tpu.memory_space<vmem>>, vector<16x2x32xf32>
    tpu.vector_store %arg13[%c0_2, %c18, %c0_3], %0 {strides = array<i32>} : memref<16x20x32xf32, #tpu.memory_space<vmem>>, vector<16x2x32xf32>,
    %c0_4 = arith.constant 0 : index
    %c0_5 = arith.constant 0 : index
    %3 = vector.load %arg1[%c0_4, %c0_5] : memref<256x20xf32, #tpu.memory_space<vmem>>, vector<256x20xf32>
    %c0_6 = arith.constant 0 : index
    %c0_7 = arith.constant 0 : index
    %4 = vector.load %arg2[%c0_6, %c0_7] : memref<20x32xf32, #tpu.memory_space<vmem>>, vector<20x32xf32>
    %cst_8 = arith.constant dense<0.000000e+00> : vector<256x32xf32>
    %5 = tpu.matmul %3, %4, %cst_8 {dimension_numbers = #tpu.dot_dimension_numbers<[1], [0], [0], [1], [0, 0, 1, 1], [], []>} : vector<256x20xf32>, vector<20x32xf32>, vector<256x32xf32> -> vector<256x32xf32>
    %c0_9 = arith.constant 0 : index
    %c0_10 = arith.constant 0 : index
    %6 = vector.load %arg3[%c0_9, %c0_10] : memref<1x32xf32, #tpu.memory_space<vmem>>, vector<1x32xf32>
    %7 = vector.broadcast %6 : vector<1x32xf32> to vector<256x32xf32>
    %8 = arith.addf %5, %7 : vector<256x32xf32>
    %cst_11 = arith.constant 0.000000e+00 : f32
    %9 = vector.broadcast %cst_11 : f32 to vector<256x32xf32>
    %10 = arith.maximumf %8, %9 : vector<256x32xf32>
    %11 = vector.shape_cast %10 : vector<256x32xf32> to vector<16x16x32xf32>
    %c0_12 = arith.constant 0 : index
    %c2 = arith.constant 2 : index
    %c0_13 = arith.constant 0 : index
    %12 = vector.load %arg13[%c0_12, %c2, %c0_13] : memref<16x20x32xf32, #tpu.memory_space<vmem>>, vector<16x16x32xf32>
    tpu.vector_store %arg13[%c0_12, %c2, %c0_13], %11 {strides = array<i32>} : memref<16x20x32xf32, #tpu.memory_space<vmem>>, vector<16x16x32xf32>,
    %c0_14 = arith.constant 0 : index
    %c0_15 = arith.constant 0 : index
    %c0_16 = arith.constant 0 : index
    %13 = vector.load %arg13[%c0_14, %c0_15, %c0_16] : memref<16x20x32xf32, #tpu.memory_space<vmem>>, vector<16x16x32xf32>
    %14 = vector.shape_cast %13 : vector<16x16x32xf32> to vector<256x32xf32>
    %c0_17 = arith.constant 0 : index
    %c0_18 = arith.constant 0 : index
    %c0_19 = arith.constant 0 : index
    %15 = vector.load %arg4[%c0_17, %c0_18, %c0_19] : memref<5x32x32xf32, #tpu.memory_space<vmem>>, vector<1x32x32xf32>
    %16 = vector.shape_cast %15 : vector<1x32x32xf32> to vector<32x32xf32>
    %cst_20 = arith.constant dense<0.000000e+00> : vector<256x32xf32>
    %17 = tpu.matmul %14, %16, %cst_20 {dimension_numbers = #tpu.dot_dimension_numbers<[1], [0], [0], [1], [0, 0, 1, 1], [], []>} : vector<256x32xf32>, vector<32x32xf32>, vector<256x32xf32> -> vector<256x32xf32>
    %c0_21 = arith.constant 0 : index
    %c1 = arith.constant 1 : index
    %c0_22 = arith.constant 0 : index
    %18 = vector.load %arg13[%c0_21, %c1, %c0_22] : memref<16x20x32xf32, #tpu.memory_space<vmem>>, vector<16x16x32xf32>
    %19 = vector.shape_cast %18 : vector<16x16x32xf32> to vector<256x32xf32>
    %c1_23 = arith.constant 1 : index
    %c0_24 = arith.constant 0 : index
    %c0_25 = arith.constant 0 : index
    %20 = vector.load %arg4[%c1_23, %c0_24, %c0_25] : memref<5x32x32xf32, #tpu.memory_space<vmem>>, vector<1x32x32xf32>
    %21 = vector.shape_cast %20 : vector<1x32x32xf32> to vector<32x32xf32>
    %cst_26 = arith.constant dense<0.000000e+00> : vector<256x32xf32>
    %22 = tpu.matmul %19, %21, %cst_26 {dimension_numbers = #tpu.dot_dimension_numbers<[1], [0], [0], [1], [0, 0, 1, 1], [], []>} : vector<256x32xf32>, vector<32x32xf32>, vector<256x32xf32> -> vector<256x32xf32>
    %23 = arith.addf %17, %22 : vector<256x32xf32>
    %c0_27 = arith.constant 0 : index
    %c2_28 = arith.constant 2 : index
    %c0_29 = arith.constant 0 : index
    %24 = vector.load %arg13[%c0_27, %c2_28, %c0_29] : memref<16x20x32xf32, #tpu.memory_space<vmem>>, vector<16x16x32xf32>
    %25 = vector.shape_cast %24 : vector<16x16x32xf32> to vector<256x32xf32>
    %c2_30 = arith.constant 2 : index
    %c0_31 = arith.constant 0 : index
    %c0_32 = arith.constant 0 : index
    %26 = vector.load %arg4[%c2_30, %c0_31, %c0_32] : memref<5x32x32xf32, #tpu.memory_space<vmem>>, vector<1x32x32xf32>
    %27 = vector.shape_cast %26 : vector<1x32x32xf32> to vector<32x32xf32>
    %cst_33 = arith.constant dense<0.000000e+00> : vector<256x32xf32>
    %28 = tpu.matmul %25, %27, %cst_33 {dimension_numbers = #tpu.dot_dimension_numbers<[1], [0], [0], [1], [0, 0, 1, 1], [], []>} : vector<256x32xf32>, vector<32x32xf32>, vector<256x32xf32> -> vector<256x32xf32>
    %29 = arith.addf %23, %28 : vector<256x32xf32>
    %c0_34 = arith.constant 0 : index
    %c3 = arith.constant 3 : index
    %c0_35 = arith.constant 0 : index
    %30 = vector.load %arg13[%c0_34, %c3, %c0_35] : memref<16x20x32xf32, #tpu.memory_space<vmem>>, vector<16x16x32xf32>
    %31 = vector.shape_cast %30 : vector<16x16x32xf32> to vector<256x32xf32>
    %c3_36 = arith.constant 3 : index
    %c0_37 = arith.constant 0 : index
    %c0_38 = arith.constant 0 : index
    %32 = vector.load %arg4[%c3_36, %c0_37, %c0_38] : memref<5x32x32xf32, #tpu.memory_space<vmem>>, vector<1x32x32xf32>
    %33 = vector.shape_cast %32 : vector<1x32x32xf32> to vector<32x32xf32>
    %cst_39 = arith.constant dense<0.000000e+00> : vector<256x32xf32>
    %34 = tpu.matmul %31, %33, %cst_39 {dimension_numbers = #tpu.dot_dimension_numbers<[1], [0], [0], [1], [0, 0, 1, 1], [], []>} : vector<256x32xf32>, vector<32x32xf32>, vector<256x32xf32> -> vector<256x32xf32>
    %35 = arith.addf %29, %34 : vector<256x32xf32>
    %c0_40 = arith.constant 0 : index
    %c4 = arith.constant 4 : index
    %c0_41 = arith.constant 0 : index
    %36 = vector.load %arg13[%c0_40, %c4, %c0_41] : memref<16x20x32xf32, #tpu.memory_space<vmem>>, vector<16x16x32xf32>
    %37 = vector.shape_cast %36 : vector<16x16x32xf32> to vector<256x32xf32>
    %c4_42 = arith.constant 4 : index
    %c0_43 = arith.constant 0 : index
    %c0_44 = arith.constant 0 : index
    %38 = vector.load %arg4[%c4_42, %c0_43, %c0_44] : memref<5x32x32xf32, #tpu.memory_space<vmem>>, vector<1x32x32xf32>
    %39 = vector.shape_cast %38 : vector<1x32x32xf32> to vector<32x32xf32>
    %cst_45 = arith.constant dense<0.000000e+00> : vector<256x32xf32>
    %40 = tpu.matmul %37, %39, %cst_45 {dimension_numbers = #tpu.dot_dimension_numbers<[1], [0], [0], [1], [0, 0, 1, 1], [], []>} : vector<256x32xf32>, vector<32x32xf32>, vector<256x32xf32> -> vector<256x32xf32>
    %41 = arith.addf %35, %40 : vector<256x32xf32>
    %c0_46 = arith.constant 0 : index
    %c0_47 = arith.constant 0 : index
    %42 = vector.load %arg5[%c0_46, %c0_47] : memref<1x32xf32, #tpu.memory_space<vmem>>, vector<1x32xf32>
    %43 = vector.broadcast %42 : vector<1x32xf32> to vector<256x32xf32>
    %44 = arith.addf %41, %43 : vector<256x32xf32>
    %cst_48 = arith.constant 0.000000e+00 : f32
    %45 = vector.broadcast %cst_48 : f32 to vector<256x32xf32>
    %46 = arith.maximumf %44, %45 : vector<256x32xf32>
    %47 = vector.shape_cast %46 : vector<256x32xf32> to vector<16x16x32xf32>
    %c0_49 = arith.constant 0 : index
    %c2_50 = arith.constant 2 : index
    %c0_51 = arith.constant 0 : index
    %48 = vector.load %arg13[%c0_49, %c2_50, %c0_51] : memref<16x20x32xf32, #tpu.memory_space<vmem>>, vector<16x16x32xf32>
    tpu.vector_store %arg13[%c0_49, %c2_50, %c0_51], %47 {strides = array<i32>} : memref<16x20x32xf32, #tpu.memory_space<vmem>>, vector<16x16x32xf32>,
    %c0_52 = arith.constant 0 : index
    %c0_53 = arith.constant 0 : index
    %c0_54 = arith.constant 0 : index
    %49 = vector.load %arg13[%c0_52, %c0_53, %c0_54] : memref<16x20x32xf32, #tpu.memory_space<vmem>>, vector<16x16x32xf32>
    %50 = vector.shape_cast %49 : vector<16x16x32xf32> to vector<256x32xf32>
    %c0_55 = arith.constant 0 : index
    %c0_56 = arith.constant 0 : index
    %c0_57 = arith.constant 0 : index
    %51 = vector.load %arg6[%c0_55, %c0_56, %c0_57] : memref<5x32x32xf32, #tpu.memory_space<vmem>>, vector<1x32x32xf32>
    %52 = vector.shape_cast %51 : vector<1x32x32xf32> to vector<32x32xf32>
    %cst_58 = arith.constant dense<0.000000e+00> : vector<256x32xf32>
    %53 = tpu.matmul %50, %52, %cst_58 {dimension_numbers = #tpu.dot_dimension_numbers<[1], [0], [0], [1], [0, 0, 1, 1], [], []>} : vector<256x32xf32>, vector<32x32xf32>, vector<256x32xf32> -> vector<256x32xf32>
    %c0_59 = arith.constant 0 : index
    %c1_60 = arith.constant 1 : index
    %c0_61 = arith.constant 0 : index
    %54 = vector.load %arg13[%c0_59, %c1_60, %c0_61] : memref<16x20x32xf32, #tpu.memory_space<vmem>>, vector<16x16x32xf32>
    %55 = vector.shape_cast %54 : vector<16x16x32xf32> to vector<256x32xf32>
    %c1_62 = arith.constant 1 : index
    %c0_63 = arith.constant 0 : index
    %c0_64 = arith.constant 0 : index
    %56 = vector.load %arg6[%c1_62, %c0_63, %c0_64] : memref<5x32x32xf32, #tpu.memory_space<vmem>>, vector<1x32x32xf32>
    %57 = vector.shape_cast %56 : vector<1x32x32xf32> to vector<32x32xf32>
    %cst_65 = arith.constant dense<0.000000e+00> : vector<256x32xf32>
    %58 = tpu.matmul %55, %57, %cst_65 {dimension_numbers = #tpu.dot_dimension_numbers<[1], [0], [0], [1], [0, 0, 1, 1], [], []>} : vector<256x32xf32>, vector<32x32xf32>, vector<256x32xf32> -> vector<256x32xf32>
    %59 = arith.addf %53, %58 : vector<256x32xf32>
    %c0_66 = arith.constant 0 : index
    %c2_67 = arith.constant 2 : index
    %c0_68 = arith.constant 0 : index
    %60 = vector.load %arg13[%c0_66, %c2_67, %c0_68] : memref<16x20x32xf32, #tpu.memory_space<vmem>>, vector<16x16x32xf32>
    %61 = vector.shape_cast %60 : vector<16x16x32xf32> to vector<256x32xf32>
    %c2_69 = arith.constant 2 : index
    %c0_70 = arith.constant 0 : index
    %c0_71 = arith.constant 0 : index
    %62 = vector.load %arg6[%c2_69, %c0_70, %c0_71] : memref<5x32x32xf32, #tpu.memory_space<vmem>>, vector<1x32x32xf32>
    %63 = vector.shape_cast %62 : vector<1x32x32xf32> to vector<32x32xf32>
    %cst_72 = arith.constant dense<0.000000e+00> : vector<256x32xf32>
    %64 = tpu.matmul %61, %63, %cst_72 {dimension_numbers = #tpu.dot_dimension_numbers<[1], [0], [0], [1], [0, 0, 1, 1], [], []>} : vector<256x32xf32>, vector<32x32xf32>, vector<256x32xf32> -> vector<256x32xf32>
    %65 = arith.addf %59, %64 : vector<256x32xf32>
    %c0_73 = arith.constant 0 : index
    %c3_74 = arith.constant 3 : index
    %c0_75 = arith.constant 0 : index
    %66 = vector.load %arg13[%c0_73, %c3_74, %c0_75] : memref<16x20x32xf32, #tpu.memory_space<vmem>>, vector<16x16x32xf32>
    %67 = vector.shape_cast %66 : vector<16x16x32xf32> to vector<256x32xf32>
    %c3_76 = arith.constant 3 : index
    %c0_77 = arith.constant 0 : index
    %c0_78 = arith.constant 0 : index
    %68 = vector.load %arg6[%c3_76, %c0_77, %c0_78] : memref<5x32x32xf32, #tpu.memory_space<vmem>>, vector<1x32x32xf32>
    %69 = vector.shape_cast %68 : vector<1x32x32xf32> to vector<32x32xf32>
    %cst_79 = arith.constant dense<0.000000e+00> : vector<256x32xf32>
    %70 = tpu.matmul %67, %69, %cst_79 {dimension_numbers = #tpu.dot_dimension_numbers<[1], [0], [0], [1], [0, 0, 1, 1], [], []>} : vector<256x32xf32>, vector<32x32xf32>, vector<256x32xf32> -> vector<256x32xf32>
    %71 = arith.addf %65, %70 : vector<256x32xf32>
    %c0_80 = arith.constant 0 : index
    %c4_81 = arith.constant 4 : index
    %c0_82 = arith.constant 0 : index
    %72 = vector.load %arg13[%c0_80, %c4_81, %c0_82] : memref<16x20x32xf32, #tpu.memory_space<vmem>>, vector<16x16x32xf32>
    %73 = vector.shape_cast %72 : vector<16x16x32xf32> to vector<256x32xf32>
    %c4_83 = arith.constant 4 : index
    %c0_84 = arith.constant 0 : index
    %c0_85 = arith.constant 0 : index
    %74 = vector.load %arg6[%c4_83, %c0_84, %c0_85] : memref<5x32x32xf32, #tpu.memory_space<vmem>>, vector<1x32x32xf32>
    %75 = vector.shape_cast %74 : vector<1x32x32xf32> to vector<32x32xf32>
    %cst_86 = arith.constant dense<0.000000e+00> : vector<256x32xf32>
    %76 = tpu.matmul %73, %75, %cst_86 {dimension_numbers = #tpu.dot_dimension_numbers<[1], [0], [0], [1], [0, 0, 1, 1], [], []>} : vector<256x32xf32>, vector<32x32xf32>, vector<256x32xf32> -> vector<256x32xf32>
    %77 = arith.addf %71, %76 : vector<256x32xf32>
    %c0_87 = arith.constant 0 : index
    %c0_88 = arith.constant 0 : index
    %78 = vector.load %arg7[%c0_87, %c0_88] : memref<1x32xf32, #tpu.memory_space<vmem>>, vector<1x32xf32>
    %79 = vector.broadcast %78 : vector<1x32xf32> to vector<256x32xf32>
    %80 = arith.addf %77, %79 : vector<256x32xf32>
    %cst_89 = arith.constant 0.000000e+00 : f32
    %81 = vector.broadcast %cst_89 : f32 to vector<256x32xf32>
    %82 = arith.maximumf %80, %81 : vector<256x32xf32>
    %c0_90 = arith.constant 0 : index
    %c0_91 = arith.constant 0 : index
    %83 = vector.load %arg8[%c0_90, %c0_91] : memref<32x128xf32, #tpu.memory_space<vmem>>, vector<32x128xf32>
    %cst_92 = arith.constant dense<0.000000e+00> : vector<256x128xf32>
    %84 = tpu.matmul %82, %83, %cst_92 {dimension_numbers = #tpu.dot_dimension_numbers<[1], [0], [0], [1], [0, 0, 1, 1], [], []>} : vector<256x32xf32>, vector<32x128xf32>, vector<256x128xf32> -> vector<256x128xf32>
    %c0_93 = arith.constant 0 : index
    %c0_94 = arith.constant 0 : index
    %85 = vector.load %arg9[%c0_93, %c0_94] : memref<1x128xf32, #tpu.memory_space<vmem>>, vector<1x128xf32>
    %86 = vector.broadcast %85 : vector<1x128xf32> to vector<256x128xf32>
    %87 = arith.addf %84, %86 : vector<256x128xf32>
    %cst_95 = arith.constant 0.000000e+00 : f32
    %88 = vector.broadcast %cst_95 : f32 to vector<256x128xf32>
    %89 = arith.maximumf %87, %88 : vector<256x128xf32>
    %c0_96 = arith.constant 0 : index
    %c0_97 = arith.constant 0 : index
    %90 = vector.load %arg10[%c0_96, %c0_97] : memref<128x32xf32, #tpu.memory_space<vmem>>, vector<128x32xf32>
    %cst_98 = arith.constant dense<0.000000e+00> : vector<256x32xf32>
    %91 = tpu.matmul %89, %90, %cst_98 {dimension_numbers = #tpu.dot_dimension_numbers<[1], [0], [0], [1], [0, 0, 1, 1], [], []>} : vector<256x128xf32>, vector<128x32xf32>, vector<256x32xf32> -> vector<256x32xf32>
    %c0_99 = arith.constant 0 : index
    %c0_100 = arith.constant 0 : index
    %92 = vector.load %arg11[%c0_99, %c0_100] : memref<1x32xf32, #tpu.memory_space<vmem>>, vector<1x32xf32>
    %93 = vector.broadcast %92 : vector<1x32xf32> to vector<256x32xf32>
    %94 = arith.addf %91, %93 : vector<256x32xf32>
    %cst_101 = arith.constant dense<0xFF800000> : vector<256xf32>
    %95 = vector.multi_reduction <maximumf>, %94, %cst_101 [1] : vector<256x32xf32> to vector<256xf32>
    %96 = vector.shape_cast %95 : vector<256xf32> to vector<256x1xf32>
    %97 = vector.broadcast %96 : vector<256x1xf32> to vector<256x32xf32>
    %98 = arith.subf %94, %97 : vector<256x32xf32>
    %99 = math.exp %98 : vector<256x32xf32>
    %cst_102 = arith.constant dense<0.000000e+00> : vector<256xf32>
    %100 = vector.multi_reduction <add>, %99, %cst_102 [1] : vector<256x32xf32> to vector<256xf32>
    %101 = vector.shape_cast %100 : vector<256xf32> to vector<256x1xf32>
    %102 = math.log %101 : vector<256x1xf32>
    %103 = vector.broadcast %102 : vector<256x1xf32> to vector<256x32xf32>
    %104 = arith.subf %98, %103 : vector<256x32xf32>
    %c0_103 = arith.constant 0 : index
    %c0_104 = arith.constant 0 : index
    %105 = vector.load %arg12[%c0_103, %c0_104] : memref<256x32xf32, #tpu.memory_space<vmem>>, vector<256x32xf32>
    tpu.vector_store %arg12[%c0_103, %c0_104], %104 {strides = array<i32>} : memref<256x32xf32, #tpu.memory_space<vmem>>, vector<256x32xf32>,
    return
  }
  func.func @transform_0(%arg0: i32) -> (i32, i32) {
    %c0_i32 = arith.constant 0 : i32
    %c0_i32_0 = arith.constant 0 : i32
    return %arg0, %c0_i32 : i32, i32
  }
  func.func @transform_1(%arg0: i32) -> (i32, i32) {
    %c0_i32 = arith.constant 0 : i32
    %c0_i32_0 = arith.constant 0 : i32
    %c0_i32_1 = arith.constant 0 : i32
    return %c0_i32, %c0_i32_0 : i32, i32
  }
  func.func @transform_2(%arg0: i32) -> (i32, i32) {
    %c0_i32 = arith.constant 0 : i32
    %c0_i32_0 = arith.constant 0 : i32
    %c0_i32_1 = arith.constant 0 : i32
    return %c0_i32, %c0_i32_0 : i32, i32
  }
  func.func @transform_3(%arg0: i32) -> (i32, i32, i32) {
    %c0_i32 = arith.constant 0 : i32
    %c0_i32_0 = arith.constant 0 : i32
    %c0_i32_1 = arith.constant 0 : i32
    %c0_i32_2 = arith.constant 0 : i32
    return %c0_i32, %c0_i32_0, %c0_i32_1 : i32, i32, i32
  }
  func.func @transform_4(%arg0: i32) -> (i32, i32) {
    %c0_i32 = arith.constant 0 : i32
    %c0_i32_0 = arith.constant 0 : i32
    %c0_i32_1 = arith.constant 0 : i32
    return %c0_i32, %c0_i32_0 : i32, i32
  }
  func.func @transform_5(%arg0: i32) -> (i32, i32, i32) {
    %c0_i32 = arith.constant 0 : i32
    %c0_i32_0 = arith.constant 0 : i32
    %c0_i32_1 = arith.constant 0 : i32
    %c0_i32_2 = arith.constant 0 : i32
    return %c0_i32, %c0_i32_0, %c0_i32_1 : i32, i32, i32
  }
  func.func @transform_6(%arg0: i32) -> (i32, i32) {
    %c0_i32 = arith.constant 0 : i32
    %c0_i32_0 = arith.constant 0 : i32
    %c0_i32_1 = arith.constant 0 : i32
    return %c0_i32, %c0_i32_0 : i32, i32
  }
  func.func @transform_7(%arg0: i32) -> (i32, i32) {
    %c0_i32 = arith.constant 0 : i32
    %c0_i32_0 = arith.constant 0 : i32
    %c0_i32_1 = arith.constant 0 : i32
    return %c0_i32, %c0_i32_0 : i32, i32
  }
  func.func @transform_8(%arg0: i32) -> (i32, i32) {
    %c0_i32 = arith.constant 0 : i32
    %c0_i32_0 = arith.constant 0 : i32
    %c0_i32_1 = arith.constant 0 : i32
    return %c0_i32, %c0_i32_0 : i32, i32
  }
  func.func @transform_9(%arg0: i32) -> (i32, i32) {
    %c0_i32 = arith.constant 0 : i32
    %c0_i32_0 = arith.constant 0 : i32
    %c0_i32_1 = arith.constant 0 : i32
    return %c0_i32, %c0_i32_0 : i32, i32
  }
  func.func @transform_10(%arg0: i32) -> (i32, i32) {
    %c0_i32 = arith.constant 0 : i32
    %c0_i32_0 = arith.constant 0 : i32
    %c0_i32_1 = arith.constant 0 : i32
    return %c0_i32, %c0_i32_0 : i32, i32
  }
  func.func @transform_11(%arg0: i32) -> (i32, i32) {
    %c0_i32 = arith.constant 0 : i32
    %c0_i32_0 = arith.constant 0 : i32
    return %arg0, %c0_i32 : i32, i32
  }
}

</mosaic_0001>

<llo_original>
// kernel: tpu_custom_call.1
$region0: #{tpu_custom_call.1}
  #allocation0 [shape = 'u32[]', space=smem, size = 0x4, offset = 0x4, fixed_abs, tag = 'smem constant byte address 0x4 - core index']
  #allocation1 [shape = 'u32[144,128]{1,0:T(1,128)}', space=vmem, size = 0x12000, scoped, tag = 'internal scratch']
  #allocation2 [shape = 'f32[16,20,32]{2,1,0:T(8,128)}', space=vmem, size = 0x30000, scoped, tag = 'scratch operand']
  %s0 = inlined_call_operand.vmem [shape: f32[256,20], index: 0, kind: input, shape index: {}]
  %s1 = inlined_call_operand.vmem [shape: f32[20,32], index: 1, kind: input, shape index: {}]
  %s2 = inlined_call_operand.vmem [shape: f32[1,32], index: 2, kind: input, shape index: {}]
  %s3 = inlined_call_operand.vmem [shape: f32[5,32,32], index: 3, kind: input, shape index: {}]
  %s4 = inlined_call_operand.vmem [shape: f32[1,32], index: 4, kind: input, shape index: {}]
  %s5 = inlined_call_operand.vmem [shape: f32[5,32,32], index: 5, kind: input, shape index: {}]
  %s6 = inlined_call_operand.vmem [shape: f32[1,32], index: 6, kind: input, shape index: {}]
  %s7 = inlined_call_operand.vmem [shape: f32[32,128], index: 7, kind: input, shape index: {}]
  %s8 = inlined_call_operand.vmem [shape: f32[1,128], index: 8, kind: input, shape index: {}]
  %s9 = inlined_call_operand.vmem [shape: f32[128,32], index: 9, kind: input, shape index: {}]
  %s10 = inlined_call_operand.vmem [shape: f32[1,32], index: 10, kind: input, shape index: {}]
  %s11 = inlined_call_operand.vmem [shape: f32[256,32], index: 11, kind: output, shape index: {}]
  %s12 = sld [smem:[#allocation0]]
  $region54: #{tpu_custom_call.1} parent=0
    _
  %s14 = ssub.s32 1, %s12
  %s15 = scalar_select 0, %s14, %s12
  // Predicated region
  $region2: #{tpu_custom_call.1} parent=0 // pred_check
    _
  $region3: #{tpu_custom_call.1} parent=0 // pred_check_branch
    %17 = sbr.rel (0) target = $region5
  $region4: #{tpu_custom_call.1} parent=0 // pred_region
    _
  $region5: #{tpu_custom_call.1} parent=0 // pred_fallthru
    _
  // Predicated region
  $region6: #{tpu_custom_call.1} parent=0 // pred_check
    _
  $region7: #{tpu_custom_call.1} parent=0 // pred_check_branch
    %19 = sbr.rel (0) target = $region9
  $region8: #{tpu_custom_call.1} parent=0 // pred_region
    _
  $region9: #{tpu_custom_call.1} parent=0 // pred_fallthru
    _
  // Predicated region
  $region10: #{tpu_custom_call.1} parent=0 // pred_check
    _
  $region11: #{tpu_custom_call.1} parent=0 // pred_check_branch
    %21 = sbr.rel (0) target = $region13
  $region12: #{tpu_custom_call.1} parent=0 // pred_region
    _
  $region13: #{tpu_custom_call.1} parent=0 // pred_fallthru
    _
  // Predicated region
  $region14: #{tpu_custom_call.1} parent=0 // pred_check
    _
  $region15: #{tpu_custom_call.1} parent=0 // pred_check_branch
    %23 = sbr.rel (0) target = $region17
  $region16: #{tpu_custom_call.1} parent=0 // pred_region
    _
  $region17: #{tpu_custom_call.1} parent=0 // pred_fallthru
    _
  // Predicated region
  $region18: #{tpu_custom_call.1} parent=0 // pred_check
    _
  $region19: #{tpu_custom_call.1} parent=0 // pred_check_branch
    %25 = sbr.rel (0) target = $region21
  $region20: #{tpu_custom_call.1} parent=0 // pred_region
    _
  $region21: #{tpu_custom_call.1} parent=0 // pred_fallthru
    _
  // Predicated region
  $region22: #{tpu_custom_call.1} parent=0 // pred_check
    _
  $region23: #{tpu_custom_call.1} parent=0 // pred_check_branch
    %27 = sbr.rel (0) target = $region25
  $region24: #{tpu_custom_call.1} parent=0 // pred_region
    _
  $region25: #{tpu_custom_call.1} parent=0 // pred_fallthru
    _
  // Predicated region
  $region26: #{tpu_custom_call.1} parent=0 // pred_check
    _
  $region27: #{tpu_custom_call.1} parent=0 // pred_check_branch
    %29 = sbr.rel (0) target = $region29
  $region28: #{tpu_custom_call.1} parent=0 // pred_region
    _
  $region29: #{tpu_custom_call.1} parent=0 // pred_fallthru
    _
  // Predicated region
  $region30: #{tpu_custom_call.1} parent=0 // pred_check
    _
  $region31: #{tpu_custom_call.1} parent=0 // pred_check_branch
    %31 = sbr.rel (0) target = $region33
  $region32: #{tpu_custom_call.1} parent=0 // pred_region
    _
  $region33: #{tpu_custom_call.1} parent=0 // pred_fallthru
    _
  // Predicated region
  $region34: #{tpu_custom_call.1} parent=0 // pred_check
    _
  $region35: #{tpu_custom_call.1} parent=0 // pred_check_branch
    %33 = sbr.rel (0) target = $region37
  $region36: #{tpu_custom_call.1} parent=0 // pred_region
    _
  $region37: #{tpu_custom_call.1} parent=0 // pred_fallthru
    _
  // Predicated region
  $region38: #{tpu_custom_call.1} parent=0 // pred_check
    _
  $region39: #{tpu_custom_call.1} parent=0 // pred_check_branch
    %35 = sbr.rel (0) target = $region41
  $region40: #{tpu_custom_call.1} parent=0 // pred_region
    _
  $region41: #{tpu_custom_call.1} parent=0 // pred_fallthru
    _
  // Predicated region
  $region42: #{tpu_custom_call.1} parent=0 // pred_check
    _
  $region43: #{tpu_custom_call.1} parent=0 // pred_check_branch
    %37 = sbr.rel (0) target = $region45
  $region44: #{tpu_custom_call.1} parent=0 // pred_region
    _
  $region45: #{tpu_custom_call.1} parent=0 // pred_fallthru
    _
  %vm38 = vcmask 254976
  %39 = vst.msk [vmem:[#allocation2] sm:$0x3] %vm38, 0.0
  %40 = vst.msk [vmem:[#allocation2 + $0x18] sm:$0x3] %vm38, 0.0
  %41 = vst.msk [vmem:[#allocation2 + $0x30] sm:$0x3] %vm38, 0.0
  %42 = vst.msk [vmem:[#allocation2 + $0x48] sm:$0x3] %vm38, 0.0
  %43 = vst.msk [vmem:[#allocation2 + $0x60] sm:$0x3] %vm38, 0.0
  %44 = vst.msk [vmem:[#allocation2 + $0x78] sm:$0x3] %vm38, 0.0
  %45 = vst.msk [vmem:[#allocation2 + $0x90] sm:$0x3] %vm38, 0.0
  %46 = vst.msk [vmem:[#allocation2 + $0xa8] sm:$0x3] %vm38, 0.0
  %47 = vst.msk [vmem:[#allocation2 + $0xc0] sm:$0x3] %vm38, 0.0
  %48 = vst.msk [vmem:[#allocation2 + $0xd8] sm:$0x3] %vm38, 0.0
  %49 = vst.msk [vmem:[#allocation2 + $0xf0] sm:$0x3] %vm38, 0.0
  %50 = vst.msk [vmem:[#allocation2 + $0x108] sm:$0x3] %vm38, 0.0
  %51 = vst.msk [vmem:[#allocation2 + $0x120] sm:$0x3] %vm38, 0.0
  %52 = vst.msk [vmem:[#allocation2 + $0x138] sm:$0x3] %vm38, 0.0
  %53 = vst.msk [vmem:[#allocation2 + $0x150] sm:$0x3] %vm38, 0.0
  %54 = vst.msk [vmem:[#allocation2 + $0x168] sm:$0x3] %vm38, 0.0
  %55 = vst.msk [vmem:[#allocation2 + $0x12] sm:$0x3] %vm38, 0.0
  %56 = vst.msk [vmem:[#allocation2 + $0x2a] sm:$0x3] %vm38, 0.0
  %57 = vst.msk [vmem:[#allocation2 + $0x42] sm:$0x3] %vm38, 0.0
  %58 = vst.msk [vmem:[#allocation2 + $0x5a] sm:$0x3] %vm38, 0.0
  %59 = vst.msk [vmem:[#allocation2 + $0x72] sm:$0x3] %vm38, 0.0
  %60 = vst.msk [vmem:[#allocation2 + $0x8a] sm:$0x3] %vm38, 0.0
  %61 = vst.msk [vmem:[#allocation2 + $0xa2] sm:$0x3] %vm38, 0.0
  %62 = vst.msk [vmem:[#allocation2 + $0xba] sm:$0x3] %vm38, 0.0
  %63 = vst.msk [vmem:[#allocation2 + $0xd2] sm:$0x3] %vm38, 0.0
  %64 = vst.msk [vmem:[#allocation2 + $0xea] sm:$0x3] %vm38, 0.0
  %65 = vst.msk [vmem:[#allocation2 + $0x102] sm:$0x3] %vm38, 0.0
  %66 = vst.msk [vmem:[#allocation2 + $0x11a] sm:$0x3] %vm38, 0.0
  %67 = vst.msk [vmem:[#allocation2 + $0x132] sm:$0x3] %vm38, 0.0
  %68 = vst.msk [vmem:[#allocation2 + $0x14a] sm:$0x3] %vm38, 0.0
  %69 = vst.msk [vmem:[#allocation2 + $0x162] sm:$0x3] %vm38, 0.0
  %70 = vst.msk [vmem:[#allocation2 + $0x17a] sm:$0x3] %vm38, 0.0
  %v71 = vld [vmem:[%s0] sm:$0xff]
  %v72 = vld [vmem:[%s0 + $0x8] sm:$0xff]
  %v73 = vld [vmem:[%s0 + $0x10] sm:$0xff]
  %v74 = vld [vmem:[%s0 + $0x18] sm:$0xff]
  %v75 = vld [vmem:[%s0 + $0x20] sm:$0xff]
  %v76 = vld [vmem:[%s0 + $0x28] sm:$0xff]
  %v77 = vld [vmem:[%s0 + $0x30] sm:$0xff]
  %v78 = vld [vmem:[%s0 + $0x38] sm:$0xff]
  %v79 = vld [vmem:[%s0 + $0x40] sm:$0xff]
  %v80 = vld [vmem:[%s0 + $0x48] sm:$0xff]
  %v81 = vld [vmem:[%s0 + $0x50] sm:$0xff]
  %v82 = vld [vmem:[%s0 + $0x58] sm:$0xff]
  %v83 = vld [vmem:[%s0 + $0x60] sm:$0xff]
  %v84 = vld [vmem:[%s0 + $0x68] sm:$0xff]
  %v85 = vld [vmem:[%s0 + $0x70] sm:$0xff]
  %v86 = vld [vmem:[%s0 + $0x78] sm:$0xff]
  %v87 = vld [vmem:[%s0 + $0x80] sm:$0xff]
  %v88 = vld [vmem:[%s0 + $0x88] sm:$0xff]
  %v89 = vld [vmem:[%s0 + $0x90] sm:$0xff]
  %v90 = vld [vmem:[%s0 + $0x98] sm:$0xff]
  %v91 = vld [vmem:[%s0 + $0xa0] sm:$0xff]
  %v92 = vld [vmem:[%s0 + $0xa8] sm:$0xff]
  %v93 = vld [vmem:[%s0 + $0xb0] sm:$0xff]
  %v94 = vld [vmem:[%s0 + $0xb8] sm:$0xff]
  %v95 = vld [vmem:[%s0 + $0xc0] sm:$0xff]
  %v96 = vld [vmem:[%s0 + $0xc8] sm:$0xff]
  %v97 = vld [vmem:[%s0 + $0xd0] sm:$0xff]
  %v98 = vld [vmem:[%s0 + $0xd8] sm:$0xff]
  %v99 = vld [vmem:[%s0 + $0xe0] sm:$0xff]
  %v100 = vld [vmem:[%s0 + $0xe8] sm:$0xff]
  %v101 = vld [vmem:[%s0 + $0xf0] sm:$0xff]
  %v102 = vld [vmem:[%s0 + $0xf8] sm:$0xff]
  %v103 = vld [vmem:[%s1] sm:$0xff]
  %v104 = vld [vmem:[%s1 + $0x8] sm:$0xff]
  %v105 = vld [vmem:[%s1 + $0x10] sm:$0xf]
  %v106 = vld [vmem:[%s2] sm:$0x1]
  %v108 = vlaneseq
  %v109 = vshrl.u32 %v108, 7
  %v110 = vsub.s32 0, %v109
  %v111 = vrot.slane %v106, %v110
  %vm113 = vcmask 162816
  %v115 = vsel %vm113, %v71, 0
  %v118 = vsel %vm113, %v72, 0
  %v121 = vsel %vm113, %v73, 0
  %v124 = vsel %vm113, %v74, 0
  %v127 = vsel %vm113, %v75, 0
  %v130 = vsel %vm113, %v76, 0
  %v133 = vsel %vm113, %v77, 0
  %v136 = vsel %vm113, %v78, 0
  %v139 = vsel %vm113, %v79, 0
  %v142 = vsel %vm113, %v80, 0
  %v145 = vsel %vm113, %v81, 0
  %v148 = vsel %vm113, %v82, 0
  %v151 = vsel %vm113, %v83, 0
  %v154 = vsel %vm113, %v84, 0
  %v157 = vsel %vm113, %v85, 0
  %v160 = vsel %vm113, %v86, 0
  %v163 = vsel %vm113, %v87, 0
  %v166 = vsel %vm113, %v88, 0
  %v169 = vsel %vm113, %v89, 0
  %v172 = vsel %vm113, %v90, 0
  %v175 = vsel %vm113, %v91, 0
  %v178 = vsel %vm113, %v92, 0
  %v181 = vsel %vm113, %v93, 0
  %v184 = vsel %vm113, %v94, 0
  %v187 = vsel %vm113, %v95, 0
  %v190 = vsel %vm113, %v96, 0
  %v193 = vsel %vm113, %v97, 0
  %v196 = vsel %vm113, %v98, 0
  %v199 = vsel %vm113, %v99, 0
  %v202 = vsel %vm113, %v100, 0
  %v205 = vsel %vm113, %v101, 0
  %v208 = vsel %vm113, %v102, 0
  %vm210 = vcmask 1043456
  %v212 = vsel %vm210, %v105, 0
  %214 = vmatprep.subr.mxu0 0.0
  %215 = vmatpush1.msra.mxu0 0.0
  %216 = vmatprep.subr.mxu0 0.0
  %217 = vmatpush1.msra.mxu0 0.0
  %218 = vmatprep.subr.mxu0 0.0
  %219 = vmatpush1.msra.mxu0 0.0
  %220 = vmatprep.subr.mxu0 0.0
  %221 = vmatpush1.msra.mxu0 0.0
  %222 = vmatprep.subr.mxu0 0.0
  %223 = vmatpush1.msra.mxu0 0.0
  %224 = vmatprep.subr.mxu0 0.0
  %225 = vmatpush1.msra.mxu0 0.0
  %226 = vmatprep.subr.mxu0 0.0
  %227 = vmatpush1.msra.mxu0 0.0
  %228 = vmatprep.subr.mxu0 0.0
  %229 = vmatpush1.msra.mxu0 0.0
  %230 = vmatprep.subr.mxu0 0.0
  %231 = vmatpush1.msra.mxu0 0.0
  %232 = vmatprep.subr.mxu0 0.0
  %233 = vmatpush1.msra.mxu0 0.0
  %234 = vmatprep.subr.mxu0 0.0
  %235 = vmatpush1.msra.mxu0 0.0
  %236 = vmatprep.subr.mxu0 0.0
  %237 = vmatpush1.msra.mxu0 0.0
  %238 = vmatprep.subr.mxu0 0.0
  %239 = vmatpush1.msra.mxu0 0.0
  %240 = vmatprep.subr.mxu0 0.0
  %241 = vmatpush1.msra.mxu0 %v212
  %242 = vmatprep.subr.mxu0 0.0
  %243 = vmatpush1.msra.mxu0 %v104
  %244 = vmatprep.subr.mxu0 0.0
  %245 = vmatpush1.msra.mxu0 %v103
  %246 = vmatprep.subr.mxu0 0.0
  %247 = vmatpush2.msra.mxu0 0.0
  %248 = vmatprep.subr.mxu0 0.0
  %249 = vmatpush2.msra.mxu0 0.0
  %250 = vmatprep.subr.mxu0 0.0
  %251 = vmatpush2.msra.mxu0 0.0
  %252 = vmatprep.subr.mxu0 0.0
  %253 = vmatpush2.msra.mxu0 0.0
  %254 = vmatprep.subr.mxu0 0.0
  %255 = vmatpush2.msra.mxu0 0.0
  %256 = vmatprep.subr.mxu0 0.0
  %257 = vmatpush2.msra.mxu0 0.0
  %258 = vmatprep.subr.mxu0 0.0
  %259 = vmatpush2.msra.mxu0 0.0
  %260 = vmatprep.subr.mxu0 0.0
  %261 = vmatpush2.msra.mxu0 0.0
  %262 = vmatprep.subr.mxu0 0.0
  %263 = vmatpush2.msra.mxu0 0.0
  %264 = vmatprep.subr.mxu0 0.0
  %265 = vmatpush2.msra.mxu0 0.0
  %266 = vmatprep.subr.mxu0 0.0
  %267 = vmatpush2.msra.mxu0 0.0
  %268 = vmatprep.subr.mxu0 0.0
  %269 = vmatpush2.msra.mxu0 0.0
  %270 = vmatprep.subr.mxu0 0.0
  %271 = vmatpush2.msra.mxu0 0.0
  %272 = vmatprep.subr.mxu0 0.0
  %273 = vmatpush2.msra.mxu0 0.0
  %274 = vmatprep.subr.mxu0 0.0
  %275 = vmatpush2.msra.mxu0 0.0
  %276 = vmatprep.subr.mxu0 0.0
  %277 = vmatpush2.msra.mxu0 0.0
  %278 = vmatprep.mubr.f32.mxu0 0.0
  %279 = vmatmul.mubr.f32.gmra.mxu0 %v115
  %v280 = vpop.f32.mrf.mxu0
  %v281 = vadd.f32 %v111, %v280
  %v282 = vpop.f32.mrf.mxu0
  %283 = vmatprep.mubr.f32.mxu0 0.0
  %284 = vmatmul.mubr.f32.gmra.mxu0 %v118
  %v285 = vpop.f32.mrf.mxu0
  %v286 = vadd.f32 %v111, %v285
  %v287 = vpop.f32.mrf.mxu0
  %288 = vmatprep.mubr.f32.mxu0 0.0
  %289 = vmatmul.mubr.f32.gmra.mxu0 %v121
  %v290 = vpop.f32.mrf.mxu0
  %v291 = vadd.f32 %v111, %v290
  %v292 = vpop.f32.mrf.mxu0
  %293 = vmatprep.mubr.f32.mxu0 0.0
  %294 = vmatmul.mubr.f32.gmra.mxu0 %v124
  %v295 = vpop.f32.mrf.mxu0
  %v296 = vadd.f32 %v111, %v295
  %v297 = vpop.f32.mrf.mxu0
  %298 = vmatprep.mubr.f32.mxu0 0.0
  %299 = vmatmul.mubr.f32.gmra.mxu0 %v127
  %v300 = vpop.f32.mrf.mxu0
  %v301 = vadd.f32 %v111, %v300
  %v302 = vpop.f32.mrf.mxu0
  %303 = vmatprep.mubr.f32.mxu0 0.0
  %304 = vmatmul.mubr.f32.gmra.mxu0 %v130
  %v305 = vpop.f32.mrf.mxu0
  %v306 = vadd.f32 %v111, %v305
  %v307 = vpop.f32.mrf.mxu0
  %308 = vmatprep.mubr.f32.mxu0 0.0
  %309 = vmatmul.mubr.f32.gmra.mxu0 %v133
  %v310 = vpop.f32.mrf.mxu0
  %v311 = vadd.f32 %v111, %v310
  %v312 = vpop.f32.mrf.mxu0
  %313 = vmatprep.mubr.f32.mxu0 0.0
  %314 = vmatmul.mubr.f32.gmra.mxu0 %v136
  %v315 = vpop.f32.mrf.mxu0
  %v316 = vadd.f32 %v111, %v315
  %v317 = vpop.f32.mrf.mxu0
  %318 = vmatprep.mubr.f32.mxu0 0.0
  %319 = vmatmul.mubr.f32.gmra.mxu0 %v139
  %v320 = vpop.f32.mrf.mxu0
  %v321 = vadd.f32 %v111, %v320
  %v322 = vpop.f32.mrf.mxu0
  %323 = vmatprep.mubr.f32.mxu0 0.0
  %324 = vmatmul.mubr.f32.gmra.mxu0 %v142
  %v325 = vpop.f32.mrf.mxu0
  %v326 = vadd.f32 %v111, %v325
  %v327 = vpop.f32.mrf.mxu0
  %328 = vmatprep.mubr.f32.mxu0 0.0
  %329 = vmatmul.mubr.f32.gmra.mxu0 %v145
  %v330 = vpop.f32.mrf.mxu0
  %v331 = vadd.f32 %v111, %v330
  %v332 = vpop.f32.mrf.mxu0
  %333 = vmatprep.mubr.f32.mxu0 0.0
  %334 = vmatmul.mubr.f32.gmra.mxu0 %v148
  %v335 = vpop.f32.mrf.mxu0
  %v336 = vadd.f32 %v111, %v335
  %v337 = vpop.f32.mrf.mxu0
  %338 = vmatprep.mubr.f32.mxu0 0.0
  %339 = vmatmul.mubr.f32.gmra.mxu0 %v151
  %v340 = vpop.f32.mrf.mxu0
  %v341 = vadd.f32 %v111, %v340
  %v342 = vpop.f32.mrf.mxu0
  %343 = vmatprep.mubr.f32.mxu0 0.0
  %344 = vmatmul.mubr.f32.gmra.mxu0 %v154
  %v345 = vpop.f32.mrf.mxu0
  %v346 = vadd.f32 %v111, %v345
  %v347 = vpop.f32.mrf.mxu0
  %348 = vmatprep.mubr.f32.mxu0 0.0
  %349 = vmatmul.mubr.f32.gmra.mxu0 %v157
  %v350 = vpop.f32.mrf.mxu0
  %v351 = vadd.f32 %v111, %v350
  %v352 = vpop.f32.mrf.mxu0
  %353 = vmatprep.mubr.f32.mxu0 0.0
  %354 = vmatmul.mubr.f32.gmra.mxu0 %v160
  %v355 = vpop.f32.mrf.mxu0
  %v356 = vadd.f32 %v111, %v355
  %v357 = vpop.f32.mrf.mxu0
  %358 = vmatprep.mubr.f32.mxu0 0.0
  %359 = vmatmul.mubr.f32.gmra.mxu0 %v163
  %v360 = vpop.f32.mrf.mxu0
  %v361 = vadd.f32 %v111, %v360
  %v362 = vpop.f32.mrf.mxu0
  %363 = vmatprep.mubr.f32.mxu0 0.0
  %364 = vmatmul.mubr.f32.gmra.mxu0 %v166
  %v365 = vpop.f32.mrf.mxu0
  %v366 = vadd.f32 %v111, %v365
  %v367 = vpop.f32.mrf.mxu0
  %368 = vmatprep.mubr.f32.mxu0 0.0
  %369 = vmatmul.mubr.f32.gmra.mxu0 %v169
  %v370 = vpop.f32.mrf.mxu0
  %v371 = vadd.f32 %v111, %v370
  %v372 = vpop.f32.mrf.mxu0
  %373 = vmatprep.mubr.f32.mxu0 0.0
  %374 = vmatmul.mubr.f32.gmra.mxu0 %v172
  %v375 = vpop.f32.mrf.mxu0
  %v376 = vadd.f32 %v111, %v375
  %v377 = vpop.f32.mrf.mxu0
  %378 = vmatprep.mubr.f32.mxu0 0.0
  %379 = vmatmul.mubr.f32.gmra.mxu0 %v175
  %v380 = vpop.f32.mrf.mxu0
  %v381 = vadd.f32 %v111, %v380
  %v382 = vpop.f32.mrf.mxu0
  %383 = vmatprep.mubr.f32.mxu0 0.0
  %384 = vmatmul.mubr.f32.gmra.mxu0 %v178
  %v385 = vpop.f32.mrf.mxu0
  %v386 = vadd.f32 %v111, %v385
  %v387 = vpop.f32.mrf.mxu0
  %388 = vmatprep.mubr.f32.mxu0 0.0
  %389 = vmatmul.mubr.f32.gmra.mxu0 %v181
  %v390 = vpop.f32.mrf.mxu0
  %v391 = vadd.f32 %v111, %v390
  %v392 = vpop.f32.mrf.mxu0
  %393 = vmatprep.mubr.f32.mxu0 0.0
  %394 = vmatmul.mubr.f32.gmra.mxu0 %v184
  %v395 = vpop.f32.mrf.mxu0
  %v396 = vadd.f32 %v111, %v395
  %v397 = vpop.f32.mrf.mxu0
  %398 = vmatprep.mubr.f32.mxu0 0.0
  %399 = vmatmul.mubr.f32.gmra.mxu0 %v187
  %v400 = vpop.f32.mrf.mxu0
  %v401 = vadd.f32 %v111, %v400
  %v402 = vpop.f32.mrf.mxu0
  %403 = vmatprep.mubr.f32.mxu0 0.0
  %404 = vmatmul.mubr.f32.gmra.mxu0 %v190
  %v405 = vpop.f32.mrf.mxu0
  %v406 = vadd.f32 %v111, %v405
  %v407 = vpop.f32.mrf.mxu0
  %408 = vmatprep.mubr.f32.mxu0 0.0
  %409 = vmatmul.mubr.f32.gmra.mxu0 %v193
  %v410 = vpop.f32.mrf.mxu0
  %v411 = vadd.f32 %v111, %v410
  %v412 = vpop.f32.mrf.mxu0
  %413 = vmatprep.mubr.f32.mxu0 0.0
  %414 = vmatmul.mubr.f32.gmra.mxu0 %v196
  %v415 = vpop.f32.mrf.mxu0
  %v416 = vadd.f32 %v111, %v415
  %v417 = vpop.f32.mrf.mxu0
  %418 = vmatprep.mubr.f32.mxu0 0.0
  %419 = vmatmul.mubr.f32.gmra.mxu0 %v199
  %v420 = vpop.f32.mrf.mxu0
  %v421 = vadd.f32 %v111, %v420
  %v422 = vpop.f32.mrf.mxu0
  %423 = vmatprep.mubr.f32.mxu0 0.0
  %424 = vmatmul.mubr.f32.gmra.mxu0 %v202
  %v425 = vpop.f32.mrf.mxu0
  %v426 = vadd.f32 %v111, %v425
  %v427 = vpop.f32.mrf.mxu0
  %428 = vmatprep.mubr.f32.mxu0 0.0
  %429 = vmatmul.mubr.f32.gmra.mxu0 %v205
  %v430 = vpop.f32.mrf.mxu0
  %v431 = vadd.f32 %v111, %v430
  %v432 = vpop.f32.mrf.mxu0
  %433 = vmatprep.mubr.f32.mxu0 0.0
  %434 = vmatmul.mubr.f32.gmra.mxu0 %v208
  %v435 = vpop.f32.mrf.mxu0
  %v436 = vadd.f32 %v111, %v435
  %v437 = vpop.f32.mrf.mxu0
  %438 = vdwg.mxu0
  %v439 = vmax.f32 %v281, 0.0
  %v440 = vmax.f32 %v286, 0.0
  %v441 = vmax.f32 %v291, 0.0
  %v442 = vmax.f32 %v296, 0.0
  %v443 = vmax.f32 %v301, 0.0
  %v444 = vmax.f32 %v306, 0.0
  %v445 = vmax.f32 %v311, 0.0
  %v446 = vmax.f32 %v316, 0.0
  %v447 = vmax.f32 %v321, 0.0
  %v448 = vmax.f32 %v326, 0.0
  %v449 = vmax.f32 %v331, 0.0
  %v450 = vmax.f32 %v336, 0.0
  %v451 = vmax.f32 %v341, 0.0
  %v452 = vmax.f32 %v346, 0.0
  %v453 = vmax.f32 %v351, 0.0
  %v454 = vmax.f32 %v356, 0.0
  %v455 = vmax.f32 %v361, 0.0
  %v456 = vmax.f32 %v366, 0.0
  %v457 = vmax.f32 %v371, 0.0
  %v458 = vmax.f32 %v376, 0.0
  %v459 = vmax.f32 %v381, 0.0
  %v460 = vmax.f32 %v386, 0.0
  %v461 = vmax.f32 %v391, 0.0
  %v462 = vmax.f32 %v396, 0.0
  %v463 = vmax.f32 %v401, 0.0
  %v464 = vmax.f32 %v406, 0.0
  %v465 = vmax.f32 %v411, 0.0
  %v466 = vmax.f32 %v416, 0.0
  %v467 = vmax.f32 %v421, 0.0
  %v468 = vmax.f32 %v426, 0.0
  %v469 = vmax.f32 %v431, 0.0
  %v470 = vmax.f32 %v436, 0.0
  %vm471 = vcmask 261120
  %472 = vst.msk [vmem:[#allocation2 + $0x2] sm:$0xff] %vm471, %v439
  %473 = vst.msk [vmem:[#allocation2 + $0xa] sm:$0xff] %vm471, %v440
  %474 = vst.msk [vmem:[#allocation2 + $0x1a] sm:$0xff] %vm471, %v441
  %475 = vst.msk [vmem:[#allocation2 + $0x22] sm:$0xff] %vm471, %v442
  %476 = vst.msk [vmem:[#allocation2 + $0x32] sm:$0xff] %vm471, %v443
  %477 = vst.msk [vmem:[#allocation2 + $0x3a] sm:$0xff] %vm471, %v444
  %478 = vst.msk [vmem:[#allocation2 + $0x4a] sm:$0xff] %vm471, %v445
  %479 = vst.msk [vmem:[#allocation2 + $0x52] sm:$0xff] %vm471, %v446
  %480 = vst.msk [vmem:[#allocation2 + $0x62] sm:$0xff] %vm471, %v447
  %481 = vst.msk [vmem:[#allocation2 + $0x6a] sm:$0xff] %vm471, %v448
  %482 = vst.msk [vmem:[#allocation2 + $0x7a] sm:$0xff] %vm471, %v449
  %483 = vst.msk [vmem:[#allocation2 + $0x82] sm:$0xff] %vm471, %v450
  %484 = vst.msk [vmem:[#allocation2 + $0x92] sm:$0xff] %vm471, %v451
  %485 = vst.msk [vmem:[#allocation2 + $0x9a] sm:$0xff] %vm471, %v452
  %486 = vst.msk [vmem:[#allocation2 + $0xaa] sm:$0xff] %vm471, %v453
  %487 = vst.msk [vmem:[#allocation2 + $0xb2] sm:$0xff] %vm471, %v454
  %488 = vst.msk [vmem:[#allocation2 + $0xc2] sm:$0xff] %vm471, %v455
  %489 = vst.msk [vmem:[#allocation2 + $0xca] sm:$0xff] %vm471, %v456
  %490 = vst.msk [vmem:[#allocation2 + $0xda] sm:$0xff] %vm471, %v457
  %491 = vst.msk [vmem:[#allocation2 + $0xe2] sm:$0xff] %vm471, %v458
  %492 = vst.msk [vmem:[#allocation2 + $0xf2] sm:$0xff] %vm471, %v459
  %493 = vst.msk [vmem:[#allocation2 + $0xfa] sm:$0xff] %vm471, %v460
  %494 = vst.msk [vmem:[#allocation2 + $0x10a] sm:$0xff] %vm471, %v461
  %495 = vst.msk [vmem:[#allocation2 + $0x112] sm:$0xff] %vm471, %v462
  %496 = vst.msk [vmem:[#allocation2 + $0x122] sm:$0xff] %vm471, %v463
  %497 = vst.msk [vmem:[#allocation2 + $0x12a] sm:$0xff] %vm471, %v464
  %498 = vst.msk [vmem:[#allocation2 + $0x13a] sm:$0xff] %vm471, %v465
  %499 = vst.msk [vmem:[#allocation2 + $0x142] sm:$0xff] %vm471, %v466
  %500 = vst.msk [vmem:[#allocation2 + $0x152] sm:$0xff] %vm471, %v467
  %501 = vst.msk [vmem:[#allocation2 + $0x15a] sm:$0xff] %vm471, %v468
  %502 = vst.msk [vmem:[#allocation2 + $0x16a] sm:$0xff] %vm471, %v469
  %503 = vst.msk [vmem:[#allocation2 + $0x172] sm:$0xff] %vm471, %v470
  %v504 = vld [vmem:[#allocation2] sm:$0xff]
  %v505 = vld [vmem:[#allocation2 + $0x8] sm:$0xff]
  %v506 = vld [vmem:[#allocation2 + $0x18] sm:$0xff]
  %v507 = vld [vmem:[#allocation2 + $0x20] sm:$0xff]
  %v508 = vld [vmem:[#allocation2 + $0x30] sm:$0xff]
  %v509 = vld [vmem:[#allocation2 + $0x38] sm:$0xff]
  %v510 = vld [vmem:[#allocation2 + $0x48] sm:$0xff]
  %v511 = vld [vmem:[#allocation2 + $0x50] sm:$0xff]
  %v512 = vld [vmem:[#allocation2 + $0x60] sm:$0xff]
  %v513 = vld [vmem:[#allocation2 + $0x68] sm:$0xff]
  %v514 = vld [vmem:[#allocation2 + $0x78] sm:$0xff]
  %v515 = vld [vmem:[#allocation2 + $0x80] sm:$0xff]
  %v516 = vld [vmem:[#allocation2 + $0x90] sm:$0xff]
  %v517 = vld [vmem:[#allocation2 + $0x98] sm:$0xff]
  %v518 = vld [vmem:[#allocation2 + $0xa8] sm:$0xff]
  %v519 = vld [vmem:[#allocation2 + $0xb0] sm:$0xff]
  %v520 = vld [vmem:[#allocation2 + $0xc0] sm:$0xff]
  %v521 = vld [vmem:[#allocation2 + $0xc8] sm:$0xff]
  %v522 = vld [vmem:[#allocation2 + $0xd8] sm:$0xff]
  %v523 = vld [vmem:[#allocation2 + $0xe0] sm:$0xff]
  %v524 = vld [vmem:[#allocation2 + $0xf0] sm:$0xff]
  %v525 = vld [vmem:[#allocation2 + $0xf8] sm:$0xff]
  %v526 = vld [vmem:[#allocation2 + $0x108] sm:$0xff]
  %v527 = vld [vmem:[#allocation2 + $0x110] sm:$0xff]
  %v528 = vld [vmem:[#allocation2 + $0x120] sm:$0xff]
  %v529 = vld [vmem:[#allocation2 + $0x128] sm:$0xff]
  %v530 = vld [vmem:[#allocation2 + $0x138] sm:$0xff]
  %v531 = vld [vmem:[#allocation2 + $0x140] sm:$0xff]
  %v532 = vld [vmem:[#allocation2 + $0x150] sm:$0xff]
  %v533 = vld [vmem:[#allocation2 + $0x158] sm:$0xff]
  %v534 = vld [vmem:[#allocation2 + $0x168] sm:$0xff]
  %v535 = vld [vmem:[#allocation2 + $0x170] sm:$0xff]
  %v536 = vld [vmem:[%s3] sm:$0xff]
  %v537 = vld [vmem:[%s3 + $0x8] sm:$0xff]
  %v538 = vld [vmem:[%s3 + $0x10] sm:$0xff]
  %v539 = vld [vmem:[%s3 + $0x18] sm:$0xff]
  %v540 = vld [vmem:[#allocation2 + $0x1] sm:$0xff]
  %v541 = vld [vmem:[#allocation2 + $0x9] sm:$0xff]
  %v542 = vld [vmem:[#allocation2 + $0x19] sm:$0xff]
  %v543 = vld [vmem:[#allocation2 + $0x21] sm:$0xff]
  %v544 = vld [vmem:[#allocation2 + $0x31] sm:$0xff]
  %v545 = vld [vmem:[#allocation2 + $0x39] sm:$0xff]
  %v546 = vld [vmem:[#allocation2 + $0x49] sm:$0xff]
  %v547 = vld [vmem:[#allocation2 + $0x51] sm:$0xff]
  %v548 = vld [vmem:[#allocation2 + $0x61] sm:$0xff]
  %v549 = vld [vmem:[#allocation2 + $0x69] sm:$0xff]
  %v550 = vld [vmem:[#allocation2 + $0x79] sm:$0xff]
  %v551 = vld [vmem:[#allocation2 + $0x81] sm:$0xff]
  %v552 = vld [vmem:[#allocation2 + $0x91] sm:$0xff]
  %v553 = vld [vmem:[#allocation2 + $0x99] sm:$0xff]
  %v554 = vld [vmem:[#allocation2 + $0xa9] sm:$0xff]
  %v555 = vld [vmem:[#allocation2 + $0xb1] sm:$0xff]
  %v556 = vld [vmem:[#allocation2 + $0xc1] sm:$0xff]
  %v557 = vld [vmem:[#allocation2 + $0xc9] sm:$0xff]
  %v558 = vld [vmem:[#allocation2 + $0xd9] sm:$0xff]
  %v559 = vld [vmem:[#allocation2 + $0xe1] sm:$0xff]
  %v560 = vld [vmem:[#allocation2 + $0xf1] sm:$0xff]
  %v561 = vld [vmem:[#allocation2 + $0xf9] sm:$0xff]
  %v562 = vld [vmem:[#allocation2 + $0x109] sm:$0xff]
  %v563 = vld [vmem:[#allocation2 + $0x111] sm:$0xff]
  %v564 = vld [vmem:[#allocation2 + $0x121] sm:$0xff]
  %v565 = vld [vmem:[#allocation2 + $0x129] sm:$0xff]
  %v566 = vld [vmem:[#allocation2 + $0x139] sm:$0xff]
  %v567 = vld [vmem:[#allocation2 + $0x141] sm:$0xff]
  %v568 = vld [vmem:[#allocation2 + $0x151] sm:$0xff]
  %v569 = vld [vmem:[#allocation2 + $0x159] sm:$0xff]
  %v570 = vld [vmem:[#allocation2 + $0x169] sm:$0xff]
  %v571 = vld [vmem:[#allocation2 + $0x171] sm:$0xff]
  %s572 = scalar_lea.vmem %s3, 32
  %v573 = vld [vmem:[%s572] sm:$0xff]
  %v574 = vld [vmem:[%s572 + $0x8] sm:$0xff]
  %v575 = vld [vmem:[%s572 + $0x10] sm:$0xff]
  %v576 = vld [vmem:[%s572 + $0x18] sm:$0xff]
  %v578 = vsel %vm471, %v540, 0
  %v581 = vsel %vm471, %v541, 0
  %v584 = vsel %vm471, %v542, 0
  %v587 = vsel %vm471, %v543, 0
  %v590 = vsel %vm471, %v544, 0
  %v593 = vsel %vm471, %v545, 0
  %v596 = vsel %vm471, %v546, 0
  %v599 = vsel %vm471, %v547, 0
  %v602 = vsel %vm471, %v548, 0
  %v605 = vsel %vm471, %v549, 0
  %v608 = vsel %vm471, %v550, 0
  %v611 = vsel %vm471, %v551, 0
  %v614 = vsel %vm471, %v552, 0
  %v617 = vsel %vm471, %v553, 0
  %v620 = vsel %vm471, %v554, 0
  %v623 = vsel %vm471, %v555, 0
  %v626 = vsel %vm471, %v556, 0
  %v629 = vsel %vm471, %v557, 0
  %v632 = vsel %vm471, %v558, 0
  %v635 = vsel %vm471, %v559, 0
  %v638 = vsel %vm471, %v560, 0
  %v641 = vsel %vm471, %v561, 0
  %v644 = vsel %vm471, %v562, 0
  %v647 = vsel %vm471, %v563, 0
  %v650 = vsel %vm471, %v564, 0
  %v653 = vsel %vm471, %v565, 0
  %v656 = vsel %vm471, %v566, 0
  %v659 = vsel %vm471, %v567, 0
  %v662 = vsel %vm471, %v568, 0
  %v665 = vsel %vm471, %v569, 0
  %v668 = vsel %vm471, %v570, 0
  %v671 = vsel %vm471, %v571, 0
  %673 = vmatprep.subr.mxu0 0.0
  %674 = vmatpush1.msra.mxu0 0.0
  %675 = vmatprep.subr.mxu0 0.0
  %676 = vmatpush1.msra.mxu0 0.0
  %677 = vmatprep.subr.mxu0 0.0
  %678 = vmatpush1.msra.mxu0 0.0
  %679 = vmatprep.subr.mxu0 0.0
  %680 = vmatpush1.msra.mxu0 0.0
  %681 = vmatprep.subr.mxu0 0.0
  %682 = vmatpush1.msra.mxu0 0.0
  %683 = vmatprep.subr.mxu0 0.0
  %684 = vmatpush1.msra.mxu0 0.0
  %685 = vmatprep.subr.mxu0 0.0
  %686 = vmatpush1.msra.mxu0 0.0
  %687 = vmatprep.subr.mxu0 0.0
  %688 = vmatpush1.msra.mxu0 0.0
  %689 = vmatprep.subr.mxu0 0.0
  %690 = vmatpush1.msra.mxu0 0.0
  %691 = vmatprep.subr.mxu0 0.0
  %692 = vmatpush1.msra.mxu0 0.0
  %693 = vmatprep.subr.mxu0 0.0
  %694 = vmatpush1.msra.mxu0 0.0
  %695 = vmatprep.subr.mxu0 0.0
  %696 = vmatpush1.msra.mxu0 0.0
  %697 = vmatprep.subr.mxu0 0.0
  %698 = vmatpush1.msra.mxu0 %v576
  %699 = vmatprep.subr.mxu0 0.0
  %700 = vmatpush1.msra.mxu0 %v575
  %701 = vmatprep.subr.mxu0 0.0
  %702 = vmatpush1.msra.mxu0 %v574
  %703 = vmatprep.subr.mxu0 0.0
  %704 = vmatpush1.msra.mxu0 %v573
  %705 = vmatprep.subr.mxu0 0.0
  %706 = vmatpush2.msra.mxu0 0.0
  %707 = vmatprep.subr.mxu0 0.0
  %708 = vmatpush2.msra.mxu0 0.0
  %709 = vmatprep.subr.mxu0 0.0
  %710 = vmatpush2.msra.mxu0 0.0
  %711 = vmatprep.subr.mxu0 0.0
  %712 = vmatpush2.msra.mxu0 0.0
  %713 = vmatprep.subr.mxu0 0.0
  %714 = vmatpush2.msra.mxu0 0.0
  %715 = vmatprep.subr.mxu0 0.0
  %716 = vmatpush2.msra.mxu0 0.0
  %717 = vmatprep.subr.mxu0 0.0
  %718 = vmatpush2.msra.mxu0 0.0
  %719 = vmatprep.subr.mxu0 0.0
  %720 = vmatpush2.msra.mxu0 0.0
  %721 = vmatprep.subr.mxu0 0.0
  %722 = vmatpush2.msra.mxu0 0.0
  %723 = vmatprep.subr.mxu0 0.0
  %724 = vmatpush2.msra.mxu0 0.0
  %725 = vmatprep.subr.mxu0 0.0
  %726 = vmatpush2.msra.mxu0 0.0
  %727 = vmatprep.subr.mxu0 0.0
  %728 = vmatpush2.msra.mxu0 0.0
  %729 = vmatprep.subr.mxu0 0.0
  %730 = vmatpush2.msra.mxu0 0.0
  %731 = vmatprep.subr.mxu0 0.0
  %732 = vmatpush2.msra.mxu0 0.0
  %733 = vmatprep.subr.mxu0 0.0
  %734 = vmatpush2.msra.mxu0 0.0
  %735 = vmatprep.subr.mxu0 0.0
  %736 = vmatpush2.msra.mxu0 0.0
  %737 = vmatprep.mubr.f32.mxu0 0.0
  %738 = vmatmul.mubr.f32.gmra.mxu0 %v578
  %v739 = vpop.f32.mrf.mxu0
  %v740 = vadd.f32 0.0, %v739
  %v741 = vpop.f32.mrf.mxu0
  %742 = vmatprep.mubr.f32.mxu0 0.0
  %743 = vmatmul.mubr.f32.gmra.mxu0 %v581
  %v744 = vpop.f32.mrf.mxu0
  %v745 = vadd.f32 0.0, %v744
  %v746 = vpop.f32.mrf.mxu0
  %747 = vmatprep.mubr.f32.mxu0 0.0
  %748 = vmatmul.mubr.f32.gmra.mxu0 %v584
  %v749 = vpop.f32.mrf.mxu0
  %v750 = vadd.f32 0.0, %v749
  %v751 = vpop.f32.mrf.mxu0
  %752 = vmatprep.mubr.f32.mxu0 0.0
  %753 = vmatmul.mubr.f32.gmra.mxu0 %v587
  %v754 = vpop.f32.mrf.mxu0
  %v755 = vadd.f32 0.0, %v754
  %v756 = vpop.f32.mrf.mxu0
  %757 = vmatprep.mubr.f32.mxu0 0.0
  %758 = vmatmul.mubr.f32.gmra.mxu0 %v590
  %v759 = vpop.f32.mrf.mxu0
  %v760 = vadd.f32 0.0, %v759
  %v761 = vpop.f32.mrf.mxu0
  %762 = vmatprep.mubr.f32.mxu0 0.0
  %763 = vmatmul.mubr.f32.gmra.mxu0 %v593
  %v764 = vpop.f32.mrf.mxu0
  %v765 = vadd.f32 0.0, %v764
  %v766 = vpop.f32.mrf.mxu0
  %767 = vmatprep.mubr.f32.mxu0 0.0
  %768 = vmatmul.mubr.f32.gmra.mxu0 %v596
  %v769 = vpop.f32.mrf.mxu0
  %v770 = vadd.f32 0.0, %v769
  %v771 = vpop.f32.mrf.mxu0
  %772 = vmatprep.mubr.f32.mxu0 0.0
  %773 = vmatmul.mubr.f32.gmra.mxu0 %v599
  %v774 = vpop.f32.mrf.mxu0
  %v775 = vadd.f32 0.0, %v774
  %v776 = vpop.f32.mrf.mxu0
  %777 = vmatprep.mubr.f32.mxu0 0.0
  %778 = vmatmul.mubr.f32.gmra.mxu0 %v602
  %v779 = vpop.f32.mrf.mxu0
  %v780 = vadd.f32 0.0, %v779
  %v781 = vpop.f32.mrf.mxu0
  %782 = vmatprep.mubr.f32.mxu0 0.0
  %783 = vmatmul.mubr.f32.gmra.mxu0 %v605
  %v784 = vpop.f32.mrf.mxu0
  %v785 = vadd.f32 0.0, %v784
  %v786 = vpop.f32.mrf.mxu0
  %787 = vmatprep.mubr.f32.mxu0 0.0
  %788 = vmatmul.mubr.f32.gmra.mxu0 %v608
  %v789 = vpop.f32.mrf.mxu0
  %v790 = vadd.f32 0.0, %v789
  %v791 = vpop.f32.mrf.mxu0
  %792 = vmatprep.mubr.f32.mxu0 0.0
  %793 = vmatmul.mubr.f32.gmra.mxu0 %v611
  %v794 = vpop.f32.mrf.mxu0
  %v795 = vadd.f32 0.0, %v794
  %v796 = vpop.f32.mrf.mxu0
  %797 = vmatprep.mubr.f32.mxu0 0.0
  %798 = vmatmul.mubr.f32.gmra.mxu0 %v614
  %v799 = vpop.f32.mrf.mxu0
  %v800 = vadd.f32 0.0, %v799
  %v801 = vpop.f32.mrf.mxu0
  %802 = vmatprep.mubr.f32.mxu0 0.0
  %803 = vmatmul.mubr.f32.gmra.mxu0 %v617
  %v804 = vpop.f32.mrf.mxu0
  %v805 = vadd.f32 0.0, %v804
  %v806 = vpop.f32.mrf.mxu0
  %807 = vmatprep.mubr.f32.mxu0 0.0
  %808 = vmatmul.mubr.f32.gmra.mxu0 %v620
  %v809 = vpop.f32.mrf.mxu0
  %v810 = vadd.f32 0.0, %v809
  %v811 = vpop.f32.mrf.mxu0
  %812 = vmatprep.mubr.f32.mxu0 0.0
  %813 = vmatmul.mubr.f32.gmra.mxu0 %v623
  %v814 = vpop.f32.mrf.mxu0
  %v815 = vadd.f32 0.0, %v814
  %v816 = vpop.f32.mrf.mxu0
  %817 = vmatprep.mubr.f32.mxu0 0.0
  %818 = vmatmul.mubr.f32.gmra.mxu0 %v626
  %v819 = vpop.f32.mrf.mxu0
  %v820 = vadd.f32 0.0, %v819
  %v821 = vpop.f32.mrf.mxu0
  %822 = vmatprep.mubr.f32.mxu0 0.0
  %823 = vmatmul.mubr.f32.gmra.mxu0 %v629
  %v824 = vpop.f32.mrf.mxu0
  %v825 = vadd.f32 0.0, %v824
  %v826 = vpop.f32.mrf.mxu0
  %827 = vmatprep.mubr.f32.mxu0 0.0
  %828 = vmatmul.mubr.f32.gmra.mxu0 %v632
  %v829 = vpop.f32.mrf.mxu0
  %v830 = vadd.f32 0.0, %v829
  %v831 = vpop.f32.mrf.mxu0
  %832 = vmatprep.mubr.f32.mxu0 0.0
  %833 = vmatmul.mubr.f32.gmra.mxu0 %v635
  %v834 = vpop.f32.mrf.mxu0
  %v835 = vadd.f32 0.0, %v834
  %v836 = vpop.f32.mrf.mxu0
  %837 = vmatprep.mubr.f32.mxu0 0.0
  %838 = vmatmul.mubr.f32.gmra.mxu0 %v638
  %v839 = vpop.f32.mrf.mxu0
  %v840 = vadd.f32 0.0, %v839
  %v841 = vpop.f32.mrf.mxu0
  %842 = vmatprep.mubr.f32.mxu0 0.0
  %843 = vmatmul.mubr.f32.gmra.mxu0 %v641
  %v844 = vpop.f32.mrf.mxu0
  %v845 = vadd.f32 0.0, %v844
  %v846 = vpop.f32.mrf.mxu0
  %847 = vmatprep.mubr.f32.mxu0 0.0
  %848 = vmatmul.mubr.f32.gmra.mxu0 %v644
  %v849 = vpop.f32.mrf.mxu0
  %v850 = vadd.f32 0.0, %v849
  %v851 = vpop.f32.mrf.mxu0
  %852 = vmatprep.mubr.f32.mxu0 0.0
  %853 = vmatmul.mubr.f32.gmra.mxu0 %v647
  %v854 = vpop.f32.mrf.mxu0
  %v855 = vadd.f32 0.0, %v854
  %v856 = vpop.f32.mrf.mxu0
  %857 = vmatprep.mubr.f32.mxu0 0.0
  %858 = vmatmul.mubr.f32.gmra.mxu0 %v650
  %v859 = vpop.f32.mrf.mxu0
  %v860 = vadd.f32 0.0, %v859
  %v861 = vpop.f32.mrf.mxu0
  %862 = vmatprep.mubr.f32.mxu0 0.0
  %863 = vmatmul.mubr.f32.gmra.mxu0 %v653
  %v864 = vpop.f32.mrf.mxu0
  %v865 = vadd.f32 0.0, %v864
  %v866 = vpop.f32.mrf.mxu0
  %867 = vmatprep.mubr.f32.mxu0 0.0
  %868 = vmatmul.mubr.f32.gmra.mxu0 %v656
  %v869 = vpop.f32.mrf.mxu0
  %v870 = vadd.f32 0.0, %v869
  %v871 = vpop.f32.mrf.mxu0
  %872 = vmatprep.mubr.f32.mxu0 0.0
  %873 = vmatmul.mubr.f32.gmra.mxu0 %v659
  %v874 = vpop.f32.mrf.mxu0
  %v875 = vadd.f32 0.0, %v874
  %v876 = vpop.f32.mrf.mxu0
  %877 = vmatprep.mubr.f32.mxu0 0.0
  %878 = vmatmul.mubr.f32.gmra.mxu0 %v662
  %v879 = vpop.f32.mrf.mxu0
  %v880 = vadd.f32 0.0, %v879
  %v881 = vpop.f32.mrf.mxu0
  %882 = vmatprep.mubr.f32.mxu0 0.0
  %883 = vmatmul.mubr.f32.gmra.mxu0 %v665
  %v884 = vpop.f32.mrf.mxu0
  %v885 = vadd.f32 0.0, %v884
  %v886 = vpop.f32.mrf.mxu0
  %887 = vmatprep.mubr.f32.mxu0 0.0
  %888 = vmatmul.mubr.f32.gmra.mxu0 %v668
  %v889 = vpop.f32.mrf.mxu0
  %v890 = vadd.f32 0.0, %v889
  %v891 = vpop.f32.mrf.mxu0
  %892 = vmatprep.mubr.f32.mxu0 0.0
  %893 = vmatmul.mubr.f32.gmra.mxu0 %v671
  %v894 = vpop.f32.mrf.mxu0
  %v895 = vadd.f32 0.0, %v894
  %v896 = vpop.f32.mrf.mxu0
  %897 = vdwg.mxu0
  %v899 = vsel %vm471, %v504, 0
  %v902 = vsel %vm471, %v505, 0
  %v905 = vsel %vm471, %v506, 0
  %v908 = vsel %vm471, %v507, 0
  %v911 = vsel %vm471, %v508, 0
  %v914 = vsel %vm471, %v509, 0
  %v917 = vsel %vm471, %v510, 0
  %v920 = vsel %vm471, %v511, 0
  %v923 = vsel %vm471, %v512, 0
  %v926 = vsel %vm471, %v513, 0
  %v929 = vsel %vm471, %v514, 0
  %v932 = vsel %vm471, %v515, 0
  %v935 = vsel %vm471, %v516, 0
  %v938 = vsel %vm471, %v517, 0
  %v941 = vsel %vm471, %v518, 0
  %v944 = vsel %vm471, %v519, 0
  %v947 = vsel %vm471, %v520, 0
  %v950 = vsel %vm471, %v521, 0
  %v953 = vsel %vm471, %v522, 0
  %v956 = vsel %vm471, %v523, 0
  %v959 = vsel %vm471, %v524, 0
  %v962 = vsel %vm471, %v525, 0
  %v965 = vsel %vm471, %v526, 0
  %v968 = vsel %vm471, %v527, 0
  %v971 = vsel %vm471, %v528, 0
  %v974 = vsel %vm471, %v529, 0
  %v977 = vsel %vm471, %v530, 0
  %v980 = vsel %vm471, %v531, 0
  %v983 = vsel %vm471, %v532, 0
  %v986 = vsel %vm471, %v533, 0
  %v989 = vsel %vm471, %v534, 0
  %v992 = vsel %vm471, %v535, 0
  %994 = vmatprep.subr.mxu0 0.0
  %995 = vmatpush1.msra.mxu0 0.0
  %996 = vmatprep.subr.mxu0 0.0
  %997 = vmatpush1.msra.mxu0 0.0
  %998 = vmatprep.subr.mxu0 0.0
  %999 = vmatpush1.msra.mxu0 0.0
  %1000 = vmatprep.subr.mxu0 0.0
  %1001 = vmatpush1.msra.mxu0 0.0
  %1002 = vmatprep.subr.mxu0 0.0
  %1003 = vmatpush1.msra.mxu0 0.0
  %1004 = vmatprep.subr.mxu0 0.0
  %1005 = vmatpush1.msra.mxu0 0.0
  %1006 = vmatprep.subr.mxu0 0.0
  %1007 = vmatpush1.msra.mxu0 0.0
  %1008 = vmatprep.subr.mxu0 0.0
  %1009 = vmatpush1.msra.mxu0 0.0
  %1010 = vmatprep.subr.mxu0 0.0
  %1011 = vmatpush1.msra.mxu0 0.0
  %1012 = vmatprep.subr.mxu0 0.0
  %1013 = vmatpush1.msra.mxu0 0.0
  %1014 = vmatprep.subr.mxu0 0.0
  %1015 = vmatpush1.msra.mxu0 0.0
  %1016 = vmatprep.subr.mxu0 0.0
  %1017 = vmatpush1.msra.mxu0 0.0
  %1018 = vmatprep.subr.mxu0 0.0
  %1019 = vmatpush1.msra.mxu0 %v539
  %1020 = vmatprep.subr.mxu0 0.0
  %1021 = vmatpush1.msra.mxu0 %v538
  %1022 = vmatprep.subr.mxu0 0.0
  %1023 = vmatpush1.msra.mxu0 %v537
  %1024 = vmatprep.subr.mxu0 0.0
  %1025 = vmatpush1.msra.mxu0 %v536
  %1026 = vmatprep.subr.mxu0 0.0
  %1027 = vmatpush2.msra.mxu0 0.0
  %1028 = vmatprep.subr.mxu0 0.0
  %1029 = vmatpush2.msra.mxu0 0.0
  %1030 = vmatprep.subr.mxu0 0.0
  %1031 = vmatpush2.msra.mxu0 0.0
  %1032 = vmatprep.subr.mxu0 0.0
  %1033 = vmatpush2.msra.mxu0 0.0
  %1034 = vmatprep.subr.mxu0 0.0
  %1035 = vmatpush2.msra.mxu0 0.0
  %1036 = vmatprep.subr.mxu0 0.0
  %1037 = vmatpush2.msra.mxu0 0.0
  %1038 = vmatprep.subr.mxu0 0.0
  %1039 = vmatpush2.msra.mxu0 0.0
  %1040 = vmatprep.subr.mxu0 0.0
  %1041 = vmatpush2.msra.mxu0 0.0
  %1042 = vmatprep.subr.mxu0 0.0
  %1043 = vmatpush2.msra.mxu0 0.0
  %1044 = vmatprep.subr.mxu0 0.0
  %1045 = vmatpush2.msra.mxu0 0.0
  %1046 = vmatprep.subr.mxu0 0.0
  %1047 = vmatpush2.msra.mxu0 0.0
  %1048 = vmatprep.subr.mxu0 0.0
  %1049 = vmatpush2.msra.mxu0 0.0
  %1050 = vmatprep.subr.mxu0 0.0
  %1051 = vmatpush2.msra.mxu0 0.0
  %1052 = vmatprep.subr.mxu0 0.0
  %1053 = vmatpush2.msra.mxu0 0.0
  %1054 = vmatprep.subr.mxu0 0.0
  %1055 = vmatpush2.msra.mxu0 0.0
  %1056 = vmatprep.subr.mxu0 0.0
  %1057 = vmatpush2.msra.mxu0 0.0
  %1058 = vmatprep.mubr.f32.mxu0 0.0
  %1059 = vmatmul.mubr.f32.gmra.mxu0 %v899
  %v1060 = vpop.f32.mrf.mxu0
  %v1061 = vadd.f32 %v740, %v1060
  %v1062 = vpop.f32.mrf.mxu0
  %1063 = vmatprep.mubr.f32.mxu0 0.0
  %1064 = vmatmul.mubr.f32.gmra.mxu0 %v902
  %v1065 = vpop.f32.mrf.mxu0
  %v1066 = vadd.f32 %v745, %v1065
  %v1067 = vpop.f32.mrf.mxu0
  %1068 = vmatprep.mubr.f32.mxu0 0.0
  %1069 = vmatmul.mubr.f32.gmra.mxu0 %v905
  %v1070 = vpop.f32.mrf.mxu0
  %v1071 = vadd.f32 %v750, %v1070
  %v1072 = vpop.f32.mrf.mxu0
  %1073 = vmatprep.mubr.f32.mxu0 0.0
  %1074 = vmatmul.mubr.f32.gmra.mxu0 %v908
  %v1075 = vpop.f32.mrf.mxu0
  %v1076 = vadd.f32 %v755, %v1075
  %v1077 = vpop.f32.mrf.mxu0
  %1078 = vmatprep.mubr.f32.mxu0 0.0
  %1079 = vmatmul.mubr.f32.gmra.mxu0 %v911
  %v1080 = vpop.f32.mrf.mxu0
  %v1081 = vadd.f32 %v760, %v1080
  %v1082 = vpop.f32.mrf.mxu0
  %1083 = vmatprep.mubr.f32.mxu0 0.0
  %1084 = vmatmul.mubr.f32.gmra.mxu0 %v914
  %v1085 = vpop.f32.mrf.mxu0
  %v1086 = vadd.f32 %v765, %v1085
  %v1087 = vpop.f32.mrf.mxu0
  %1088 = vmatprep.mubr.f32.mxu0 0.0
  %1089 = vmatmul.mubr.f32.gmra.mxu0 %v917
  %v1090 = vpop.f32.mrf.mxu0
  %v1091 = vadd.f32 %v770, %v1090
  %v1092 = vpop.f32.mrf.mxu0
  %1093 = vmatprep.mubr.f32.mxu0 0.0
  %1094 = vmatmul.mubr.f32.gmra.mxu0 %v920
  %v1095 = vpop.f32.mrf.mxu0
  %v1096 = vadd.f32 %v775, %v1095
  %v1097 = vpop.f32.mrf.mxu0
  %1098 = vmatprep.mubr.f32.mxu0 0.0
  %1099 = vmatmul.mubr.f32.gmra.mxu0 %v923
  %v1100 = vpop.f32.mrf.mxu0
  %v1101 = vadd.f32 %v780, %v1100
  %v1102 = vpop.f32.mrf.mxu0
  %1103 = vmatprep.mubr.f32.mxu0 0.0
  %1104 = vmatmul.mubr.f32.gmra.mxu0 %v926
  %v1105 = vpop.f32.mrf.mxu0
  %v1106 = vadd.f32 %v785, %v1105
  %v1107 = vpop.f32.mrf.mxu0
  %1108 = vmatprep.mubr.f32.mxu0 0.0
  %1109 = vmatmul.mubr.f32.gmra.mxu0 %v929
  %v1110 = vpop.f32.mrf.mxu0
  %v1111 = vadd.f32 %v790, %v1110
  %v1112 = vpop.f32.mrf.mxu0
  %1113 = vmatprep.mubr.f32.mxu0 0.0
  %1114 = vmatmul.mubr.f32.gmra.mxu0 %v932
  %v1115 = vpop.f32.mrf.mxu0
  %v1116 = vadd.f32 %v795, %v1115
  %v1117 = vpop.f32.mrf.mxu0
  %1118 = vmatprep.mubr.f32.mxu0 0.0
  %1119 = vmatmul.mubr.f32.gmra.mxu0 %v935
  %v1120 = vpop.f32.mrf.mxu0
  %v1121 = vadd.f32 %v800, %v1120
  %v1122 = vpop.f32.mrf.mxu0
  %1123 = vmatprep.mubr.f32.mxu0 0.0
  %1124 = vmatmul.mubr.f32.gmra.mxu0 %v938
  %v1125 = vpop.f32.mrf.mxu0
  %v1126 = vadd.f32 %v805, %v1125
  %v1127 = vpop.f32.mrf.mxu0
  %1128 = vmatprep.mubr.f32.mxu0 0.0
  %1129 = vmatmul.mubr.f32.gmra.mxu0 %v941
  %v1130 = vpop.f32.mrf.mxu0
  %v1131 = vadd.f32 %v810, %v1130
  %v1132 = vpop.f32.mrf.mxu0
  %1133 = vmatprep.mubr.f32.mxu0 0.0
  %1134 = vmatmul.mubr.f32.gmra.mxu0 %v944
  %v1135 = vpop.f32.mrf.mxu0
  %v1136 = vadd.f32 %v815, %v1135
  %v1137 = vpop.f32.mrf.mxu0
  %1138 = vmatprep.mubr.f32.mxu0 0.0
  %1139 = vmatmul.mubr.f32.gmra.mxu0 %v947
  %v1140 = vpop.f32.mrf.mxu0
  %v1141 = vadd.f32 %v820, %v1140
  %v1142 = vpop.f32.mrf.mxu0
  %1143 = vmatprep.mubr.f32.mxu0 0.0
  %1144 = vmatmul.mubr.f32.gmra.mxu0 %v950
  %v1145 = vpop.f32.mrf.mxu0
  %v1146 = vadd.f32 %v825, %v1145
  %v1147 = vpop.f32.mrf.mxu0
  %1148 = vmatprep.mubr.f32.mxu0 0.0
  %1149 = vmatmul.mubr.f32.gmra.mxu0 %v953
  %v1150 = vpop.f32.mrf.mxu0
  %v1151 = vadd.f32 %v830, %v1150
  %v1152 = vpop.f32.mrf.mxu0
  %1153 = vmatprep.mubr.f32.mxu0 0.0
  %1154 = vmatmul.mubr.f32.gmra.mxu0 %v956
  %v1155 = vpop.f32.mrf.mxu0
  %v1156 = vadd.f32 %v835, %v1155
  %v1157 = vpop.f32.mrf.mxu0
  %1158 = vmatprep.mubr.f32.mxu0 0.0
  %1159 = vmatmul.mubr.f32.gmra.mxu0 %v959
  %v1160 = vpop.f32.mrf.mxu0
  %v1161 = vadd.f32 %v840, %v1160
  %v1162 = vpop.f32.mrf.mxu0
  %1163 = vmatprep.mubr.f32.mxu0 0.0
  %1164 = vmatmul.mubr.f32.gmra.mxu0 %v962
  %v1165 = vpop.f32.mrf.mxu0
  %v1166 = vadd.f32 %v845, %v1165
  %v1167 = vpop.f32.mrf.mxu0
  %1168 = vmatprep.mubr.f32.mxu0 0.0
  %1169 = vmatmul.mubr.f32.gmra.mxu0 %v965
  %v1170 = vpop.f32.mrf.mxu0
  %v1171 = vadd.f32 %v850, %v1170
  %v1172 = vpop.f32.mrf.mxu0
  %1173 = vmatprep.mubr.f32.mxu0 0.0
  %1174 = vmatmul.mubr.f32.gmra.mxu0 %v968
  %v1175 = vpop.f32.mrf.mxu0
  %v1176 = vadd.f32 %v855, %v1175
  %v1177 = vpop.f32.mrf.mxu0
  %1178 = vmatprep.mubr.f32.mxu0 0.0
  %1179 = vmatmul.mubr.f32.gmra.mxu0 %v971
  %v1180 = vpop.f32.mrf.mxu0
  %v1181 = vadd.f32 %v860, %v1180
  %v1182 = vpop.f32.mrf.mxu0
  %1183 = vmatprep.mubr.f32.mxu0 0.0
  %1184 = vmatmul.mubr.f32.gmra.mxu0 %v974
  %v1185 = vpop.f32.mrf.mxu0
  %v1186 = vadd.f32 %v865, %v1185
  %v1187 = vpop.f32.mrf.mxu0
  %1188 = vmatprep.mubr.f32.mxu0 0.0
  %1189 = vmatmul.mubr.f32.gmra.mxu0 %v977
  %v1190 = vpop.f32.mrf.mxu0
  %v1191 = vadd.f32 %v870, %v1190
  %v1192 = vpop.f32.mrf.mxu0
  %1193 = vmatprep.mubr.f32.mxu0 0.0
  %1194 = vmatmul.mubr.f32.gmra.mxu0 %v980
  %v1195 = vpop.f32.mrf.mxu0
  %v1196 = vadd.f32 %v875, %v1195
  %v1197 = vpop.f32.mrf.mxu0
  %1198 = vmatprep.mubr.f32.mxu0 0.0
  %1199 = vmatmul.mubr.f32.gmra.mxu0 %v983
  %v1200 = vpop.f32.mrf.mxu0
  %v1201 = vadd.f32 %v880, %v1200
  %v1202 = vpop.f32.mrf.mxu0
  %1203 = vmatprep.mubr.f32.mxu0 0.0
  %1204 = vmatmul.mubr.f32.gmra.mxu0 %v986
  %v1205 = vpop.f32.mrf.mxu0
  %v1206 = vadd.f32 %v885, %v1205
  %v1207 = vpop.f32.mrf.mxu0
  %1208 = vmatprep.mubr.f32.mxu0 0.0
  %1209 = vmatmul.mubr.f32.gmra.mxu0 %v989
  %v1210 = vpop.f32.mrf.mxu0
  %v1211 = vadd.f32 %v890, %v1210
  %v1212 = vpop.f32.mrf.mxu0
  %1213 = vmatprep.mubr.f32.mxu0 0.0
  %1214 = vmatmul.mubr.f32.gmra.mxu0 %v992
  %v1215 = vpop.f32.mrf.mxu0
  %v1216 = vadd.f32 %v895, %v1215
  %v1217 = vpop.f32.mrf.mxu0
  %1218 = vdwg.mxu0
  %v1219 = vld [vmem:[#allocation2 + $0x2] sm:$0xff]
  %v1220 = vld [vmem:[#allocation2 + $0xa] sm:$0xff]
  %v1221 = vld [vmem:[#allocation2 + $0x1a] sm:$0xff]
  %v1222 = vld [vmem:[#allocation2 + $0x22] sm:$0xff]
  %v1223 = vld [vmem:[#allocation2 + $0x32] sm:$0xff]
  %v1224 = vld [vmem:[#allocation2 + $0x3a] sm:$0xff]
  %v1225 = vld [vmem:[#allocation2 + $0x4a] sm:$0xff]
  %v1226 = vld [vmem:[#allocation2 + $0x52] sm:$0xff]
  %v1227 = vld [vmem:[#allocation2 + $0x62] sm:$0xff]
  %v1228 = vld [vmem:[#allocation2 + $0x6a] sm:$0xff]
  %v1229 = vld [vmem:[#allocation2 + $0x7a] sm:$0xff]
  %v1230 = vld [vmem:[#allocation2 + $0x82] sm:$0xff]
  %v1231 = vld [vmem:[#allocation2 + $0x92] sm:$0xff]
  %v1232 = vld [vmem:[#allocation2 + $0x9a] sm:$0xff]
  %v1233 = vld [vmem:[#allocation2 + $0xaa] sm:$0xff]
  %v1234 = vld [vmem:[#allocation2 + $0xb2] sm:$0xff]
  %v1235 = vld [vmem:[#allocation2 + $0xc2] sm:$0xff]
  %v1236 = vld [vmem:[#allocation2 + $0xca] sm:$0xff]
  %v1237 = vld [vmem:[#allocation2 + $0xda] sm:$0xff]
  %v1238 = vld [vmem:[#allocation2 + $0xe2] sm:$0xff]
  %v1239 = vld [vmem:[#allocation2 + $0xf2] sm:$0xff]
  %v1240 = vld [vmem:[#allocation2 + $0xfa] sm:$0xff]
  %v1241 = vld [vmem:[#allocation2 + $0x10a] sm:$0xff]
  %v1242 = vld [vmem:[#allocation2 + $0x112] sm:$0xff]
  %v1243 = vld [vmem:[#allocation2 + $0x122] sm:$0xff]
  %v1244 = vld [vmem:[#allocation2 + $0x12a] sm:$0xff]
  %v1245 = vld [vmem:[#allocation2 + $0x13a] sm:$0xff]
  %v1246 = vld [vmem:[#allocation2 + $0x142] sm:$0xff]
  %v1247 = vld [vmem:[#allocation2 + $0x152] sm:$0xff]
  %v1248 = vld [vmem:[#allocation2 + $0x15a] sm:$0xff]
  %v1249 = vld [vmem:[#allocation2 + $0x16a] sm:$0xff]
  %v1250 = vld [vmem:[#allocation2 + $0x172] sm:$0xff]
  %s1251 = scalar_lea.vmem %s3, 64
  %v1252 = vld [vmem:[%s1251] sm:$0xff]
  %v1253 = vld [vmem:[%s1251 + $0x8] sm:$0xff]
  %v1254 = vld [vmem:[%s1251 + $0x10] sm:$0xff]
  %v1255 = vld [vmem:[%s1251 + $0x18] sm:$0xff]
  %v1257 = vsel %vm471, %v1219, 0
  %v1260 = vsel %vm471, %v1220, 0
  %v1263 = vsel %vm471, %v1221, 0
  %v1266 = vsel %vm471, %v1222, 0
  %v1269 = vsel %vm471, %v1223, 0
  %v1272 = vsel %vm471, %v1224, 0
  %v1275 = vsel %vm471, %v1225, 0
  %v1278 = vsel %vm471, %v1226, 0
  %v1281 = vsel %vm471, %v1227, 0
  %v1284 = vsel %vm471, %v1228, 0
  %v1287 = vsel %vm471, %v1229, 0
  %v1290 = vsel %vm471, %v1230, 0
  %v1293 = vsel %vm471, %v1231, 0
  %v1296 = vsel %vm471, %v1232, 0
  %v1299 = vsel %vm471, %v1233, 0
  %v1302 = vsel %vm471, %v1234, 0
  %v1305 = vsel %vm471, %v1235, 0
  %v1308 = vsel %vm471, %v1236, 0
  %v1311 = vsel %vm471, %v1237, 0
  %v1314 = vsel %vm471, %v1238, 0
  %v1317 = vsel %vm471, %v1239, 0
  %v1320 = vsel %vm471, %v1240, 0
  %v1323 = vsel %vm471, %v1241, 0
  %v1326 = vsel %vm471, %v1242, 0
  %v1329 = vsel %vm471, %v1243, 0
  %v1332 = vsel %vm471, %v1244, 0
  %v1335 = vsel %vm471, %v1245, 0
  %v1338 = vsel %vm471, %v1246, 0
  %v1341 = vsel %vm471, %v1247, 0
  %v1344 = vsel %vm471, %v1248, 0
  %v1347 = vsel %vm471, %v1249, 0
  %v1350 = vsel %vm471, %v1250, 0
  %1352 = vmatprep.subr.mxu0 0.0
  %1353 = vmatpush1.msra.mxu0 0.0
  %1354 = vmatprep.subr.mxu0 0.0
  %1355 = vmatpush1.msra.mxu0 0.0
  %1356 = vmatprep.subr.mxu0 0.0
  %1357 = vmatpush1.msra.mxu0 0.0
  %1358 = vmatprep.subr.mxu0 0.0
  %1359 = vmatpush1.msra.mxu0 0.0
  %1360 = vmatprep.subr.mxu0 0.0
  %1361 = vmatpush1.msra.mxu0 0.0
  %1362 = vmatprep.subr.mxu0 0.0
  %1363 = vmatpush1.msra.mxu0 0.0
  %1364 = vmatprep.subr.mxu0 0.0
  %1365 = vmatpush1.msra.mxu0 0.0
  %1366 = vmatprep.subr.mxu0 0.0
  %1367 = vmatpush1.msra.mxu0 0.0
  %1368 = vmatprep.subr.mxu0 0.0
  %1369 = vmatpush1.msra.mxu0 0.0
  %1370 = vmatprep.subr.mxu0 0.0
  %1371 = vmatpush1.msra.mxu0 0.0
  %1372 = vmatprep.subr.mxu0 0.0
  %1373 = vmatpush1.msra.mxu0 0.0
  %1374 = vmatprep.subr.mxu0 0.0
  %1375 = vmatpush1.msra.mxu0 0.0
  %1376 = vmatprep.subr.mxu0 0.0
  %1377 = vmatpush1.msra.mxu0 %v1255
  %1378 = vmatprep.subr.mxu0 0.0
  %1379 = vmatpush1.msra.mxu0 %v1254
  %1380 = vmatprep.subr.mxu0 0.0
  %1381 = vmatpush1.msra.mxu0 %v1253
  %1382 = vmatprep.subr.mxu0 0.0
  %1383 = vmatpush1.msra.mxu0 %v1252
  %1384 = vmatprep.subr.mxu0 0.0
  %1385 = vmatpush2.msra.mxu0 0.0
  %1386 = vmatprep.subr.mxu0 0.0
  %1387 = vmatpush2.msra.mxu0 0.0
  %1388 = vmatprep.subr.mxu0 0.0
  %1389 = vmatpush2.msra.mxu0 0.0
  %1390 = vmatprep.subr.mxu0 0.0
  %1391 = vmatpush2.msra.mxu0 0.0
  %1392 = vmatprep.subr.mxu0 0.0
  %1393 = vmatpush2.msra.mxu0 0.0
  %1394 = vmatprep.subr.mxu0 0.0
  %1395 = vmatpush2.msra.mxu0 0.0
  %1396 = vmatprep.subr.mxu0 0.0
  %1397 = vmatpush2.msra.mxu0 0.0
  %1398 = vmatprep.subr.mxu0 0.0
  %1399 = vmatpush2.msra.mxu0 0.0
  %1400 = vmatprep.subr.mxu0 0.0
  %1401 = vmatpush2.msra.mxu0 0.0
  %1402 = vmatprep.subr.mxu0 0.0
  %1403 = vmatpush2.msra.mxu0 0.0
  %1404 = vmatprep.subr.mxu0 0.0
  %1405 = vmatpush2.msra.mxu0 0.0
  %1406 = vmatprep.subr.mxu0 0.0
  %1407 = vmatpush2.msra.mxu0 0.0
  %1408 = vmatprep.subr.mxu0 0.0
  %1409 = vmatpush2.msra.mxu0 0.0
  %1410 = vmatprep.subr.mxu0 0.0
  %1411 = vmatpush2.msra.mxu0 0.0
  %1412 = vmatprep.subr.mxu0 0.0
  %1413 = vmatpush2.msra.mxu0 0.0
  %1414 = vmatprep.subr.mxu0 0.0
  %1415 = vmatpush2.msra.mxu0 0.0
  %1416 = vmatprep.mubr.f32.mxu0 0.0
  %1417 = vmatmul.mubr.f32.gmra.mxu0 %v1257
  %v1418 = vpop.f32.mrf.mxu0
  %v1419 = vadd.f32 0.0, %v1418
  %v1420 = vpop.f32.mrf.mxu0
  %1421 = vmatprep.mubr.f32.mxu0 0.0
  %1422 = vmatmul.mubr.f32.gmra.mxu0 %v1260
  %v1423 = vpop.f32.mrf.mxu0
  %v1424 = vadd.f32 0.0, %v1423
  %v1425 = vpop.f32.mrf.mxu0
  %1426 = vmatprep.mubr.f32.mxu0 0.0
  %1427 = vmatmul.mubr.f32.gmra.mxu0 %v1263
  %v1428 = vpop.f32.mrf.mxu0
  %v1429 = vadd.f32 0.0, %v1428
  %v1430 = vpop.f32.mrf.mxu0
  %1431 = vmatprep.mubr.f32.mxu0 0.0
  %1432 = vmatmul.mubr.f32.gmra.mxu0 %v1266
  %v1433 = vpop.f32.mrf.mxu0
  %v1434 = vadd.f32 0.0, %v1433
  %v1435 = vpop.f32.mrf.mxu0
  %1436 = vmatprep.mubr.f32.mxu0 0.0
  %1437 = vmatmul.mubr.f32.gmra.mxu0 %v1269
  %v1438 = vpop.f32.mrf.mxu0
  %v1439 = vadd.f32 0.0, %v1438
  %v1440 = vpop.f32.mrf.mxu0
  %1441 = vmatprep.mubr.f32.mxu0 0.0
  %1442 = vmatmul.mubr.f32.gmra.mxu0 %v1272
  %v1443 = vpop.f32.mrf.mxu0
  %v1444 = vadd.f32 0.0, %v1443
  %v1445 = vpop.f32.mrf.mxu0
  %1446 = vmatprep.mubr.f32.mxu0 0.0
  %1447 = vmatmul.mubr.f32.gmra.mxu0 %v1275
  %v1448 = vpop.f32.mrf.mxu0
  %v1449 = vadd.f32 0.0, %v1448
  %v1450 = vpop.f32.mrf.mxu0
  %1451 = vmatprep.mubr.f32.mxu0 0.0
  %1452 = vmatmul.mubr.f32.gmra.mxu0 %v1278
  %v1453 = vpop.f32.mrf.mxu0
  %v1454 = vadd.f32 0.0, %v1453
  %v1455 = vpop.f32.mrf.mxu0
  %1456 = vmatprep.mubr.f32.mxu0 0.0
  %1457 = vmatmul.mubr.f32.gmra.mxu0 %v1281
  %v1458 = vpop.f32.mrf.mxu0
  %v1459 = vadd.f32 0.0, %v1458
  %v1460 = vpop.f32.mrf.mxu0
  %1461 = vmatprep.mubr.f32.mxu0 0.0
  %1462 = vmatmul.mubr.f32.gmra.mxu0 %v1284
  %v1463 = vpop.f32.mrf.mxu0
  %v1464 = vadd.f32 0.0, %v1463
  %v1465 = vpop.f32.mrf.mxu0
  %1466 = vmatprep.mubr.f32.mxu0 0.0
  %1467 = vmatmul.mubr.f32.gmra.mxu0 %v1287
  %v1468 = vpop.f32.mrf.mxu0
  %v1469 = vadd.f32 0.0, %v1468
  %v1470 = vpop.f32.mrf.mxu0
  %1471 = vmatprep.mubr.f32.mxu0 0.0
  %1472 = vmatmul.mubr.f32.gmra.mxu0 %v1290
  %v1473 = vpop.f32.mrf.mxu0
  %v1474 = vadd.f32 0.0, %v1473
  %v1475 = vpop.f32.mrf.mxu0
  %1476 = vmatprep.mubr.f32.mxu0 0.0
  %1477 = vmatmul.mubr.f32.gmra.mxu0 %v1293
  %v1478 = vpop.f32.mrf.mxu0
  %v1479 = vadd.f32 0.0, %v1478
  %v1480 = vpop.f32.mrf.mxu0
  %1481 = vmatprep.mubr.f32.mxu0 0.0
  %1482 = vmatmul.mubr.f32.gmra.mxu0 %v1296
  %v1483 = vpop.f32.mrf.mxu0
  %v1484 = vadd.f32 0.0, %v1483
  %v1485 = vpop.f32.mrf.mxu0
  %1486 = vmatprep.mubr.f32.mxu0 0.0
  %1487 = vmatmul.mubr.f32.gmra.mxu0 %v1299
  %v1488 = vpop.f32.mrf.mxu0
  %v1489 = vadd.f32 0.0, %v1488
  %v1490 = vpop.f32.mrf.mxu0
  %1491 = vmatprep.mubr.f32.mxu0 0.0
  %1492 = vmatmul.mubr.f32.gmra.mxu0 %v1302
  %v1493 = vpop.f32.mrf.mxu0
  %v1494 = vadd.f32 0.0, %v1493
  %v1495 = vpop.f32.mrf.mxu0
  %1496 = vmatprep.mubr.f32.mxu0 0.0
  %1497 = vmatmul.mubr.f32.gmra.mxu0 %v1305
  %v1498 = vpop.f32.mrf.mxu0
  %v1499 = vadd.f32 0.0, %v1498
  %v1500 = vpop.f32.mrf.mxu0
  %1501 = vmatprep.mubr.f32.mxu0 0.0
  %1502 = vmatmul.mubr.f32.gmra.mxu0 %v1308
  %v1503 = vpop.f32.mrf.mxu0
  %v1504 = vadd.f32 0.0, %v1503
  %v1505 = vpop.f32.mrf.mxu0
  %1506 = vmatprep.mubr.f32.mxu0 0.0
  %1507 = vmatmul.mubr.f32.gmra.mxu0 %v1311
  %v1508 = vpop.f32.mrf.mxu0
  %v1509 = vadd.f32 0.0, %v1508
  %v1510 = vpop.f32.mrf.mxu0
  %1511 = vmatprep.mubr.f32.mxu0 0.0
  %1512 = vmatmul.mubr.f32.gmra.mxu0 %v1314
  %v1513 = vpop.f32.mrf.mxu0
  %v1514 = vadd.f32 0.0, %v1513
  %v1515 = vpop.f32.mrf.mxu0
  %1516 = vmatprep.mubr.f32.mxu0 0.0
  %1517 = vmatmul.mubr.f32.gmra.mxu0 %v1317
  %v1518 = vpop.f32.mrf.mxu0
  %v1519 = vadd.f32 0.0, %v1518
  %v1520 = vpop.f32.mrf.mxu0
  %1521 = vmatprep.mubr.f32.mxu0 0.0
  %1522 = vmatmul.mubr.f32.gmra.mxu0 %v1320
  %v1523 = vpop.f32.mrf.mxu0
  %v1524 = vadd.f32 0.0, %v1523
  %v1525 = vpop.f32.mrf.mxu0
  %1526 = vmatprep.mubr.f32.mxu0 0.0
  %1527 = vmatmul.mubr.f32.gmra.mxu0 %v1323
  %v1528 = vpop.f32.mrf.mxu0
  %v1529 = vadd.f32 0.0, %v1528
  %v1530 = vpop.f32.mrf.mxu0
  %1531 = vmatprep.mubr.f32.mxu0 0.0
  %1532 = vmatmul.mubr.f32.gmra.mxu0 %v1326
  %v1533 = vpop.f32.mrf.mxu0
  %v1534 = vadd.f32 0.0, %v1533
  %v1535 = vpop.f32.mrf.mxu0
  %1536 = vmatprep.mubr.f32.mxu0 0.0
  %1537 = vmatmul.mubr.f32.gmra.mxu0 %v1329
  %v1538 = vpop.f32.mrf.mxu0
  %v1539 = vadd.f32 0.0, %v1538
  %v1540 = vpop.f32.mrf.mxu0
  %1541 = vmatprep.mubr.f32.mxu0 0.0
  %1542 = vmatmul.mubr.f32.gmra.mxu0 %v1332
  %v1543 = vpop.f32.mrf.mxu0
  %v1544 = vadd.f32 0.0, %v1543
  %v1545 = vpop.f32.mrf.mxu0
  %1546 = vmatprep.mubr.f32.mxu0 0.0
  %1547 = vmatmul.mubr.f32.gmra.mxu0 %v1335
  %v1548 = vpop.f32.mrf.mxu0
  %v1549 = vadd.f32 0.0, %v1548
  %v1550 = vpop.f32.mrf.mxu0
  %1551 = vmatprep.mubr.f32.mxu0 0.0
  %1552 = vmatmul.mubr.f32.gmra.mxu0 %v1338
  %v1553 = vpop.f32.mrf.mxu0
  %v1554 = vadd.f32 0.0, %v1553
  %v1555 = vpop.f32.mrf.mxu0
  %1556 = vmatprep.mubr.f32.mxu0 0.0
  %1557 = vmatmul.mubr.f32.gmra.mxu0 %v1341
  %v1558 = vpop.f32.mrf.mxu0
  %v1559 = vadd.f32 0.0, %v1558
  %v1560 = vpop.f32.mrf.mxu0
  %1561 = vmatprep.mubr.f32.mxu0 0.0
  %1562 = vmatmul.mubr.f32.gmra.mxu0 %v1344
  %v1563 = vpop.f32.mrf.mxu0
  %v1564 = vadd.f32 0.0, %v1563
  %v1565 = vpop.f32.mrf.mxu0
  %1566 = vmatprep.mubr.f32.mxu0 0.0
  %1567 = vmatmul.mubr.f32.gmra.mxu0 %v1347
  %v1568 = vpop.f32.mrf.mxu0
  %v1569 = vadd.f32 0.0, %v1568
  %v1570 = vpop.f32.mrf.mxu0
  %1571 = vmatprep.mubr.f32.mxu0 0.0
  %1572 = vmatmul.mubr.f32.gmra.mxu0 %v1350
  %v1573 = vpop.f32.mrf.mxu0
  %v1574 = vadd.f32 0.0, %v1573
  %v1575 = vpop.f32.mrf.mxu0
  %1576 = vdwg.mxu0
  %v1577 = vadd.f32 %v1061, %v1419
  %v1578 = vadd.f32 %v1066, %v1424
  %v1579 = vadd.f32 %v1071, %v1429
  %v1580 = vadd.f32 %v1076, %v1434
  %v1581 = vadd.f32 %v1081, %v1439
  %v1582 = vadd.f32 %v1086, %v1444
  %v1583 = vadd.f32 %v1091, %v1449
  %v1584 = vadd.f32 %v1096, %v1454
  %v1585 = vadd.f32 %v1101, %v1459
  %v1586 = vadd.f32 %v1106, %v1464
  %v1587 = vadd.f32 %v1111, %v1469
  %v1588 = vadd.f32 %v1116, %v1474
  %v1589 = vadd.f32 %v1121, %v1479
  %v1590 = vadd.f32 %v1126, %v1484
  %v1591 = vadd.f32 %v1131, %v1489
  %v1592 = vadd.f32 %v1136, %v1494
  %v1593 = vadd.f32 %v1141, %v1499
  %v1594 = vadd.f32 %v1146, %v1504
  %v1595 = vadd.f32 %v1151, %v1509
  %v1596 = vadd.f32 %v1156, %v1514
  %v1597 = vadd.f32 %v1161, %v1519
  %v1598 = vadd.f32 %v1166, %v1524
  %v1599 = vadd.f32 %v1171, %v1529
  %v1600 = vadd.f32 %v1176, %v1534
  %v1601 = vadd.f32 %v1181, %v1539
  %v1602 = vadd.f32 %v1186, %v1544
  %v1603 = vadd.f32 %v1191, %v1549
  %v1604 = vadd.f32 %v1196, %v1554
  %v1605 = vadd.f32 %v1201, %v1559
  %v1606 = vadd.f32 %v1206, %v1564
  %v1607 = vadd.f32 %v1211, %v1569
  %v1608 = vadd.f32 %v1216, %v1574
  %v1609 = vld [vmem:[#allocation2 + $0x3] sm:$0xff]
  %v1610 = vld [vmem:[#allocation2 + $0xb] sm:$0xff]
  %v1611 = vld [vmem:[#allocation2 + $0x1b] sm:$0xff]
  %v1612 = vld [vmem:[#allocation2 + $0x23] sm:$0xff]
  %v1613 = vld [vmem:[#allocation2 + $0x33] sm:$0xff]
  %v1614 = vld [vmem:[#allocation2 + $0x3b] sm:$0xff]
  %v1615 = vld [vmem:[#allocation2 + $0x4b] sm:$0xff]
  %v1616 = vld [vmem:[#allocation2 + $0x53] sm:$0xff]
  %v1617 = vld [vmem:[#allocation2 + $0x63] sm:$0xff]
  %v1618 = vld [vmem:[#allocation2 + $0x6b] sm:$0xff]
  %v1619 = vld [vmem:[#allocation2 + $0x7b] sm:$0xff]
  %v1620 = vld [vmem:[#allocation2 + $0x83] sm:$0xff]
  %v1621 = vld [vmem:[#allocation2 + $0x93] sm:$0xff]
  %v1622 = vld [vmem:[#allocation2 + $0x9b] sm:$0xff]
  %v1623 = vld [vmem:[#allocation2 + $0xab] sm:$0xff]
  %v1624 = vld [vmem:[#allocation2 + $0xb3] sm:$0xff]
  %v1625 = vld [vmem:[#allocation2 + $0xc3] sm:$0xff]
  %v1626 = vld [vmem:[#allocation2 + $0xcb] sm:$0xff]
  %v1627 = vld [vmem:[#allocation2 + $0xdb] sm:$0xff]
  %v1628 = vld [vmem:[#allocation2 + $0xe3] sm:$0xff]
  %v1629 = vld [vmem:[#allocation2 + $0xf3] sm:$0xff]
  %v1630 = vld [vmem:[#allocation2 + $0xfb] sm:$0xff]
  %v1631 = vld [vmem:[#allocation2 + $0x10b] sm:$0xff]
  %v1632 = vld [vmem:[#allocation2 + $0x113] sm:$0xff]
  %v1633 = vld [vmem:[#allocation2 + $0x123] sm:$0xff]
  %v1634 = vld [vmem:[#allocation2 + $0x12b] sm:$0xff]
  %v1635 = vld [vmem:[#allocation2 + $0x13b] sm:$0xff]
  %v1636 = vld [vmem:[#allocation2 + $0x143] sm:$0xff]
  %v1637 = vld [vmem:[#allocation2 + $0x153] sm:$0xff]
  %v1638 = vld [vmem:[#allocation2 + $0x15b] sm:$0xff]
  %v1639 = vld [vmem:[#allocation2 + $0x16b] sm:$0xff]
  %v1640 = vld [vmem:[#allocation2 + $0x173] sm:$0xff]
  %s1641 = scalar_lea.vmem %s3, 96
  %v1642 = vld [vmem:[%s1641] sm:$0xff]
  %v1643 = vld [vmem:[%s1641 + $0x8] sm:$0xff]
  %v1644 = vld [vmem:[%s1641 + $0x10] sm:$0xff]
  %v1645 = vld [vmem:[%s1641 + $0x18] sm:$0xff]
  %v1647 = vsel %vm471, %v1609, 0
  %v1650 = vsel %vm471, %v1610, 0
  %v1653 = vsel %vm471, %v1611, 0
  %v1656 = vsel %vm471, %v1612, 0
  %v1659 = vsel %vm471, %v1613, 0
  %v1662 = vsel %vm471, %v1614, 0
  %v1665 = vsel %vm471, %v1615, 0
  %v1668 = vsel %vm471, %v1616, 0
  %v1671 = vsel %vm471, %v1617, 0
  %v1674 = vsel %vm471, %v1618, 0
  %v1677 = vsel %vm471, %v1619, 0
  %v1680 = vsel %vm471, %v1620, 0
  %v1683 = vsel %vm471, %v1621, 0
  %v1686 = vsel %vm471, %v1622, 0
  %v1689 = vsel %vm471, %v1623, 0
  %v1692 = vsel %vm471, %v1624, 0
  %v1695 = vsel %vm471, %v1625, 0
  %v1698 = vsel %vm471, %v1626, 0
  %v1701 = vsel %vm471, %v1627, 0
  %v1704 = vsel %vm471, %v1628, 0
  %v1707 = vsel %vm471, %v1629, 0
  %v1710 = vsel %vm471, %v1630, 0
  %v1713 = vsel %vm471, %v1631, 0
  %v1716 = vsel %vm471, %v1632, 0
  %v1719 = vsel %vm471, %v1633, 0
  %v1722 = vsel %vm471, %v1634, 0
  %v1725 = vsel %vm471, %v1635, 0
  %v1728 = vsel %vm471, %v1636, 0
  %v1731 = vsel %vm471, %v1637, 0
  %v1734 = vsel %vm471, %v1638, 0
  %v1737 = vsel %vm471, %v1639, 0
  %v1740 = vsel %vm471, %v1640, 0
  %1742 = vmatprep.subr.mxu0 0.0
  %1743 = vmatpush1.msra.mxu0 0.0
  %1744 = vmatprep.subr.mxu0 0.0
  %1745 = vmatpush1.msra.mxu0 0.0
  %1746 = vmatprep.subr.mxu0 0.0
  %1747 = vmatpush1.msra.mxu0 0.0
  %1748 = vmatprep.subr.mxu0 0.0
  %1749 = vmatpush1.msra.mxu0 0.0
  %1750 = vmatprep.subr.mxu0 0.0
  %1751 = vmatpush1.msra.mxu0 0.0
  %1752 = vmatprep.subr.mxu0 0.0
  %1753 = vmatpush1.msra.mxu0 0.0
  %1754 = vmatprep.subr.mxu0 0.0
  %1755 = vmatpush1.msra.mxu0 0.0
  %1756 = vmatprep.subr.mxu0 0.0
  %1757 = vmatpush1.msra.mxu0 0.0
  %1758 = vmatprep.subr.mxu0 0.0
  %1759 = vmatpush1.msra.mxu0 0.0
  %1760 = vmatprep.subr.mxu0 0.0
  %1761 = vmatpush1.msra.mxu0 0.0
  %1762 = vmatprep.subr.mxu0 0.0
  %1763 = vmatpush1.msra.mxu0 0.0
  %1764 = vmatprep.subr.mxu0 0.0
  %1765 = vmatpush1.msra.mxu0 0.0
  %1766 = vmatprep.subr.mxu0 0.0
  %1767 = vmatpush1.msra.mxu0 %v1645
  %1768 = vmatprep.subr.mxu0 0.0
  %1769 = vmatpush1.msra.mxu0 %v1644
  %1770 = vmatprep.subr.mxu0 0.0
  %1771 = vmatpush1.msra.mxu0 %v1643
  %1772 = vmatprep.subr.mxu0 0.0
  %1773 = vmatpush1.msra.mxu0 %v1642
  %1774 = vmatprep.subr.mxu0 0.0
  %1775 = vmatpush2.msra.mxu0 0.0
  %1776 = vmatprep.subr.mxu0 0.0
  %1777 = vmatpush2.msra.mxu0 0.0
  %1778 = vmatprep.subr.mxu0 0.0
  %1779 = vmatpush2.msra.mxu0 0.0
  %1780 = vmatprep.subr.mxu0 0.0
  %1781 = vmatpush2.msra.mxu0 0.0
  %1782 = vmatprep.subr.mxu0 0.0
  %1783 = vmatpush2.msra.mxu0 0.0
  %1784 = vmatprep.subr.mxu0 0.0
  %1785 = vmatpush2.msra.mxu0 0.0
  %1786 = vmatprep.subr.mxu0 0.0
  %1787 = vmatpush2.msra.mxu0 0.0
  %1788 = vmatprep.subr.mxu0 0.0
  %1789 = vmatpush2.msra.mxu0 0.0
  %1790 = vmatprep.subr.mxu0 0.0
  %1791 = vmatpush2.msra.mxu0 0.0
  %1792 = vmatprep.subr.mxu0 0.0
  %1793 = vmatpush2.msra.mxu0 0.0
  %1794 = vmatprep.subr.mxu0 0.0
  %1795 = vmatpush2.msra.mxu0 0.0
  %1796 = vmatprep.subr.mxu0 0.0
  %1797 = vmatpush2.msra.mxu0 0.0
  %1798 = vmatprep.subr.mxu0 0.0
  %1799 = vmatpush2.msra.mxu0 0.0
  %1800 = vmatprep.subr.mxu0 0.0
  %1801 = vmatpush2.msra.mxu0 0.0
  %1802 = vmatprep.subr.mxu0 0.0
  %1803 = vmatpush2.msra.mxu0 0.0
  %1804 = vmatprep.subr.mxu0 0.0
  %1805 = vmatpush2.msra.mxu0 0.0
  %1806 = vmatprep.mubr.f32.mxu0 0.0
  %1807 = vmatmul.mubr.f32.gmra.mxu0 %v1647
  %v1808 = vpop.f32.mrf.mxu0
  %v1809 = vadd.f32 0.0, %v1808
  %v1810 = vpop.f32.mrf.mxu0
  %1811 = vmatprep.mubr.f32.mxu0 0.0
  %1812 = vmatmul.mubr.f32.gmra.mxu0 %v1650
  %v1813 = vpop.f32.mrf.mxu0
  %v1814 = vadd.f32 0.0, %v1813
  %v1815 = vpop.f32.mrf.mxu0
  %1816 = vmatprep.mubr.f32.mxu0 0.0
  %1817 = vmatmul.mubr.f32.gmra.mxu0 %v1653
  %v1818 = vpop.f32.mrf.mxu0
  %v1819 = vadd.f32 0.0, %v1818
  %v1820 = vpop.f32.mrf.mxu0
  %1821 = vmatprep.mubr.f32.mxu0 0.0
  %1822 = vmatmul.mubr.f32.gmra.mxu0 %v1656
  %v1823 = vpop.f32.mrf.mxu0
  %v1824 = vadd.f32 0.0, %v1823
  %v1825 = vpop.f32.mrf.mxu0
  %1826 = vmatprep.mubr.f32.mxu0 0.0
  %1827 = vmatmul.mubr.f32.gmra.mxu0 %v1659
  %v1828 = vpop.f32.mrf.mxu0
  %v1829 = vadd.f32 0.0, %v1828
  %v1830 = vpop.f32.mrf.mxu0
  %1831 = vmatprep.mubr.f32.mxu0 0.0
  %1832 = vmatmul.mubr.f32.gmra.mxu0 %v1662
  %v1833 = vpop.f32.mrf.mxu0
  %v1834 = vadd.f32 0.0, %v1833
  %v1835 = vpop.f32.mrf.mxu0
  %1836 = vmatprep.mubr.f32.mxu0 0.0
  %1837 = vmatmul.mubr.f32.gmra.mxu0 %v1665
  %v1838 = vpop.f32.mrf.mxu0
  %v1839 = vadd.f32 0.0, %v1838
  %v1840 = vpop.f32.mrf.mxu0
  %1841 = vmatprep.mubr.f32.mxu0 0.0
  %1842 = vmatmul.mubr.f32.gmra.mxu0 %v1668
  %v1843 = vpop.f32.mrf.mxu0
  %v1844 = vadd.f32 0.0, %v1843
  %v1845 = vpop.f32.mrf.mxu0
  %1846 = vmatprep.mubr.f32.mxu0 0.0
  %1847 = vmatmul.mubr.f32.gmra.mxu0 %v1671
  %v1848 = vpop.f32.mrf.mxu0
  %v1849 = vadd.f32 0.0, %v1848
  %v1850 = vpop.f32.mrf.mxu0
  %1851 = vmatprep.mubr.f32.mxu0 0.0
  %1852 = vmatmul.mubr.f32.gmra.mxu0 %v1674
  %v1853 = vpop.f32.mrf.mxu0
  %v1854 = vadd.f32 0.0, %v1853
  %v1855 = vpop.f32.mrf.mxu0
  %1856 = vmatprep.mubr.f32.mxu0 0.0
  %1857 = vmatmul.mubr.f32.gmra.mxu0 %v1677
  %v1858 = vpop.f32.mrf.mxu0
  %v1859 = vadd.f32 0.0, %v1858
  %v1860 = vpop.f32.mrf.mxu0
  %1861 = vmatprep.mubr.f32.mxu0 0.0
  %1862 = vmatmul.mubr.f32.gmra.mxu0 %v1680
  %v1863 = vpop.f32.mrf.mxu0
  %v1864 = vadd.f32 0.0, %v1863
  %v1865 = vpop.f32.mrf.mxu0
  %1866 = vmatprep.mubr.f32.mxu0 0.0
  %1867 = vmatmul.mubr.f32.gmra.mxu0 %v1683
  %v1868 = vpop.f32.mrf.mxu0
  %v1869 = vadd.f32 0.0, %v1868
  %v1870 = vpop.f32.mrf.mxu0
  %1871 = vmatprep.mubr.f32.mxu0 0.0
  %1872 = vmatmul.mubr.f32.gmra.mxu0 %v1686
  %v1873 = vpop.f32.mrf.mxu0
  %v1874 = vadd.f32 0.0, %v1873
  %v1875 = vpop.f32.mrf.mxu0
  %1876 = vmatprep.mubr.f32.mxu0 0.0
  %1877 = vmatmul.mubr.f32.gmra.mxu0 %v1689
  %v1878 = vpop.f32.mrf.mxu0
  %v1879 = vadd.f32 0.0, %v1878
  %v1880 = vpop.f32.mrf.mxu0
  %1881 = vmatprep.mubr.f32.mxu0 0.0
  %1882 = vmatmul.mubr.f32.gmra.mxu0 %v1692
  %v1883 = vpop.f32.mrf.mxu0
  %v1884 = vadd.f32 0.0, %v1883
  %v1885 = vpop.f32.mrf.mxu0
  %1886 = vmatprep.mubr.f32.mxu0 0.0
  %1887 = vmatmul.mubr.f32.gmra.mxu0 %v1695
  %v1888 = vpop.f32.mrf.mxu0
  %v1889 = vadd.f32 0.0, %v1888
  %v1890 = vpop.f32.mrf.mxu0
  %1891 = vmatprep.mubr.f32.mxu0 0.0
  %1892 = vmatmul.mubr.f32.gmra.mxu0 %v1698
  %v1893 = vpop.f32.mrf.mxu0
  %v1894 = vadd.f32 0.0, %v1893
  %v1895 = vpop.f32.mrf.mxu0
  %1896 = vmatprep.mubr.f32.mxu0 0.0
  %1897 = vmatmul.mubr.f32.gmra.mxu0 %v1701
  %v1898 = vpop.f32.mrf.mxu0
  %v1899 = vadd.f32 0.0, %v1898
  %v1900 = vpop.f32.mrf.mxu0
  %1901 = vmatprep.mubr.f32.mxu0 0.0
  %1902 = vmatmul.mubr.f32.gmra.mxu0 %v1704
  %v1903 = vpop.f32.mrf.mxu0
  %v1904 = vadd.f32 0.0, %v1903
  %v1905 = vpop.f32.mrf.mxu0
  %1906 = vmatprep.mubr.f32.mxu0 0.0
  %1907 = vmatmul.mubr.f32.gmra.mxu0 %v1707
  %v1908 = vpop.f32.mrf.mxu0
  %v1909 = vadd.f32 0.0, %v1908
  %v1910 = vpop.f32.mrf.mxu0
  %1911 = vmatprep.mubr.f32.mxu0 0.0
  %1912 = vmatmul.mubr.f32.gmra.mxu0 %v1710
  %v1913 = vpop.f32.mrf.mxu0
  %v1914 = vadd.f32 0.0, %v1913
  %v1915 = vpop.f32.mrf.mxu0
  %1916 = vmatprep.mubr.f32.mxu0 0.0
  %1917 = vmatmul.mubr.f32.gmra.mxu0 %v1713
  %v1918 = vpop.f32.mrf.mxu0
  %v1919 = vadd.f32 0.0, %v1918
  %v1920 = vpop.f32.mrf.mxu0
  %1921 = vmatprep.mubr.f32.mxu0 0.0
  %1922 = vmatmul.mubr.f32.gmra.mxu0 %v1716
  %v1923 = vpop.f32.mrf.mxu0
  %v1924 = vadd.f32 0.0, %v1923
  %v1925 = vpop.f32.mrf.mxu0
  %1926 = vmatprep.mubr.f32.mxu0 0.0
  %1927 = vmatmul.mubr.f32.gmra.mxu0 %v1719
  %v1928 = vpop.f32.mrf.mxu0
  %v1929 = vadd.f32 0.0, %v1928
  %v1930 = vpop.f32.mrf.mxu0
  %1931 = vmatprep.mubr.f32.mxu0 0.0
  %1932 = vmatmul.mubr.f32.gmra.mxu0 %v1722
  %v1933 = vpop.f32.mrf.mxu0
  %v1934 = vadd.f32 0.0, %v1933
  %v1935 = vpop.f32.mrf.mxu0
  %1936 = vmatprep.mubr.f32.mxu0 0.0
  %1937 = vmatmul.mubr.f32.gmra.mxu0 %v1725
  %v1938 = vpop.f32.mrf.mxu0
  %v1939 = vadd.f32 0.0, %v1938
  %v1940 = vpop.f32.mrf.mxu0
  %1941 = vmatprep.mubr.f32.mxu0 0.0
  %1942 = vmatmul.mubr.f32.gmra.mxu0 %v1728
  %v1943 = vpop.f32.mrf.mxu0
  %v1944 = vadd.f32 0.0, %v1943
  %v1945 = vpop.f32.mrf.mxu0
  %1946 = vmatprep.mubr.f32.mxu0 0.0
  %1947 = vmatmul.mubr.f32.gmra.mxu0 %v1731
  %v1948 = vpop.f32.mrf.mxu0
  %v1949 = vadd.f32 0.0, %v1948
  %v1950 = vpop.f32.mrf.mxu0
  %1951 = vmatprep.mubr.f32.mxu0 0.0
  %1952 = vmatmul.mubr.f32.gmra.mxu0 %v1734
  %v1953 = vpop.f32.mrf.mxu0
  %v1954 = vadd.f32 0.0, %v1953
  %v1955 = vpop.f32.mrf.mxu0
  %1956 = vmatprep.mubr.f32.mxu0 0.0
  %1957 = vmatmul.mubr.f32.gmra.mxu0 %v1737
  %v1958 = vpop.f32.mrf.mxu0
  %v1959 = vadd.f32 0.0, %v1958
  %v1960 = vpop.f32.mrf.mxu0
  %1961 = vmatprep.mubr.f32.mxu0 0.0
  %1962 = vmatmul.mubr.f32.gmra.mxu0 %v1740
  %v1963 = vpop.f32.mrf.mxu0
  %v1964 = vadd.f32 0.0, %v1963
  %v1965 = vpop.f32.mrf.mxu0
  %1966 = vdwg.mxu0
  %v1967 = vadd.f32 %v1577, %v1809
  %v1968 = vadd.f32 %v1578, %v1814
  %v1969 = vadd.f32 %v1579, %v1819
  %v1970 = vadd.f32 %v1580, %v1824
  %v1971 = vadd.f32 %v1581, %v1829
  %v1972 = vadd.f32 %v1582, %v1834
  %v1973 = vadd.f32 %v1583, %v1839
  %v1974 = vadd.f32 %v1584, %v1844
  %v1975 = vadd.f32 %v1585, %v1849
  %v1976 = vadd.f32 %v1586, %v1854
  %v1977 = vadd.f32 %v1587, %v1859
  %v1978 = vadd.f32 %v1588, %v1864
  %v1979 = vadd.f32 %v1589, %v1869
  %v1980 = vadd.f32 %v1590, %v1874
  %v1981 = vadd.f32 %v1591, %v1879
  %v1982 = vadd.f32 %v1592, %v1884
  %v1983 = vadd.f32 %v1593, %v1889
  %v1984 = vadd.f32 %v1594, %v1894
  %v1985 = vadd.f32 %v1595, %v1899
  %v1986 = vadd.f32 %v1596, %v1904
  %v1987 = vadd.f32 %v1597, %v1909
  %v1988 = vadd.f32 %v1598, %v1914
  %v1989 = vadd.f32 %v1599, %v1919
  %v1990 = vadd.f32 %v1600, %v1924
  %v1991 = vadd.f32 %v1601, %v1929
  %v1992 = vadd.f32 %v1602, %v1934
  %v1993 = vadd.f32 %v1603, %v1939
  %v1994 = vadd.f32 %v1604, %v1944
  %v1995 = vadd.f32 %v1605, %v1949
  %v1996 = vadd.f32 %v1606, %v1954
  %v1997 = vadd.f32 %v1607, %v1959
  %v1998 = vadd.f32 %v1608, %v1964
  %v1999 = vld [vmem:[#allocation2 + $0x4] sm:$0xff]
  %v2000 = vld [vmem:[#allocation2 + $0xc] sm:$0xff]
  %v2001 = vld [vmem:[#allocation2 + $0x1c] sm:$0xff]
  %v2002 = vld [vmem:[#allocation2 + $0x24] sm:$0xff]
  %v2003 = vld [vmem:[#allocation2 + $0x34] sm:$0xff]
  %v2004 = vld [vmem:[#allocation2 + $0x3c] sm:$0xff]
  %v2005 = vld [vmem:[#allocation2 + $0x4c] sm:$0xff]
  %v2006 = vld [vmem:[#allocation2 + $0x54] sm:$0xff]
  %v2007 = vld [vmem:[#allocation2 + $0x64] sm:$0xff]
  %v2008 = vld [vmem:[#allocation2 + $0x6c] sm:$0xff]
  %v2009 = vld [vmem:[#allocation2 + $0x7c] sm:$0xff]
  %v2010 = vld [vmem:[#allocation2 + $0x84] sm:$0xff]
  %v2011 = vld [vmem:[#allocation2 + $0x94] sm:$0xff]
  %v2012 = vld [vmem:[#allocation2 + $0x9c] sm:$0xff]
  %v2013 = vld [vmem:[#allocation2 + $0xac] sm:$0xff]
  %v2014 = vld [vmem:[#allocation2 + $0xb4] sm:$0xff]
  %v2015 = vld [vmem:[#allocation2 + $0xc4] sm:$0xff]
  %v2016 = vld [vmem:[#allocation2 + $0xcc] sm:$0xff]
  %v2017 = vld [vmem:[#allocation2 + $0xdc] sm:$0xff]
  %v2018 = vld [vmem:[#allocation2 + $0xe4] sm:$0xff]
  %v2019 = vld [vmem:[#allocation2 + $0xf4] sm:$0xff]
  %v2020 = vld [vmem:[#allocation2 + $0xfc] sm:$0xff]
  %v2021 = vld [vmem:[#allocation2 + $0x10c] sm:$0xff]
  %v2022 = vld [vmem:[#allocation2 + $0x114] sm:$0xff]
  %v2023 = vld [vmem:[#allocation2 + $0x124] sm:$0xff]
  %v2024 = vld [vmem:[#allocation2 + $0x12c] sm:$0xff]
  %v2025 = vld [vmem:[#allocation2 + $0x13c] sm:$0xff]
  %v2026 = vld [vmem:[#allocation2 + $0x144] sm:$0xff]
  %v2027 = vld [vmem:[#allocation2 + $0x154] sm:$0xff]
  %v2028 = vld [vmem:[#allocation2 + $0x15c] sm:$0xff]
  %v2029 = vld [vmem:[#allocation2 + $0x16c] sm:$0xff]
  %v2030 = vld [vmem:[#allocation2 + $0x174] sm:$0xff]
  %s2031 = scalar_lea.vmem %s3, 128
  %v2032 = vld [vmem:[%s2031] sm:$0xff]
  %v2033 = vld [vmem:[%s2031 + $0x8] sm:$0xff]
  %v2034 = vld [vmem:[%s2031 + $0x10] sm:$0xff]
  %v2035 = vld [vmem:[%s2031 + $0x18] sm:$0xff]
  %v2037 = vsel %vm471, %v1999, 0
  %v2040 = vsel %vm471, %v2000, 0
  %v2043 = vsel %vm471, %v2001, 0
  %v2046 = vsel %vm471, %v2002, 0
  %v2049 = vsel %vm471, %v2003, 0
  %v2052 = vsel %vm471, %v2004, 0
  %v2055 = vsel %vm471, %v2005, 0
  %v2058 = vsel %vm471, %v2006, 0
  %v2061 = vsel %vm471, %v2007, 0
  %v2064 = vsel %vm471, %v2008, 0
  %v2067 = vsel %vm471, %v2009, 0
  %v2070 = vsel %vm471, %v2010, 0
  %v2073 = vsel %vm471, %v2011, 0
  %v2076 = vsel %vm471, %v2012, 0
  %v2079 = vsel %vm471, %v2013, 0
  %v2082 = vsel %vm471, %v2014, 0
  %v2085 = vsel %vm471, %v2015, 0
  %v2088 = vsel %vm471, %v2016, 0
  %v2091 = vsel %vm471, %v2017, 0
  %v2094 = vsel %vm471, %v2018, 0
  %v2097 = vsel %vm471, %v2019, 0
  %v2100 = vsel %vm471, %v2020, 0
  %v2103 = vsel %vm471, %v2021, 0
  %v2106 = vsel %vm471, %v2022, 0
  %v2109 = vsel %vm471, %v2023, 0
  %v2112 = vsel %vm471, %v2024, 0
  %v2115 = vsel %vm471, %v2025, 0
  %v2118 = vsel %vm471, %v2026, 0
  %v2121 = vsel %vm471, %v2027, 0
  %v2124 = vsel %vm471, %v2028, 0
  %v2127 = vsel %vm471, %v2029, 0
  %v2130 = vsel %vm471, %v2030, 0
  %2132 = vmatprep.subr.mxu0 0.0
  %2133 = vmatpush1.msra.mxu0 0.0
  %2134 = vmatprep.subr.mxu0 0.0
  %2135 = vmatpush1.msra.mxu0 0.0
  %2136 = vmatprep.subr.mxu0 0.0
  %2137 = vmatpush1.msra.mxu0 0.0
  %2138 = vmatprep.subr.mxu0 0.0
  %2139 = vmatpush1.msra.mxu0 0.0
  %2140 = vmatprep.subr.mxu0 0.0
  %2141 = vmatpush1.msra.mxu0 0.0
  %2142 = vmatprep.subr.mxu0 0.0
  %2143 = vmatpush1.msra.mxu0 0.0
  %2144 = vmatprep.subr.mxu0 0.0
  %2145 = vmatpush1.msra.mxu0 0.0
  %2146 = vmatprep.subr.mxu0 0.0
  %2147 = vmatpush1.msra.mxu0 0.0
  %2148 = vmatprep.subr.mxu0 0.0
  %2149 = vmatpush1.msra.mxu0 0.0
  %2150 = vmatprep.subr.mxu0 0.0
  %2151 = vmatpush1.msra.mxu0 0.0
  %2152 = vmatprep.subr.mxu0 0.0
  %2153 = vmatpush1.msra.mxu0 0.0
  %2154 = vmatprep.subr.mxu0 0.0
  %2155 = vmatpush1.msra.mxu0 0.0
  %2156 = vmatprep.subr.mxu0 0.0
  %2157 = vmatpush1.msra.mxu0 %v2035
  %2158 = vmatprep.subr.mxu0 0.0
  %2159 = vmatpush1.msra.mxu0 %v2034
  %2160 = vmatprep.subr.mxu0 0.0
  %2161 = vmatpush1.msra.mxu0 %v2033
  %2162 = vmatprep.subr.mxu0 0.0
  %2163 = vmatpush1.msra.mxu0 %v2032
  %2164 = vmatprep.subr.mxu0 0.0
  %2165 = vmatpush2.msra.mxu0 0.0
  %2166 = vmatprep.subr.mxu0 0.0
  %2167 = vmatpush2.msra.mxu0 0.0
  %2168 = vmatprep.subr.mxu0 0.0
  %2169 = vmatpush2.msra.mxu0 0.0
  %2170 = vmatprep.subr.mxu0 0.0
  %2171 = vmatpush2.msra.mxu0 0.0
  %2172 = vmatprep.subr.mxu0 0.0
  %2173 = vmatpush2.msra.mxu0 0.0
  %2174 = vmatprep.subr.mxu0 0.0
  %2175 = vmatpush2.msra.mxu0 0.0
  %2176 = vmatprep.subr.mxu0 0.0
  %2177 = vmatpush2.msra.mxu0 0.0
  %2178 = vmatprep.subr.mxu0 0.0
  %2179 = vmatpush2.msra.mxu0 0.0
  %2180 = vmatprep.subr.mxu0 0.0
  %2181 = vmatpush2.msra.mxu0 0.0
  %2182 = vmatprep.subr.mxu0 0.0
  %2183 = vmatpush2.msra.mxu0 0.0
  %2184 = vmatprep.subr.mxu0 0.0
  %2185 = vmatpush2.msra.mxu0 0.0
  %2186 = vmatprep.subr.mxu0 0.0
  %2187 = vmatpush2.msra.mxu0 0.0
  %2188 = vmatprep.subr.mxu0 0.0
  %2189 = vmatpush2.msra.mxu0 0.0
  %2190 = vmatprep.subr.mxu0 0.0
  %2191 = vmatpush2.msra.mxu0 0.0
  %2192 = vmatprep.subr.mxu0 0.0
  %2193 = vmatpush2.msra.mxu0 0.0
  %2194 = vmatprep.subr.mxu0 0.0
  %2195 = vmatpush2.msra.mxu0 0.0
  %2196 = vmatprep.mubr.f32.mxu0 0.0
  %2197 = vmatmul.mubr.f32.gmra.mxu0 %v2037
  %v2198 = vpop.f32.mrf.mxu0
  %v2199 = vadd.f32 0.0, %v2198
  %v2200 = vpop.f32.mrf.mxu0
  %2201 = vmatprep.mubr.f32.mxu0 0.0
  %2202 = vmatmul.mubr.f32.gmra.mxu0 %v2040
  %v2203 = vpop.f32.mrf.mxu0
  %v2204 = vadd.f32 0.0, %v2203
  %v2205 = vpop.f32.mrf.mxu0
  %2206 = vmatprep.mubr.f32.mxu0 0.0
  %2207 = vmatmul.mubr.f32.gmra.mxu0 %v2043
  %v2208 = vpop.f32.mrf.mxu0
  %v2209 = vadd.f32 0.0, %v2208
  %v2210 = vpop.f32.mrf.mxu0
  %2211 = vmatprep.mubr.f32.mxu0 0.0
  %2212 = vmatmul.mubr.f32.gmra.mxu0 %v2046
  %v2213 = vpop.f32.mrf.mxu0
  %v2214 = vadd.f32 0.0, %v2213
  %v2215 = vpop.f32.mrf.mxu0
  %2216 = vmatprep.mubr.f32.mxu0 0.0
  %2217 = vmatmul.mubr.f32.gmra.mxu0 %v2049
  %v2218 = vpop.f32.mrf.mxu0
  %v2219 = vadd.f32 0.0, %v2218
  %v2220 = vpop.f32.mrf.mxu0
  %2221 = vmatprep.mubr.f32.mxu0 0.0
  %2222 = vmatmul.mubr.f32.gmra.mxu0 %v2052
  %v2223 = vpop.f32.mrf.mxu0
  %v2224 = vadd.f32 0.0, %v2223
  %v2225 = vpop.f32.mrf.mxu0
  %2226 = vmatprep.mubr.f32.mxu0 0.0
  %2227 = vmatmul.mubr.f32.gmra.mxu0 %v2055
  %v2228 = vpop.f32.mrf.mxu0
  %v2229 = vadd.f32 0.0, %v2228
  %v2230 = vpop.f32.mrf.mxu0
  %2231 = vmatprep.mubr.f32.mxu0 0.0
  %2232 = vmatmul.mubr.f32.gmra.mxu0 %v2058
  %v2233 = vpop.f32.mrf.mxu0
  %v2234 = vadd.f32 0.0, %v2233
  %v2235 = vpop.f32.mrf.mxu0
  %2236 = vmatprep.mubr.f32.mxu0 0.0
  %2237 = vmatmul.mubr.f32.gmra.mxu0 %v2061
  %v2238 = vpop.f32.mrf.mxu0
  %v2239 = vadd.f32 0.0, %v2238
  %v2240 = vpop.f32.mrf.mxu0
  %2241 = vmatprep.mubr.f32.mxu0 0.0
  %2242 = vmatmul.mubr.f32.gmra.mxu0 %v2064
  %v2243 = vpop.f32.mrf.mxu0
  %v2244 = vadd.f32 0.0, %v2243
  %v2245 = vpop.f32.mrf.mxu0
  %2246 = vmatprep.mubr.f32.mxu0 0.0
  %2247 = vmatmul.mubr.f32.gmra.mxu0 %v2067
  %v2248 = vpop.f32.mrf.mxu0
  %v2249 = vadd.f32 0.0, %v2248
  %v2250 = vpop.f32.mrf.mxu0
  %2251 = vmatprep.mubr.f32.mxu0 0.0
  %2252 = vmatmul.mubr.f32.gmra.mxu0 %v2070
  %v2253 = vpop.f32.mrf.mxu0
  %v2254 = vadd.f32 0.0, %v2253
  %v2255 = vpop.f32.mrf.mxu0
  %2256 = vmatprep.mubr.f32.mxu0 0.0
  %2257 = vmatmul.mubr.f32.gmra.mxu0 %v2073
  %v2258 = vpop.f32.mrf.mxu0
  %v2259 = vadd.f32 0.0, %v2258
  %v2260 = vpop.f32.mrf.mxu0
  %2261 = vmatprep.mubr.f32.mxu0 0.0
  %2262 = vmatmul.mubr.f32.gmra.mxu0 %v2076
  %v2263 = vpop.f32.mrf.mxu0
  %v2264 = vadd.f32 0.0, %v2263
  %v2265 = vpop.f32.mrf.mxu0
  %2266 = vmatprep.mubr.f32.mxu0 0.0
  %2267 = vmatmul.mubr.f32.gmra.mxu0 %v2079
  %v2268 = vpop.f32.mrf.mxu0
  %v2269 = vadd.f32 0.0, %v2268
  %v2270 = vpop.f32.mrf.mxu0
  %2271 = vmatprep.mubr.f32.mxu0 0.0
  %2272 = vmatmul.mubr.f32.gmra.mxu0 %v2082
  %v2273 = vpop.f32.mrf.mxu0
  %v2274 = vadd.f32 0.0, %v2273
  %v2275 = vpop.f32.mrf.mxu0
  %2276 = vmatprep.mubr.f32.mxu0 0.0
  %2277 = vmatmul.mubr.f32.gmra.mxu0 %v2085
  %v2278 = vpop.f32.mrf.mxu0
  %v2279 = vadd.f32 0.0, %v2278
  %v2280 = vpop.f32.mrf.mxu0
  %2281 = vmatprep.mubr.f32.mxu0 0.0
  %2282 = vmatmul.mubr.f32.gmra.mxu0 %v2088
  %v2283 = vpop.f32.mrf.mxu0
  %v2284 = vadd.f32 0.0, %v2283
  %v2285 = vpop.f32.mrf.mxu0
  %2286 = vmatprep.mubr.f32.mxu0 0.0
  %2287 = vmatmul.mubr.f32.gmra.mxu0 %v2091
  %v2288 = vpop.f32.mrf.mxu0
  %v2289 = vadd.f32 0.0, %v2288
  %v2290 = vpop.f32.mrf.mxu0
  %2291 = vmatprep.mubr.f32.mxu0 0.0
  %2292 = vmatmul.mubr.f32.gmra.mxu0 %v2094
  %v2293 = vpop.f32.mrf.mxu0
  %v2294 = vadd.f32 0.0, %v2293
  %v2295 = vpop.f32.mrf.mxu0
  %2296 = vmatprep.mubr.f32.mxu0 0.0
  %2297 = vmatmul.mubr.f32.gmra.mxu0 %v2097
  %v2298 = vpop.f32.mrf.mxu0
  %v2299 = vadd.f32 0.0, %v2298
  %v2300 = vpop.f32.mrf.mxu0
  %2301 = vmatprep.mubr.f32.mxu0 0.0
  %2302 = vmatmul.mubr.f32.gmra.mxu0 %v2100
  %v2303 = vpop.f32.mrf.mxu0
  %v2304 = vadd.f32 0.0, %v2303
  %v2305 = vpop.f32.mrf.mxu0
  %2306 = vmatprep.mubr.f32.mxu0 0.0
  %2307 = vmatmul.mubr.f32.gmra.mxu0 %v2103
  %v2308 = vpop.f32.mrf.mxu0
  %v2309 = vadd.f32 0.0, %v2308
  %v2310 = vpop.f32.mrf.mxu0
  %2311 = vmatprep.mubr.f32.mxu0 0.0
  %2312 = vmatmul.mubr.f32.gmra.mxu0 %v2106
  %v2313 = vpop.f32.mrf.mxu0
  %v2314 = vadd.f32 0.0, %v2313
  %v2315 = vpop.f32.mrf.mxu0
  %2316 = vmatprep.mubr.f32.mxu0 0.0
  %2317 = vmatmul.mubr.f32.gmra.mxu0 %v2109
  %v2318 = vpop.f32.mrf.mxu0
  %v2319 = vadd.f32 0.0, %v2318
  %v2320 = vpop.f32.mrf.mxu0
  %2321 = vmatprep.mubr.f32.mxu0 0.0
  %2322 = vmatmul.mubr.f32.gmra.mxu0 %v2112
  %v2323 = vpop.f32.mrf.mxu0
  %v2324 = vadd.f32 0.0, %v2323
  %v2325 = vpop.f32.mrf.mxu0
  %2326 = vmatprep.mubr.f32.mxu0 0.0
  %2327 = vmatmul.mubr.f32.gmra.mxu0 %v2115
  %v2328 = vpop.f32.mrf.mxu0
  %v2329 = vadd.f32 0.0, %v2328
  %v2330 = vpop.f32.mrf.mxu0
  %2331 = vmatprep.mubr.f32.mxu0 0.0
  %2332 = vmatmul.mubr.f32.gmra.mxu0 %v2118
  %v2333 = vpop.f32.mrf.mxu0
  %v2334 = vadd.f32 0.0, %v2333
  %v2335 = vpop.f32.mrf.mxu0
  %2336 = vmatprep.mubr.f32.mxu0 0.0
  %2337 = vmatmul.mubr.f32.gmra.mxu0 %v2121
  %v2338 = vpop.f32.mrf.mxu0
  %v2339 = vadd.f32 0.0, %v2338
  %v2340 = vpop.f32.mrf.mxu0
  %2341 = vmatprep.mubr.f32.mxu0 0.0
  %2342 = vmatmul.mubr.f32.gmra.mxu0 %v2124
  %v2343 = vpop.f32.mrf.mxu0
  %v2344 = vadd.f32 0.0, %v2343
  %v2345 = vpop.f32.mrf.mxu0
  %2346 = vmatprep.mubr.f32.mxu0 0.0
  %2347 = vmatmul.mubr.f32.gmra.mxu0 %v2127
  %v2348 = vpop.f32.mrf.mxu0
  %v2349 = vadd.f32 0.0, %v2348
  %v2350 = vpop.f32.mrf.mxu0
  %2351 = vmatprep.mubr.f32.mxu0 0.0
  %2352 = vmatmul.mubr.f32.gmra.mxu0 %v2130
  %v2353 = vpop.f32.mrf.mxu0
  %v2354 = vadd.f32 0.0, %v2353
  %v2355 = vpop.f32.mrf.mxu0
  %2356 = vdwg.mxu0
  %v2357 = vadd.f32 %v1967, %v2199
  %v2358 = vadd.f32 %v1968, %v2204
  %v2359 = vadd.f32 %v1969, %v2209
  %v2360 = vadd.f32 %v1970, %v2214
  %v2361 = vadd.f32 %v1971, %v2219
  %v2362 = vadd.f32 %v1972, %v2224
  %v2363 = vadd.f32 %v1973, %v2229
  %v2364 = vadd.f32 %v1974, %v2234
  %v2365 = vadd.f32 %v1975, %v2239
  %v2366 = vadd.f32 %v1976, %v2244
  %v2367 = vadd.f32 %v1977, %v2249
  %v2368 = vadd.f32 %v1978, %v2254
  %v2369 = vadd.f32 %v1979, %v2259
  %v2370 = vadd.f32 %v1980, %v2264
  %v2371 = vadd.f32 %v1981, %v2269
  %v2372 = vadd.f32 %v1982, %v2274
  %v2373 = vadd.f32 %v1983, %v2279
  %v2374 = vadd.f32 %v1984, %v2284
  %v2375 = vadd.f32 %v1985, %v2289
  %v2376 = vadd.f32 %v1986, %v2294
  %v2377 = vadd.f32 %v1987, %v2299
  %v2378 = vadd.f32 %v1988, %v2304
  %v2379 = vadd.f32 %v1989, %v2309
  %v2380 = vadd.f32 %v1990, %v2314
  %v2381 = vadd.f32 %v1991, %v2319
  %v2382 = vadd.f32 %v1992, %v2324
  %v2383 = vadd.f32 %v1993, %v2329
  %v2384 = vadd.f32 %v1994, %v2334
  %v2385 = vadd.f32 %v1995, %v2339
  %v2386 = vadd.f32 %v1996, %v2344
  %v2387 = vadd.f32 %v1997, %v2349
  %v2388 = vadd.f32 %v1998, %v2354
  %v2389 = vld [vmem:[%s4] sm:$0x1]
  %v2391 = vlaneseq
  %v2392 = vshrl.u32 %v2391, 7
  %v2393 = vsub.s32 0, %v2392
  %v2394 = vrot.slane %v2389, %v2393
  %v2396 = vadd.f32 %v2357, %v2394
  %v2397 = vadd.f32 %v2358, %v2394
  %v2398 = vadd.f32 %v2359, %v2394
  %v2399 = vadd.f32 %v2360, %v2394
  %v2400 = vadd.f32 %v2361, %v2394
  %v2401 = vadd.f32 %v2362, %v2394
  %v2402 = vadd.f32 %v2363, %v2394
  %v2403 = vadd.f32 %v2364, %v2394
  %v2404 = vadd.f32 %v2365, %v2394
  %v2405 = vadd.f32 %v2366, %v2394
  %v2406 = vadd.f32 %v2367, %v2394
  %v2407 = vadd.f32 %v2368, %v2394
  %v2408 = vadd.f32 %v2369, %v2394
  %v2409 = vadd.f32 %v2370, %v2394
  %v2410 = vadd.f32 %v2371, %v2394
  %v2411 = vadd.f32 %v2372, %v2394
  %v2412 = vadd.f32 %v2373, %v2394
  %v2413 = vadd.f32 %v2374, %v2394
  %v2414 = vadd.f32 %v2375, %v2394
  %v2415 = vadd.f32 %v2376, %v2394
  %v2416 = vadd.f32 %v2377, %v2394
  %v2417 = vadd.f32 %v2378, %v2394
  %v2418 = vadd.f32 %v2379, %v2394
  %v2419 = vadd.f32 %v2380, %v2394
  %v2420 = vadd.f32 %v2381, %v2394
  %v2421 = vadd.f32 %v2382, %v2394
  %v2422 = vadd.f32 %v2383, %v2394
  %v2423 = vadd.f32 %v2384, %v2394
  %v2424 = vadd.f32 %v2385, %v2394
  %v2425 = vadd.f32 %v2386, %v2394
  %v2426 = vadd.f32 %v2387, %v2394
  %v2427 = vadd.f32 %v2388, %v2394
  %v2428 = vmax.f32 %v2396, 0.0
  %v2429 = vmax.f32 %v2397, 0.0
  %v2430 = vmax.f32 %v2398, 0.0
  %v2431 = vmax.f32 %v2399, 0.0
  %v2432 = vmax.f32 %v2400, 0.0
  %v2433 = vmax.f32 %v2401, 0.0
  %v2434 = vmax.f32 %v2402, 0.0
  %v2435 = vmax.f32 %v2403, 0.0
  %v2436 = vmax.f32 %v2404, 0.0
  %v2437 = vmax.f32 %v2405, 0.0
  %v2438 = vmax.f32 %v2406, 0.0
  %v2439 = vmax.f32 %v2407, 0.0
  %v2440 = vmax.f32 %v2408, 0.0
  %v2441 = vmax.f32 %v2409, 0.0
  %v2442 = vmax.f32 %v2410, 0.0
  %v2443 = vmax.f32 %v2411, 0.0
  %v2444 = vmax.f32 %v2412, 0.0
  %v2445 = vmax.f32 %v2413, 0.0
  %v2446 = vmax.f32 %v2414, 0.0
  %v2447 = vmax.f32 %v2415, 0.0
  %v2448 = vmax.f32 %v2416, 0.0
  %v2449 = vmax.f32 %v2417, 0.0
  %v2450 = vmax.f32 %v2418, 0.0
  %v2451 = vmax.f32 %v2419, 0.0
  %v2452 = vmax.f32 %v2420, 0.0
  %v2453 = vmax.f32 %v2421, 0.0
  %v2454 = vmax.f32 %v2422, 0.0
  %v2455 = vmax.f32 %v2423, 0.0
  %v2456 = vmax.f32 %v2424, 0.0
  %v2457 = vmax.f32 %v2425, 0.0
  %v2458 = vmax.f32 %v2426, 0.0
  %v2459 = vmax.f32 %v2427, 0.0
  %2460 = vst.msk [vmem:[#allocation2 + $0x2] sm:$0xff] %vm471, %v2428
  %2461 = vst.msk [vmem:[#allocation2 + $0xa] sm:$0xff] %vm471, %v2429
  %2462 = vst.msk [vmem:[#allocation2 + $0x1a] sm:$0xff] %vm471, %v2430
  %2463 = vst.msk [vmem:[#allocation2 + $0x22] sm:$0xff] %vm471, %v2431
  %2464 = vst.msk [vmem:[#allocation2 + $0x32] sm:$0xff] %vm471, %v2432
  %2465 = vst.msk [vmem:[#allocation2 + $0x3a] sm:$0xff] %vm471, %v2433
  %2466 = vst.msk [vmem:[#allocation2 + $0x4a] sm:$0xff] %vm471, %v2434
  %2467 = vst.msk [vmem:[#allocation2 + $0x52] sm:$0xff] %vm471, %v2435
  %2468 = vst.msk [vmem:[#allocation2 + $0x62] sm:$0xff] %vm471, %v2436
  %2469 = vst.msk [vmem:[#allocation2 + $0x6a] sm:$0xff] %vm471, %v2437
  %2470 = vst.msk [vmem:[#allocation2 + $0x7a] sm:$0xff] %vm471, %v2438
  %2471 = vst.msk [vmem:[#allocation2 + $0x82] sm:$0xff] %vm471, %v2439
  %2472 = vst.msk [vmem:[#allocation2 + $0x92] sm:$0xff] %vm471, %v2440
  %2473 = vst.msk [vmem:[#allocation2 + $0x9a] sm:$0xff] %vm471, %v2441
  %2474 = vst.msk [vmem:[#allocation2 + $0xaa] sm:$0xff] %vm471, %v2442
  %2475 = vst.msk [vmem:[#allocation2 + $0xb2] sm:$0xff] %vm471, %v2443
  %2476 = vst.msk [vmem:[#allocation2 + $0xc2] sm:$0xff] %vm471, %v2444
  %2477 = vst.msk [vmem:[#allocation2 + $0xca] sm:$0xff] %vm471, %v2445
  %2478 = vst.msk [vmem:[#allocation2 + $0xda] sm:$0xff] %vm471, %v2446
  %2479 = vst.msk [vmem:[#allocation2 + $0xe2] sm:$0xff] %vm471, %v2447
  %2480 = vst.msk [vmem:[#allocation2 + $0xf2] sm:$0xff] %vm471, %v2448
  %2481 = vst.msk [vmem:[#allocation2 + $0xfa] sm:$0xff] %vm471, %v2449
  %2482 = vst.msk [vmem:[#allocation2 + $0x10a] sm:$0xff] %vm471, %v2450
  %2483 = vst.msk [vmem:[#allocation2 + $0x112] sm:$0xff] %vm471, %v2451
  %2484 = vst.msk [vmem:[#allocation2 + $0x122] sm:$0xff] %vm471, %v2452
  %2485 = vst.msk [vmem:[#allocation2 + $0x12a] sm:$0xff] %vm471, %v2453
  %2486 = vst.msk [vmem:[#allocation2 + $0x13a] sm:$0xff] %vm471, %v2454
  %2487 = vst.msk [vmem:[#allocation2 + $0x142] sm:$0xff] %vm471, %v2455
  %2488 = vst.msk [vmem:[#allocation2 + $0x152] sm:$0xff] %vm471, %v2456
  %2489 = vst.msk [vmem:[#allocation2 + $0x15a] sm:$0xff] %vm471, %v2457
  %2490 = vst.msk [vmem:[#allocation2 + $0x16a] sm:$0xff] %vm471, %v2458
  %2491 = vst.msk [vmem:[#allocation2 + $0x172] sm:$0xff] %vm471, %v2459
  %v2492 = vld [vmem:[#allocation2] sm:$0xff]
  %v2493 = vld [vmem:[#allocation2 + $0x8] sm:$0xff]
  %v2494 = vld [vmem:[#allocation2 + $0x18] sm:$0xff]
  %v2495 = vld [vmem:[#allocation2 + $0x20] sm:$0xff]
  %v2496 = vld [vmem:[#allocation2 + $0x30] sm:$0xff]
  %v2497 = vld [vmem:[#allocation2 + $0x38] sm:$0xff]
  %v2498 = vld [vmem:[#allocation2 + $0x48] sm:$0xff]
  %v2499 = vld [vmem:[#allocation2 + $0x50] sm:$0xff]
  %v2500 = vld [vmem:[#allocation2 + $0x60] sm:$0xff]
  %v2501 = vld [vmem:[#allocation2 + $0x68] sm:$0xff]
  %v2502 = vld [vmem:[#allocation2 + $0x78] sm:$0xff]
  %v2503 = vld [vmem:[#allocation2 + $0x80] sm:$0xff]
  %v2504 = vld [vmem:[#allocation2 + $0x90] sm:$0xff]
  %v2505 = vld [vmem:[#allocation2 + $0x98] sm:$0xff]
  %v2506 = vld [vmem:[#allocation2 + $0xa8] sm:$0xff]
  %v2507 = vld [vmem:[#allocation2 + $0xb0] sm:$0xff]
  %v2508 = vld [vmem:[#allocation2 + $0xc0] sm:$0xff]
  %v2509 = vld [vmem:[#allocation2 + $0xc8] sm:$0xff]
  %v2510 = vld [vmem:[#allocation2 + $0xd8] sm:$0xff]
  %v2511 = vld [vmem:[#allocation2 + $0xe0] sm:$0xff]
  %v2512 = vld [vmem:[#allocation2 + $0xf0] sm:$0xff]
  %v2513 = vld [vmem:[#allocation2 + $0xf8] sm:$0xff]
  %v2514 = vld [vmem:[#allocation2 + $0x108] sm:$0xff]
  %v2515 = vld [vmem:[#allocation2 + $0x110] sm:$0xff]
  %v2516 = vld [vmem:[#allocation2 + $0x120] sm:$0xff]
  %v2517 = vld [vmem:[#allocation2 + $0x128] sm:$0xff]
  %v2518 = vld [vmem:[#allocation2 + $0x138] sm:$0xff]
  %v2519 = vld [vmem:[#allocation2 + $0x140] sm:$0xff]
  %v2520 = vld [vmem:[#allocation2 + $0x150] sm:$0xff]
  %v2521 = vld [vmem:[#allocation2 + $0x158] sm:$0xff]
  %v2522 = vld [vmem:[#allocation2 + $0x168] sm:$0xff]
  %v2523 = vld [vmem:[#allocation2 + $0x170] sm:$0xff]
  %v2524 = vld [vmem:[%s5] sm:$0xff]
  %v2525 = vld [vmem:[%s5 + $0x8] sm:$0xff]
  %v2526 = vld [vmem:[%s5 + $0x10] sm:$0xff]
  %v2527 = vld [vmem:[%s5 + $0x18] sm:$0xff]
  %v2528 = vld [vmem:[#allocation2 + $0x1] sm:$0xff]
  %v2529 = vld [vmem:[#allocation2 + $0x9] sm:$0xff]
  %v2530 = vld [vmem:[#allocation2 + $0x19] sm:$0xff]
  %v2531 = vld [vmem:[#allocation2 + $0x21] sm:$0xff]
  %v2532 = vld [vmem:[#allocation2 + $0x31] sm:$0xff]
  %v2533 = vld [vmem:[#allocation2 + $0x39] sm:$0xff]
  %v2534 = vld [vmem:[#allocation2 + $0x49] sm:$0xff]
  %v2535 = vld [vmem:[#allocation2 + $0x51] sm:$0xff]
  %v2536 = vld [vmem:[#allocation2 + $0x61] sm:$0xff]
  %v2537 = vld [vmem:[#allocation2 + $0x69] sm:$0xff]
  %v2538 = vld [vmem:[#allocation2 + $0x79] sm:$0xff]
  %v2539 = vld [vmem:[#allocation2 + $0x81] sm:$0xff]
  %v2540 = vld [vmem:[#allocation2 + $0x91] sm:$0xff]
  %v2541 = vld [vmem:[#allocation2 + $0x99] sm:$0xff]
  %v2542 = vld [vmem:[#allocation2 + $0xa9] sm:$0xff]
  %v2543 = vld [vmem:[#allocation2 + $0xb1] sm:$0xff]
  %v2544 = vld [vmem:[#allocation2 + $0xc1] sm:$0xff]
  %v2545 = vld [vmem:[#allocation2 + $0xc9] sm:$0xff]
  %v2546 = vld [vmem:[#allocation2 + $0xd9] sm:$0xff]
  %v2547 = vld [vmem:[#allocation2 + $0xe1] sm:$0xff]
  %v2548 = vld [vmem:[#allocation2 + $0xf1] sm:$0xff]
  %v2549 = vld [vmem:[#allocation2 + $0xf9] sm:$0xff]
  %v2550 = vld [vmem:[#allocation2 + $0x109] sm:$0xff]
  %v2551 = vld [vmem:[#allocation2 + $0x111] sm:$0xff]
  %v2552 = vld [vmem:[#allocation2 + $0x121] sm:$0xff]
  %v2553 = vld [vmem:[#allocation2 + $0x129] sm:$0xff]
  %v2554 = vld [vmem:[#allocation2 + $0x139] sm:$0xff]
  %v2555 = vld [vmem:[#allocation2 + $0x141] sm:$0xff]
  %v2556 = vld [vmem:[#allocation2 + $0x151] sm:$0xff]
  %v2557 = vld [vmem:[#allocation2 + $0x159] sm:$0xff]
  %v2558 = vld [vmem:[#allocation2 + $0x169] sm:$0xff]
  %v2559 = vld [vmem:[#allocation2 + $0x171] sm:$0xff]
  %s2560 = scalar_lea.vmem %s5, 32
  %v2561 = vld [vmem:[%s2560] sm:$0xff]
  %v2562 = vld [vmem:[%s2560 + $0x8] sm:$0xff]
  %v2563 = vld [vmem:[%s2560 + $0x10] sm:$0xff]
  %v2564 = vld [vmem:[%s2560 + $0x18] sm:$0xff]
  %v2566 = vsel %vm471, %v2528, 0
  %v2569 = vsel %vm471, %v2529, 0
  %v2572 = vsel %vm471, %v2530, 0
  %v2575 = vsel %vm471, %v2531, 0
  %v2578 = vsel %vm471, %v2532, 0
  %v2581 = vsel %vm471, %v2533, 0
  %v2584 = vsel %vm471, %v2534, 0
  %v2587 = vsel %vm471, %v2535, 0
  %v2590 = vsel %vm471, %v2536, 0
  %v2593 = vsel %vm471, %v2537, 0
  %v2596 = vsel %vm471, %v2538, 0
  %v2599 = vsel %vm471, %v2539, 0
  %v2602 = vsel %vm471, %v2540, 0
  %v2605 = vsel %vm471, %v2541, 0
  %v2608 = vsel %vm471, %v2542, 0
  %v2611 = vsel %vm471, %v2543, 0
  %v2614 = vsel %vm471, %v2544, 0
  %v2617 = vsel %vm471, %v2545, 0
  %v2620 = vsel %vm471, %v2546, 0
  %v2623 = vsel %vm471, %v2547, 0
  %v2626 = vsel %vm471, %v2548, 0
  %v2629 = vsel %vm471, %v2549, 0
  %v2632 = vsel %vm471, %v2550, 0
  %v2635 = vsel %vm471, %v2551, 0
  %v2638 = vsel %vm471, %v2552, 0
  %v2641 = vsel %vm471, %v2553, 0
  %v2644 = vsel %vm471, %v2554, 0
  %v2647 = vsel %vm471, %v2555, 0
  %v2650 = vsel %vm471, %v2556, 0
  %v2653 = vsel %vm471, %v2557, 0
  %v2656 = vsel %vm471, %v2558, 0
  %v2659 = vsel %vm471, %v2559, 0
  %2661 = vmatprep.subr.mxu0 0.0
  %2662 = vmatpush1.msra.mxu0 0.0
  %2663 = vmatprep.subr.mxu0 0.0
  %2664 = vmatpush1.msra.mxu0 0.0
  %2665 = vmatprep.subr.mxu0 0.0
  %2666 = vmatpush1.msra.mxu0 0.0
  %2667 = vmatprep.subr.mxu0 0.0
  %2668 = vmatpush1.msra.mxu0 0.0
  %2669 = vmatprep.subr.mxu0 0.0
  %2670 = vmatpush1.msra.mxu0 0.0
  %2671 = vmatprep.subr.mxu0 0.0
  %2672 = vmatpush1.msra.mxu0 0.0
  %2673 = vmatprep.subr.mxu0 0.0
  %2674 = vmatpush1.msra.mxu0 0.0
  %2675 = vmatprep.subr.mxu0 0.0
  %2676 = vmatpush1.msra.mxu0 0.0
  %2677 = vmatprep.subr.mxu0 0.0
  %2678 = vmatpush1.msra.mxu0 0.0
  %2679 = vmatprep.subr.mxu0 0.0
  %2680 = vmatpush1.msra.mxu0 0.0
  %2681 = vmatprep.subr.mxu0 0.0
  %2682 = vmatpush1.msra.mxu0 0.0
  %2683 = vmatprep.subr.mxu0 0.0
  %2684 = vmatpush1.msra.mxu0 0.0
  %2685 = vmatprep.subr.mxu0 0.0
  %2686 = vmatpush1.msra.mxu0 %v2564
  %2687 = vmatprep.subr.mxu0 0.0
  %2688 = vmatpush1.msra.mxu0 %v2563
  %2689 = vmatprep.subr.mxu0 0.0
  %2690 = vmatpush1.msra.mxu0 %v2562
  %2691 = vmatprep.subr.mxu0 0.0
  %2692 = vmatpush1.msra.mxu0 %v2561
  %2693 = vmatprep.subr.mxu0 0.0
  %2694 = vmatpush2.msra.mxu0 0.0
  %2695 = vmatprep.subr.mxu0 0.0
  %2696 = vmatpush2.msra.mxu0 0.0
  %2697 = vmatprep.subr.mxu0 0.0
  %2698 = vmatpush2.msra.mxu0 0.0
  %2699 = vmatprep.subr.mxu0 0.0
  %2700 = vmatpush2.msra.mxu0 0.0
  %2701 = vmatprep.subr.mxu0 0.0
  %2702 = vmatpush2.msra.mxu0 0.0
  %2703 = vmatprep.subr.mxu0 0.0
  %2704 = vmatpush2.msra.mxu0 0.0
  %2705 = vmatprep.subr.mxu0 0.0
  %2706 = vmatpush2.msra.mxu0 0.0
  %2707 = vmatprep.subr.mxu0 0.0
  %2708 = vmatpush2.msra.mxu0 0.0
  %2709 = vmatprep.subr.mxu0 0.0
  %2710 = vmatpush2.msra.mxu0 0.0
  %2711 = vmatprep.subr.mxu0 0.0
  %2712 = vmatpush2.msra.mxu0 0.0
  %2713 = vmatprep.subr.mxu0 0.0
  %2714 = vmatpush2.msra.mxu0 0.0
  %2715 = vmatprep.subr.mxu0 0.0
  %2716 = vmatpush2.msra.mxu0 0.0
  %2717 = vmatprep.subr.mxu0 0.0
  %2718 = vmatpush2.msra.mxu0 0.0
  %2719 = vmatprep.subr.mxu0 0.0
  %2720 = vmatpush2.msra.mxu0 0.0
  %2721 = vmatprep.subr.mxu0 0.0
  %2722 = vmatpush2.msra.mxu0 0.0
  %2723 = vmatprep.subr.mxu0 0.0
  %2724 = vmatpush2.msra.mxu0 0.0
  %2725 = vmatprep.mubr.f32.mxu0 0.0
  %2726 = vmatmul.mubr.f32.gmra.mxu0 %v2566
  %v2727 = vpop.f32.mrf.mxu0
  %v2728 = vadd.f32 0.0, %v2727
  %v2729 = vpop.f32.mrf.mxu0
  %2730 = vmatprep.mubr.f32.mxu0 0.0
  %2731 = vmatmul.mubr.f32.gmra.mxu0 %v2569
  %v2732 = vpop.f32.mrf.mxu0
  %v2733 = vadd.f32 0.0, %v2732
  %v2734 = vpop.f32.mrf.mxu0
  %2735 = vmatprep.mubr.f32.mxu0 0.0
  %2736 = vmatmul.mubr.f32.gmra.mxu0 %v2572
  %v2737 = vpop.f32.mrf.mxu0
  %v2738 = vadd.f32 0.0, %v2737
  %v2739 = vpop.f32.mrf.mxu0
  %2740 = vmatprep.mubr.f32.mxu0 0.0
  %2741 = vmatmul.mubr.f32.gmra.mxu0 %v2575
  %v2742 = vpop.f32.mrf.mxu0
  %v2743 = vadd.f32 0.0, %v2742
  %v2744 = vpop.f32.mrf.mxu0
  %2745 = vmatprep.mubr.f32.mxu0 0.0
  %2746 = vmatmul.mubr.f32.gmra.mxu0 %v2578
  %v2747 = vpop.f32.mrf.mxu0
  %v2748 = vadd.f32 0.0, %v2747
  %v2749 = vpop.f32.mrf.mxu0
  %2750 = vmatprep.mubr.f32.mxu0 0.0
  %2751 = vmatmul.mubr.f32.gmra.mxu0 %v2581
  %v2752 = vpop.f32.mrf.mxu0
  %v2753 = vadd.f32 0.0, %v2752
  %v2754 = vpop.f32.mrf.mxu0
  %2755 = vmatprep.mubr.f32.mxu0 0.0
  %2756 = vmatmul.mubr.f32.gmra.mxu0 %v2584
  %v2757 = vpop.f32.mrf.mxu0
  %v2758 = vadd.f32 0.0, %v2757
  %v2759 = vpop.f32.mrf.mxu0
  %2760 = vmatprep.mubr.f32.mxu0 0.0
  %2761 = vmatmul.mubr.f32.gmra.mxu0 %v2587
  %v2762 = vpop.f32.mrf.mxu0
  %v2763 = vadd.f32 0.0, %v2762
  %v2764 = vpop.f32.mrf.mxu0
  %2765 = vmatprep.mubr.f32.mxu0 0.0
  %2766 = vmatmul.mubr.f32.gmra.mxu0 %v2590
  %v2767 = vpop.f32.mrf.mxu0
  %v2768 = vadd.f32 0.0, %v2767
  %v2769 = vpop.f32.mrf.mxu0
  %2770 = vmatprep.mubr.f32.mxu0 0.0
  %2771 = vmatmul.mubr.f32.gmra.mxu0 %v2593
  %v2772 = vpop.f32.mrf.mxu0
  %v2773 = vadd.f32 0.0, %v2772
  %v2774 = vpop.f32.mrf.mxu0
  %2775 = vmatprep.mubr.f32.mxu0 0.0
  %2776 = vmatmul.mubr.f32.gmra.mxu0 %v2596
  %v2777 = vpop.f32.mrf.mxu0
  %v2778 = vadd.f32 0.0, %v2777
  %v2779 = vpop.f32.mrf.mxu0
  %2780 = vmatprep.mubr.f32.mxu0 0.0
  %2781 = vmatmul.mubr.f32.gmra.mxu0 %v2599
  %v2782 = vpop.f32.mrf.mxu0
  %v2783 = vadd.f32 0.0, %v2782
  %v2784 = vpop.f32.mrf.mxu0
  %2785 = vmatprep.mubr.f32.mxu0 0.0
  %2786 = vmatmul.mubr.f32.gmra.mxu0 %v2602
  %v2787 = vpop.f32.mrf.mxu0
  %v2788 = vadd.f32 0.0, %v2787
  %v2789 = vpop.f32.mrf.mxu0
  %2790 = vmatprep.mubr.f32.mxu0 0.0
  %2791 = vmatmul.mubr.f32.gmra.mxu0 %v2605
  %v2792 = vpop.f32.mrf.mxu0
  %v2793 = vadd.f32 0.0, %v2792
  %v2794 = vpop.f32.mrf.mxu0
  %2795 = vmatprep.mubr.f32.mxu0 0.0
  %2796 = vmatmul.mubr.f32.gmra.mxu0 %v2608
  %v2797 = vpop.f32.mrf.mxu0
  %v2798 = vadd.f32 0.0, %v2797
  %v2799 = vpop.f32.mrf.mxu0
  %2800 = vmatprep.mubr.f32.mxu0 0.0
  %2801 = vmatmul.mubr.f32.gmra.mxu0 %v2611
  %v2802 = vpop.f32.mrf.mxu0
  %v2803 = vadd.f32 0.0, %v2802
  %v2804 = vpop.f32.mrf.mxu0
  %2805 = vmatprep.mubr.f32.mxu0 0.0
  %2806 = vmatmul.mubr.f32.gmra.mxu0 %v2614
  %v2807 = vpop.f32.mrf.mxu0
  %v2808 = vadd.f32 0.0, %v2807
  %v2809 = vpop.f32.mrf.mxu0
  %2810 = vmatprep.mubr.f32.mxu0 0.0
  %2811 = vmatmul.mubr.f32.gmra.mxu0 %v2617
  %v2812 = vpop.f32.mrf.mxu0
  %v2813 = vadd.f32 0.0, %v2812
  %v2814 = vpop.f32.mrf.mxu0
  %2815 = vmatprep.mubr.f32.mxu0 0.0
  %2816 = vmatmul.mubr.f32.gmra.mxu0 %v2620
  %v2817 = vpop.f32.mrf.mxu0
  %v2818 = vadd.f32 0.0, %v2817
  %v2819 = vpop.f32.mrf.mxu0
  %2820 = vmatprep.mubr.f32.mxu0 0.0
  %2821 = vmatmul.mubr.f32.gmra.mxu0 %v2623
  %v2822 = vpop.f32.mrf.mxu0
  %v2823 = vadd.f32 0.0, %v2822
  %v2824 = vpop.f32.mrf.mxu0
  %2825 = vmatprep.mubr.f32.mxu0 0.0
  %2826 = vmatmul.mubr.f32.gmra.mxu0 %v2626
  %v2827 = vpop.f32.mrf.mxu0
  %v2828 = vadd.f32 0.0, %v2827
  %v2829 = vpop.f32.mrf.mxu0
  %2830 = vmatprep.mubr.f32.mxu0 0.0
  %2831 = vmatmul.mubr.f32.gmra.mxu0 %v2629
  %v2832 = vpop.f32.mrf.mxu0
  %v2833 = vadd.f32 0.0, %v2832
  %v2834 = vpop.f32.mrf.mxu0
  %2835 = vmatprep.mubr.f32.mxu0 0.0
  %2836 = vmatmul.mubr.f32.gmra.mxu0 %v2632
  %v2837 = vpop.f32.mrf.mxu0
  %v2838 = vadd.f32 0.0, %v2837
  %v2839 = vpop.f32.mrf.mxu0
  %2840 = vmatprep.mubr.f32.mxu0 0.0
  %2841 = vmatmul.mubr.f32.gmra.mxu0 %v2635
  %v2842 = vpop.f32.mrf.mxu0
  %v2843 = vadd.f32 0.0, %v2842
  %v2844 = vpop.f32.mrf.mxu0
  %2845 = vmatprep.mubr.f32.mxu0 0.0
  %2846 = vmatmul.mubr.f32.gmra.mxu0 %v2638
  %v2847 = vpop.f32.mrf.mxu0
  %v2848 = vadd.f32 0.0, %v2847
  %v2849 = vpop.f32.mrf.mxu0
  %2850 = vmatprep.mubr.f32.mxu0 0.0
  %2851 = vmatmul.mubr.f32.gmra.mxu0 %v2641
  %v2852 = vpop.f32.mrf.mxu0
  %v2853 = vadd.f32 0.0, %v2852
  %v2854 = vpop.f32.mrf.mxu0
  %2855 = vmatprep.mubr.f32.mxu0 0.0
  %2856 = vmatmul.mubr.f32.gmra.mxu0 %v2644
  %v2857 = vpop.f32.mrf.mxu0
  %v2858 = vadd.f32 0.0, %v2857
  %v2859 = vpop.f32.mrf.mxu0
  %2860 = vmatprep.mubr.f32.mxu0 0.0
  %2861 = vmatmul.mubr.f32.gmra.mxu0 %v2647
  %v2862 = vpop.f32.mrf.mxu0
  %v2863 = vadd.f32 0.0, %v2862
  %v2864 = vpop.f32.mrf.mxu0
  %2865 = vmatprep.mubr.f32.mxu0 0.0
  %2866 = vmatmul.mubr.f32.gmra.mxu0 %v2650
  %v2867 = vpop.f32.mrf.mxu0
  %v2868 = vadd.f32 0.0, %v2867
  %v2869 = vpop.f32.mrf.mxu0
  %2870 = vmatprep.mubr.f32.mxu0 0.0
  %2871 = vmatmul.mubr.f32.gmra.mxu0 %v2653
  %v2872 = vpop.f32.mrf.mxu0
  %v2873 = vadd.f32 0.0, %v2872
  %v2874 = vpop.f32.mrf.mxu0
  %2875 = vmatprep.mubr.f32.mxu0 0.0
  %2876 = vmatmul.mubr.f32.gmra.mxu0 %v2656
  %v2877 = vpop.f32.mrf.mxu0
  %v2878 = vadd.f32 0.0, %v2877
  %v2879 = vpop.f32.mrf.mxu0
  %2880 = vmatprep.mubr.f32.mxu0 0.0
  %2881 = vmatmul.mubr.f32.gmra.mxu0 %v2659
  %v2882 = vpop.f32.mrf.mxu0
  %v2883 = vadd.f32 0.0, %v2882
  %v2884 = vpop.f32.mrf.mxu0
  %2885 = vdwg.mxu0
  %v2887 = vsel %vm471, %v2492, 0
  %v2890 = vsel %vm471, %v2493, 0
  %v2893 = vsel %vm471, %v2494, 0
  %v2896 = vsel %vm471, %v2495, 0
  %v2899 = vsel %vm471, %v2496, 0
  %v2902 = vsel %vm471, %v2497, 0
  %v2905 = vsel %vm471, %v2498, 0
  %v2908 = vsel %vm471, %v2499, 0
  %v2911 = vsel %vm471, %v2500, 0
  %v2914 = vsel %vm471, %v2501, 0
  %v2917 = vsel %vm471, %v2502, 0
  %v2920 = vsel %vm471, %v2503, 0
  %v2923 = vsel %vm471, %v2504, 0
  %v2926 = vsel %vm471, %v2505, 0
  %v2929 = vsel %vm471, %v2506, 0
  %v2932 = vsel %vm471, %v2507, 0
  %v2935 = vsel %vm471, %v2508, 0
  %v2938 = vsel %vm471, %v2509, 0
  %v2941 = vsel %vm471, %v2510, 0
  %v2944 = vsel %vm471, %v2511, 0
  %v2947 = vsel %vm471, %v2512, 0
  %v2950 = vsel %vm471, %v2513, 0
  %v2953 = vsel %vm471, %v2514, 0
  %v2956 = vsel %vm471, %v2515, 0
  %v2959 = vsel %vm471, %v2516, 0
  %v2962 = vsel %vm471, %v2517, 0
  %v2965 = vsel %vm471, %v2518, 0
  %v2968 = vsel %vm471, %v2519, 0
  %v2971 = vsel %vm471, %v2520, 0
  %v2974 = vsel %vm471, %v2521, 0
  %v2977 = vsel %vm471, %v2522, 0
  %v2980 = vsel %vm471, %v2523, 0
  %2982 = vmatprep.subr.mxu0 0.0
  %2983 = vmatpush1.msra.mxu0 0.0
  %2984 = vmatprep.subr.mxu0 0.0
  %2985 = vmatpush1.msra.mxu0 0.0
  %2986 = vmatprep.subr.mxu0 0.0
  %2987 = vmatpush1.msra.mxu0 0.0
  %2988 = vmatprep.subr.mxu0 0.0
  %2989 = vmatpush1.msra.mxu0 0.0
  %2990 = vmatprep.subr.mxu0 0.0
  %2991 = vmatpush1.msra.mxu0 0.0
  %2992 = vmatprep.subr.mxu0 0.0
  %2993 = vmatpush1.msra.mxu0 0.0
  %2994 = vmatprep.subr.mxu0 0.0
  %2995 = vmatpush1.msra.mxu0 0.0
  %2996 = vmatprep.subr.mxu0 0.0
  %2997 = vmatpush1.msra.mxu0 0.0
  %2998 = vmatprep.subr.mxu0 0.0
  %2999 = vmatpush1.msra.mxu0 0.0
  %3000 = vmatprep.subr.mxu0 0.0
  %3001 = vmatpush1.msra.mxu0 0.0
  %3002 = vmatprep.subr.mxu0 0.0
  %3003 = vmatpush1.msra.mxu0 0.0
  %3004 = vmatprep.subr.mxu0 0.0
  %3005 = vmatpush1.msra.mxu0 0.0
  %3006 = vmatprep.subr.mxu0 0.0
  %3007 = vmatpush1.msra.mxu0 %v2527
  %3008 = vmatprep.subr.mxu0 0.0
  %3009 = vmatpush1.msra.mxu0 %v2526
  %3010 = vmatprep.subr.mxu0 0.0
  %3011 = vmatpush1.msra.mxu0 %v2525
  %3012 = vmatprep.subr.mxu0 0.0
  %3013 = vmatpush1.msra.mxu0 %v2524
  %3014 = vmatprep.subr.mxu0 0.0
  %3015 = vmatpush2.msra.mxu0 0.0
  %3016 = vmatprep.subr.mxu0 0.0
  %3017 = vmatpush2.msra.mxu0 0.0
  %3018 = vmatprep.subr.mxu0 0.0
  %3019 = vmatpush2.msra.mxu0 0.0
  %3020 = vmatprep.subr.mxu0 0.0
  %3021 = vmatpush2.msra.mxu0 0.0
  %3022 = vmatprep.subr.mxu0 0.0
  %3023 = vmatpush2.msra.mxu0 0.0
  %3024 = vmatprep.subr.mxu0 0.0
  %3025 = vmatpush2.msra.mxu0 0.0
  %3026 = vmatprep.subr.mxu0 0.0
  %3027 = vmatpush2.msra.mxu0 0.0
  %3028 = vmatprep.subr.mxu0 0.0
  %3029 = vmatpush2.msra.mxu0 0.0
  %3030 = vmatprep.subr.mxu0 0.0
  %3031 = vmatpush2.msra.mxu0 0.0
  %3032 = vmatprep.subr.mxu0 0.0
  %3033 = vmatpush2.msra.mxu0 0.0
  %3034 = vmatprep.subr.mxu0 0.0
  %3035 = vmatpush2.msra.mxu0 0.0
  %3036 = vmatprep.subr.mxu0 0.0
  %3037 = vmatpush2.msra.mxu0 0.0
  %3038 = vmatprep.subr.mxu0 0.0
  %3039 = vmatpush2.msra.mxu0 0.0
  %3040 = vmatprep.subr.mxu0 0.0
  %3041 = vmatpush2.msra.mxu0 0.0
  %3042 = vmatprep.subr.mxu0 0.0
  %3043 = vmatpush2.msra.mxu0 0.0
  %3044 = vmatprep.subr.mxu0 0.0
  %3045 = vmatpush2.msra.mxu0 0.0
  %3046 = vmatprep.mubr.f32.mxu0 0.0
  %3047 = vmatmul.mubr.f32.gmra.mxu0 %v2887
  %v3048 = vpop.f32.mrf.mxu0
  %v3049 = vadd.f32 %v2728, %v3048
  %v3050 = vpop.f32.mrf.mxu0
  %3051 = vmatprep.mubr.f32.mxu0 0.0
  %3052 = vmatmul.mubr.f32.gmra.mxu0 %v2890
  %v3053 = vpop.f32.mrf.mxu0
  %v3054 = vadd.f32 %v2733, %v3053
  %v3055 = vpop.f32.mrf.mxu0
  %3056 = vmatprep.mubr.f32.mxu0 0.0
  %3057 = vmatmul.mubr.f32.gmra.mxu0 %v2893
  %v3058 = vpop.f32.mrf.mxu0
  %v3059 = vadd.f32 %v2738, %v3058
  %v3060 = vpop.f32.mrf.mxu0
  %3061 = vmatprep.mubr.f32.mxu0 0.0
  %3062 = vmatmul.mubr.f32.gmra.mxu0 %v2896
  %v3063 = vpop.f32.mrf.mxu0
  %v3064 = vadd.f32 %v2743, %v3063
  %v3065 = vpop.f32.mrf.mxu0
  %3066 = vmatprep.mubr.f32.mxu0 0.0
  %3067 = vmatmul.mubr.f32.gmra.mxu0 %v2899
  %v3068 = vpop.f32.mrf.mxu0
  %v3069 = vadd.f32 %v2748, %v3068
  %v3070 = vpop.f32.mrf.mxu0
  %3071 = vmatprep.mubr.f32.mxu0 0.0
  %3072 = vmatmul.mubr.f32.gmra.mxu0 %v2902
  %v3073 = vpop.f32.mrf.mxu0
  %v3074 = vadd.f32 %v2753, %v3073
  %v3075 = vpop.f32.mrf.mxu0
  %3076 = vmatprep.mubr.f32.mxu0 0.0
  %3077 = vmatmul.mubr.f32.gmra.mxu0 %v2905
  %v3078 = vpop.f32.mrf.mxu0
  %v3079 = vadd.f32 %v2758, %v3078
  %v3080 = vpop.f32.mrf.mxu0
  %3081 = vmatprep.mubr.f32.mxu0 0.0
  %3082 = vmatmul.mubr.f32.gmra.mxu0 %v2908
  %v3083 = vpop.f32.mrf.mxu0
  %v3084 = vadd.f32 %v2763, %v3083
  %v3085 = vpop.f32.mrf.mxu0
  %3086 = vmatprep.mubr.f32.mxu0 0.0
  %3087 = vmatmul.mubr.f32.gmra.mxu0 %v2911
  %v3088 = vpop.f32.mrf.mxu0
  %v3089 = vadd.f32 %v2768, %v3088
  %v3090 = vpop.f32.mrf.mxu0
  %3091 = vmatprep.mubr.f32.mxu0 0.0
  %3092 = vmatmul.mubr.f32.gmra.mxu0 %v2914
  %v3093 = vpop.f32.mrf.mxu0
  %v3094 = vadd.f32 %v2773, %v3093
  %v3095 = vpop.f32.mrf.mxu0
  %3096 = vmatprep.mubr.f32.mxu0 0.0
  %3097 = vmatmul.mubr.f32.gmra.mxu0 %v2917
  %v3098 = vpop.f32.mrf.mxu0
  %v3099 = vadd.f32 %v2778, %v3098
  %v3100 = vpop.f32.mrf.mxu0
  %3101 = vmatprep.mubr.f32.mxu0 0.0
  %3102 = vmatmul.mubr.f32.gmra.mxu0 %v2920
  %v3103 = vpop.f32.mrf.mxu0
  %v3104 = vadd.f32 %v2783, %v3103
  %v3105 = vpop.f32.mrf.mxu0
  %3106 = vmatprep.mubr.f32.mxu0 0.0
  %3107 = vmatmul.mubr.f32.gmra.mxu0 %v2923
  %v3108 = vpop.f32.mrf.mxu0
  %v3109 = vadd.f32 %v2788, %v3108
  %v3110 = vpop.f32.mrf.mxu0
  %3111 = vmatprep.mubr.f32.mxu0 0.0
  %3112 = vmatmul.mubr.f32.gmra.mxu0 %v2926
  %v3113 = vpop.f32.mrf.mxu0
  %v3114 = vadd.f32 %v2793, %v3113
  %v3115 = vpop.f32.mrf.mxu0
  %3116 = vmatprep.mubr.f32.mxu0 0.0
  %3117 = vmatmul.mubr.f32.gmra.mxu0 %v2929
  %v3118 = vpop.f32.mrf.mxu0
  %v3119 = vadd.f32 %v2798, %v3118
  %v3120 = vpop.f32.mrf.mxu0
  %3121 = vmatprep.mubr.f32.mxu0 0.0
  %3122 = vmatmul.mubr.f32.gmra.mxu0 %v2932
  %v3123 = vpop.f32.mrf.mxu0
  %v3124 = vadd.f32 %v2803, %v3123
  %v3125 = vpop.f32.mrf.mxu0
  %3126 = vmatprep.mubr.f32.mxu0 0.0
  %3127 = vmatmul.mubr.f32.gmra.mxu0 %v2935
  %v3128 = vpop.f32.mrf.mxu0
  %v3129 = vadd.f32 %v2808, %v3128
  %v3130 = vpop.f32.mrf.mxu0
  %3131 = vmatprep.mubr.f32.mxu0 0.0
  %3132 = vmatmul.mubr.f32.gmra.mxu0 %v2938
  %v3133 = vpop.f32.mrf.mxu0
  %v3134 = vadd.f32 %v2813, %v3133
  %v3135 = vpop.f32.mrf.mxu0
  %3136 = vmatprep.mubr.f32.mxu0 0.0
  %3137 = vmatmul.mubr.f32.gmra.mxu0 %v2941
  %v3138 = vpop.f32.mrf.mxu0
  %v3139 = vadd.f32 %v2818, %v3138
  %v3140 = vpop.f32.mrf.mxu0
  %3141 = vmatprep.mubr.f32.mxu0 0.0
  %3142 = vmatmul.mubr.f32.gmra.mxu0 %v2944
  %v3143 = vpop.f32.mrf.mxu0
  %v3144 = vadd.f32 %v2823, %v3143
  %v3145 = vpop.f32.mrf.mxu0
  %3146 = vmatprep.mubr.f32.mxu0 0.0
  %3147 = vmatmul.mubr.f32.gmra.mxu0 %v2947
  %v3148 = vpop.f32.mrf.mxu0
  %v3149 = vadd.f32 %v2828, %v3148
  %v3150 = vpop.f32.mrf.mxu0
  %3151 = vmatprep.mubr.f32.mxu0 0.0
  %3152 = vmatmul.mubr.f32.gmra.mxu0 %v2950
  %v3153 = vpop.f32.mrf.mxu0
  %v3154 = vadd.f32 %v2833, %v3153
  %v3155 = vpop.f32.mrf.mxu0
  %3156 = vmatprep.mubr.f32.mxu0 0.0
  %3157 = vmatmul.mubr.f32.gmra.mxu0 %v2953
  %v3158 = vpop.f32.mrf.mxu0
  %v3159 = vadd.f32 %v2838, %v3158
  %v3160 = vpop.f32.mrf.mxu0
  %3161 = vmatprep.mubr.f32.mxu0 0.0
  %3162 = vmatmul.mubr.f32.gmra.mxu0 %v2956
  %v3163 = vpop.f32.mrf.mxu0
  %v3164 = vadd.f32 %v2843, %v3163
  %v3165 = vpop.f32.mrf.mxu0
  %3166 = vmatprep.mubr.f32.mxu0 0.0
  %3167 = vmatmul.mubr.f32.gmra.mxu0 %v2959
  %v3168 = vpop.f32.mrf.mxu0
  %v3169 = vadd.f32 %v2848, %v3168
  %v3170 = vpop.f32.mrf.mxu0
  %3171 = vmatprep.mubr.f32.mxu0 0.0
  %3172 = vmatmul.mubr.f32.gmra.mxu0 %v2962
  %v3173 = vpop.f32.mrf.mxu0
  %v3174 = vadd.f32 %v2853, %v3173
  %v3175 = vpop.f32.mrf.mxu0
  %3176 = vmatprep.mubr.f32.mxu0 0.0
  %3177 = vmatmul.mubr.f32.gmra.mxu0 %v2965
  %v3178 = vpop.f32.mrf.mxu0
  %v3179 = vadd.f32 %v2858, %v3178
  %v3180 = vpop.f32.mrf.mxu0
  %3181 = vmatprep.mubr.f32.mxu0 0.0
  %3182 = vmatmul.mubr.f32.gmra.mxu0 %v2968
  %v3183 = vpop.f32.mrf.mxu0
  %v3184 = vadd.f32 %v2863, %v3183
  %v3185 = vpop.f32.mrf.mxu0
  %3186 = vmatprep.mubr.f32.mxu0 0.0
  %3187 = vmatmul.mubr.f32.gmra.mxu0 %v2971
  %v3188 = vpop.f32.mrf.mxu0
  %v3189 = vadd.f32 %v2868, %v3188
  %v3190 = vpop.f32.mrf.mxu0
  %3191 = vmatprep.mubr.f32.mxu0 0.0
  %3192 = vmatmul.mubr.f32.gmra.mxu0 %v2974
  %v3193 = vpop.f32.mrf.mxu0
  %v3194 = vadd.f32 %v2873, %v3193
  %v3195 = vpop.f32.mrf.mxu0
  %3196 = vmatprep.mubr.f32.mxu0 0.0
  %3197 = vmatmul.mubr.f32.gmra.mxu0 %v2977
  %v3198 = vpop.f32.mrf.mxu0
  %v3199 = vadd.f32 %v2878, %v3198
  %v3200 = vpop.f32.mrf.mxu0
  %3201 = vmatprep.mubr.f32.mxu0 0.0
  %3202 = vmatmul.mubr.f32.gmra.mxu0 %v2980
  %v3203 = vpop.f32.mrf.mxu0
  %v3204 = vadd.f32 %v2883, %v3203
  %v3205 = vpop.f32.mrf.mxu0
  %3206 = vdwg.mxu0
  %v3207 = vld [vmem:[#allocation2 + $0x2] sm:$0xff]
  %v3208 = vld [vmem:[#allocation2 + $0xa] sm:$0xff]
  %v3209 = vld [vmem:[#allocation2 + $0x1a] sm:$0xff]
  %v3210 = vld [vmem:[#allocation2 + $0x22] sm:$0xff]
  %v3211 = vld [vmem:[#allocation2 + $0x32] sm:$0xff]
  %v3212 = vld [vmem:[#allocation2 + $0x3a] sm:$0xff]
  %v3213 = vld [vmem:[#allocation2 + $0x4a] sm:$0xff]
  %v3214 = vld [vmem:[#allocation2 + $0x52] sm:$0xff]
  %v3215 = vld [vmem:[#allocation2 + $0x62] sm:$0xff]
  %v3216 = vld [vmem:[#allocation2 + $0x6a] sm:$0xff]
  %v3217 = vld [vmem:[#allocation2 + $0x7a] sm:$0xff]
  %v3218 = vld [vmem:[#allocation2 + $0x82] sm:$0xff]
  %v3219 = vld [vmem:[#allocation2 + $0x92] sm:$0xff]
  %v3220 = vld [vmem:[#allocation2 + $0x9a] sm:$0xff]
  %v3221 = vld [vmem:[#allocation2 + $0xaa] sm:$0xff]
  %v3222 = vld [vmem:[#allocation2 + $0xb2] sm:$0xff]
  %v3223 = vld [vmem:[#allocation2 + $0xc2] sm:$0xff]
  %v3224 = vld [vmem:[#allocation2 + $0xca] sm:$0xff]
  %v3225 = vld [vmem:[#allocation2 + $0xda] sm:$0xff]
  %v3226 = vld [vmem:[#allocation2 + $0xe2] sm:$0xff]
  %v3227 = vld [vmem:[#allocation2 + $0xf2] sm:$0xff]
  %v3228 = vld [vmem:[#allocation2 + $0xfa] sm:$0xff]
  %v3229 = vld [vmem:[#allocation2 + $0x10a] sm:$0xff]
  %v3230 = vld [vmem:[#allocation2 + $0x112] sm:$0xff]
  %v3231 = vld [vmem:[#allocation2 + $0x122] sm:$0xff]
  %v3232 = vld [vmem:[#allocation2 + $0x12a] sm:$0xff]
  %v3233 = vld [vmem:[#allocation2 + $0x13a] sm:$0xff]
  %v3234 = vld [vmem:[#allocation2 + $0x142] sm:$0xff]
  %v3235 = vld [vmem:[#allocation2 + $0x152] sm:$0xff]
  %v3236 = vld [vmem:[#allocation2 + $0x15a] sm:$0xff]
  %v3237 = vld [vmem:[#allocation2 + $0x16a] sm:$0xff]
  %v3238 = vld [vmem:[#allocation2 + $0x172] sm:$0xff]
  %s3239 = scalar_lea.vmem %s5, 64
  %v3240 = vld [vmem:[%s3239] sm:$0xff]
  %v3241 = vld [vmem:[%s3239 + $0x8] sm:$0xff]
  %v3242 = vld [vmem:[%s3239 + $0x10] sm:$0xff]
  %v3243 = vld [vmem:[%s3239 + $0x18] sm:$0xff]
  %v3245 = vsel %vm471, %v3207, 0
  %v3248 = vsel %vm471, %v3208, 0
  %v3251 = vsel %vm471, %v3209, 0
  %v3254 = vsel %vm471, %v3210, 0
  %v3257 = vsel %vm471, %v3211, 0
  %v3260 = vsel %vm471, %v3212, 0
  %v3263 = vsel %vm471, %v3213, 0
  %v3266 = vsel %vm471, %v3214, 0
  %v3269 = vsel %vm471, %v3215, 0
  %v3272 = vsel %vm471, %v3216, 0
  %v3275 = vsel %vm471, %v3217, 0
  %v3278 = vsel %vm471, %v3218, 0
  %v3281 = vsel %vm471, %v3219, 0
  %v3284 = vsel %vm471, %v3220, 0
  %v3287 = vsel %vm471, %v3221, 0
  %v3290 = vsel %vm471, %v3222, 0
  %v3293 = vsel %vm471, %v3223, 0
  %v3296 = vsel %vm471, %v3224, 0
  %v3299 = vsel %vm471, %v3225, 0
  %v3302 = vsel %vm471, %v3226, 0
  %v3305 = vsel %vm471, %v3227, 0
  %v3308 = vsel %vm471, %v3228, 0
  %v3311 = vsel %vm471, %v3229, 0
  %v3314 = vsel %vm471, %v3230, 0
  %v3317 = vsel %vm471, %v3231, 0
  %v3320 = vsel %vm471, %v3232, 0
  %v3323 = vsel %vm471, %v3233, 0
  %v3326 = vsel %vm471, %v3234, 0
  %v3329 = vsel %vm471, %v3235, 0
  %v3332 = vsel %vm471, %v3236, 0
  %v3335 = vsel %vm471, %v3237, 0
  %v3338 = vsel %vm471, %v3238, 0
  %3340 = vmatprep.subr.mxu0 0.0
  %3341 = vmatpush1.msra.mxu0 0.0
  %3342 = vmatprep.subr.mxu0 0.0
  %3343 = vmatpush1.msra.mxu0 0.0
  %3344 = vmatprep.subr.mxu0 0.0
  %3345 = vmatpush1.msra.mxu0 0.0
  %3346 = vmatprep.subr.mxu0 0.0
  %3347 = vmatpush1.msra.mxu0 0.0
  %3348 = vmatprep.subr.mxu0 0.0
  %3349 = vmatpush1.msra.mxu0 0.0
  %3350 = vmatprep.subr.mxu0 0.0
  %3351 = vmatpush1.msra.mxu0 0.0
  %3352 = vmatprep.subr.mxu0 0.0
  %3353 = vmatpush1.msra.mxu0 0.0
  %3354 = vmatprep.subr.mxu0 0.0
  %3355 = vmatpush1.msra.mxu0 0.0
  %3356 = vmatprep.subr.mxu0 0.0
  %3357 = vmatpush1.msra.mxu0 0.0
  %3358 = vmatprep.subr.mxu0 0.0
  %3359 = vmatpush1.msra.mxu0 0.0
  %3360 = vmatprep.subr.mxu0 0.0
  %3361 = vmatpush1.msra.mxu0 0.0
  %3362 = vmatprep.subr.mxu0 0.0
  %3363 = vmatpush1.msra.mxu0 0.0
  %3364 = vmatprep.subr.mxu0 0.0
  %3365 = vmatpush1.msra.mxu0 %v3243
  %3366 = vmatprep.subr.mxu0 0.0
  %3367 = vmatpush1.msra.mxu0 %v3242
  %3368 = vmatprep.subr.mxu0 0.0
  %3369 = vmatpush1.msra.mxu0 %v3241
  %3370 = vmatprep.subr.mxu0 0.0
  %3371 = vmatpush1.msra.mxu0 %v3240
  %3372 = vmatprep.subr.mxu0 0.0
  %3373 = vmatpush2.msra.mxu0 0.0
  %3374 = vmatprep.subr.mxu0 0.0
  %3375 = vmatpush2.msra.mxu0 0.0
  %3376 = vmatprep.subr.mxu0 0.0
  %3377 = vmatpush2.msra.mxu0 0.0
  %3378 = vmatprep.subr.mxu0 0.0
  %3379 = vmatpush2.msra.mxu0 0.0
  %3380 = vmatprep.subr.mxu0 0.0
  %3381 = vmatpush2.msra.mxu0 0.0
  %3382 = vmatprep.subr.mxu0 0.0
  %3383 = vmatpush2.msra.mxu0 0.0
  %3384 = vmatprep.subr.mxu0 0.0
  %3385 = vmatpush2.msra.mxu0 0.0
  %3386 = vmatprep.subr.mxu0 0.0
  %3387 = vmatpush2.msra.mxu0 0.0
  %3388 = vmatprep.subr.mxu0 0.0
  %3389 = vmatpush2.msra.mxu0 0.0
  %3390 = vmatprep.subr.mxu0 0.0
  %3391 = vmatpush2.msra.mxu0 0.0
  %3392 = vmatprep.subr.mxu0 0.0
  %3393 = vmatpush2.msra.mxu0 0.0
  %3394 = vmatprep.subr.mxu0 0.0
  %3395 = vmatpush2.msra.mxu0 0.0
  %3396 = vmatprep.subr.mxu0 0.0
  %3397 = vmatpush2.msra.mxu0 0.0
  %3398 = vmatprep.subr.mxu0 0.0
  %3399 = vmatpush2.msra.mxu0 0.0
  %3400 = vmatprep.subr.mxu0 0.0
  %3401 = vmatpush2.msra.mxu0 0.0
  %3402 = vmatprep.subr.mxu0 0.0
  %3403 = vmatpush2.msra.mxu0 0.0
  %3404 = vmatprep.mubr.f32.mxu0 0.0
  %3405 = vmatmul.mubr.f32.gmra.mxu0 %v3245
  %v3406 = vpop.f32.mrf.mxu0
  %v3407 = vadd.f32 0.0, %v3406
  %v3408 = vpop.f32.mrf.mxu0
  %3409 = vmatprep.mubr.f32.mxu0 0.0
  %3410 = vmatmul.mubr.f32.gmra.mxu0 %v3248
  %v3411 = vpop.f32.mrf.mxu0
  %v3412 = vadd.f32 0.0, %v3411
  %v3413 = vpop.f32.mrf.mxu0
  %3414 = vmatprep.mubr.f32.mxu0 0.0
  %3415 = vmatmul.mubr.f32.gmra.mxu0 %v3251
  %v3416 = vpop.f32.mrf.mxu0
  %v3417 = vadd.f32 0.0, %v3416
  %v3418 = vpop.f32.mrf.mxu0
  %3419 = vmatprep.mubr.f32.mxu0 0.0
  %3420 = vmatmul.mubr.f32.gmra.mxu0 %v3254
  %v3421 = vpop.f32.mrf.mxu0
  %v3422 = vadd.f32 0.0, %v3421
  %v3423 = vpop.f32.mrf.mxu0
  %3424 = vmatprep.mubr.f32.mxu0 0.0
  %3425 = vmatmul.mubr.f32.gmra.mxu0 %v3257
  %v3426 = vpop.f32.mrf.mxu0
  %v3427 = vadd.f32 0.0, %v3426
  %v3428 = vpop.f32.mrf.mxu0
  %3429 = vmatprep.mubr.f32.mxu0 0.0
  %3430 = vmatmul.mubr.f32.gmra.mxu0 %v3260
  %v3431 = vpop.f32.mrf.mxu0
  %v3432 = vadd.f32 0.0, %v3431
  %v3433 = vpop.f32.mrf.mxu0
  %3434 = vmatprep.mubr.f32.mxu0 0.0
  %3435 = vmatmul.mubr.f32.gmra.mxu0 %v3263
  %v3436 = vpop.f32.mrf.mxu0
  %v3437 = vadd.f32 0.0, %v3436
  %v3438 = vpop.f32.mrf.mxu0
  %3439 = vmatprep.mubr.f32.mxu0 0.0
  %3440 = vmatmul.mubr.f32.gmra.mxu0 %v3266
  %v3441 = vpop.f32.mrf.mxu0
  %v3442 = vadd.f32 0.0, %v3441
  %v3443 = vpop.f32.mrf.mxu0
  %3444 = vmatprep.mubr.f32.mxu0 0.0
  %3445 = vmatmul.mubr.f32.gmra.mxu0 %v3269
  %v3446 = vpop.f32.mrf.mxu0
  %v3447 = vadd.f32 0.0, %v3446
  %v3448 = vpop.f32.mrf.mxu0
  %3449 = vmatprep.mubr.f32.mxu0 0.0
  %3450 = vmatmul.mubr.f32.gmra.mxu0 %v3272
  %v3451 = vpop.f32.mrf.mxu0
  %v3452 = vadd.f32 0.0, %v3451
  %v3453 = vpop.f32.mrf.mxu0
  %3454 = vmatprep.mubr.f32.mxu0 0.0
  %3455 = vmatmul.mubr.f32.gmra.mxu0 %v3275
  %v3456 = vpop.f32.mrf.mxu0
  %v3457 = vadd.f32 0.0, %v3456
  %v3458 = vpop.f32.mrf.mxu0
  %3459 = vmatprep.mubr.f32.mxu0 0.0
  %3460 = vmatmul.mubr.f32.gmra.mxu0 %v3278
  %v3461 = vpop.f32.mrf.mxu0
  %v3462 = vadd.f32 0.0, %v3461
  %v3463 = vpop.f32.mrf.mxu0
  %3464 = vmatprep.mubr.f32.mxu0 0.0
  %3465 = vmatmul.mubr.f32.gmra.mxu0 %v3281
  %v3466 = vpop.f32.mrf.mxu0
  %v3467 = vadd.f32 0.0, %v3466
  %v3468 = vpop.f32.mrf.mxu0
  %3469 = vmatprep.mubr.f32.mxu0 0.0
  %3470 = vmatmul.mubr.f32.gmra.mxu0 %v3284
  %v3471 = vpop.f32.mrf.mxu0
  %v3472 = vadd.f32 0.0, %v3471
  %v3473 = vpop.f32.mrf.mxu0
  %3474 = vmatprep.mubr.f32.mxu0 0.0
  %3475 = vmatmul.mubr.f32.gmra.mxu0 %v3287
  %v3476 = vpop.f32.mrf.mxu0
  %v3477 = vadd.f32 0.0, %v3476
  %v3478 = vpop.f32.mrf.mxu0
  %3479 = vmatprep.mubr.f32.mxu0 0.0
  %3480 = vmatmul.mubr.f32.gmra.mxu0 %v3290
  %v3481 = vpop.f32.mrf.mxu0
  %v3482 = vadd.f32 0.0, %v3481
  %v3483 = vpop.f32.mrf.mxu0
  %3484 = vmatprep.mubr.f32.mxu0 0.0
  %3485 = vmatmul.mubr.f32.gmra.mxu0 %v3293
  %v3486 = vpop.f32.mrf.mxu0
  %v3487 = vadd.f32 0.0, %v3486
  %v3488 = vpop.f32.mrf.mxu0
  %3489 = vmatprep.mubr.f32.mxu0 0.0
  %3490 = vmatmul.mubr.f32.gmra.mxu0 %v3296
  %v3491 = vpop.f32.mrf.mxu0
  %v3492 = vadd.f32 0.0, %v3491
  %v3493 = vpop.f32.mrf.mxu0
  %3494 = vmatprep.mubr.f32.mxu0 0.0
  %3495 = vmatmul.mubr.f32.gmra.mxu0 %v3299
  %v3496 = vpop.f32.mrf.mxu0
  %v3497 = vadd.f32 0.0, %v3496
  %v3498 = vpop.f32.mrf.mxu0
  %3499 = vmatprep.mubr.f32.mxu0 0.0
  %3500 = vmatmul.mubr.f32.gmra.mxu0 %v3302
  %v3501 = vpop.f32.mrf.mxu0
  %v3502 = vadd.f32 0.0, %v3501
  %v3503 = vpop.f32.mrf.mxu0
  %3504 = vmatprep.mubr.f32.mxu0 0.0
  %3505 = vmatmul.mubr.f32.gmra.mxu0 %v3305
  %v3506 = vpop.f32.mrf.mxu0
  %v3507 = vadd.f32 0.0, %v3506
  %v3508 = vpop.f32.mrf.mxu0
  %3509 = vmatprep.mubr.f32.mxu0 0.0
  %3510 = vmatmul.mubr.f32.gmra.mxu0 %v3308
  %v3511 = vpop.f32.mrf.mxu0
  %v3512 = vadd.f32 0.0, %v3511
  %v3513 = vpop.f32.mrf.mxu0
  %3514 = vmatprep.mubr.f32.mxu0 0.0
  %3515 = vmatmul.mubr.f32.gmra.mxu0 %v3311
  %v3516 = vpop.f32.mrf.mxu0
  %v3517 = vadd.f32 0.0, %v3516
  %v3518 = vpop.f32.mrf.mxu0
  %3519 = vmatprep.mubr.f32.mxu0 0.0
  %3520 = vmatmul.mubr.f32.gmra.mxu0 %v3314
  %v3521 = vpop.f32.mrf.mxu0
  %v3522 = vadd.f32 0.0, %v3521
  %v3523 = vpop.f32.mrf.mxu0
  %3524 = vmatprep.mubr.f32.mxu0 0.0
  %3525 = vmatmul.mubr.f32.gmra.mxu0 %v3317
  %v3526 = vpop.f32.mrf.mxu0
  %v3527 = vadd.f32 0.0, %v3526
  %v3528 = vpop.f32.mrf.mxu0
  %3529 = vmatprep.mubr.f32.mxu0 0.0
  %3530 = vmatmul.mubr.f32.gmra.mxu0 %v3320
  %v3531 = vpop.f32.mrf.mxu0
  %v3532 = vadd.f32 0.0, %v3531
  %v3533 = vpop.f32.mrf.mxu0
  %3534 = vmatprep.mubr.f32.mxu0 0.0
  %3535 = vmatmul.mubr.f32.gmra.mxu0 %v3323
  %v3536 = vpop.f32.mrf.mxu0
  %v3537 = vadd.f32 0.0, %v3536
  %v3538 = vpop.f32.mrf.mxu0
  %3539 = vmatprep.mubr.f32.mxu0 0.0
  %3540 = vmatmul.mubr.f32.gmra.mxu0 %v3326
  %v3541 = vpop.f32.mrf.mxu0
  %v3542 = vadd.f32 0.0, %v3541
  %v3543 = vpop.f32.mrf.mxu0
  %3544 = vmatprep.mubr.f32.mxu0 0.0
  %3545 = vmatmul.mubr.f32.gmra.mxu0 %v3329
  %v3546 = vpop.f32.mrf.mxu0
  %v3547 = vadd.f32 0.0, %v3546
  %v3548 = vpop.f32.mrf.mxu0
  %3549 = vmatprep.mubr.f32.mxu0 0.0
  %3550 = vmatmul.mubr.f32.gmra.mxu0 %v3332
  %v3551 = vpop.f32.mrf.mxu0
  %v3552 = vadd.f32 0.0, %v3551
  %v3553 = vpop.f32.mrf.mxu0
  %3554 = vmatprep.mubr.f32.mxu0 0.0
  %3555 = vmatmul.mubr.f32.gmra.mxu0 %v3335
  %v3556 = vpop.f32.mrf.mxu0
  %v3557 = vadd.f32 0.0, %v3556
  %v3558 = vpop.f32.mrf.mxu0
  %3559 = vmatprep.mubr.f32.mxu0 0.0
  %3560 = vmatmul.mubr.f32.gmra.mxu0 %v3338
  %v3561 = vpop.f32.mrf.mxu0
  %v3562 = vadd.f32 0.0, %v3561
  %v3563 = vpop.f32.mrf.mxu0
  %3564 = vdwg.mxu0
  %v3565 = vadd.f32 %v3049, %v3407
  %v3566 = vadd.f32 %v3054, %v3412
  %v3567 = vadd.f32 %v3059, %v3417
  %v3568 = vadd.f32 %v3064, %v3422
  %v3569 = vadd.f32 %v3069, %v3427
  %v3570 = vadd.f32 %v3074, %v3432
  %v3571 = vadd.f32 %v3079, %v3437
  %v3572 = vadd.f32 %v3084, %v3442
  %v3573 = vadd.f32 %v3089, %v3447
  %v3574 = vadd.f32 %v3094, %v3452
  %v3575 = vadd.f32 %v3099, %v3457
  %v3576 = vadd.f32 %v3104, %v3462
  %v3577 = vadd.f32 %v3109, %v3467
  %v3578 = vadd.f32 %v3114, %v3472
  %v3579 = vadd.f32 %v3119, %v3477
  %v3580 = vadd.f32 %v3124, %v3482
  %v3581 = vadd.f32 %v3129, %v3487
  %v3582 = vadd.f32 %v3134, %v3492
  %v3583 = vadd.f32 %v3139, %v3497
  %v3584 = vadd.f32 %v3144, %v3502
  %v3585 = vadd.f32 %v3149, %v3507
  %v3586 = vadd.f32 %v3154, %v3512
  %v3587 = vadd.f32 %v3159, %v3517
  %v3588 = vadd.f32 %v3164, %v3522
  %v3589 = vadd.f32 %v3169, %v3527
  %v3590 = vadd.f32 %v3174, %v3532
  %v3591 = vadd.f32 %v3179, %v3537
  %v3592 = vadd.f32 %v3184, %v3542
  %v3593 = vadd.f32 %v3189, %v3547
  %v3594 = vadd.f32 %v3194, %v3552
  %v3595 = vadd.f32 %v3199, %v3557
  %v3596 = vadd.f32 %v3204, %v3562
  %v3597 = vld [vmem:[#allocation2 + $0x3] sm:$0xff]
  %v3598 = vld [vmem:[#allocation2 + $0xb] sm:$0xff]
  %v3599 = vld [vmem:[#allocation2 + $0x1b] sm:$0xff]
  %v3600 = vld [vmem:[#allocation2 + $0x23] sm:$0xff]
  %v3601 = vld [vmem:[#allocation2 + $0x33] sm:$0xff]
  %v3602 = vld [vmem:[#allocation2 + $0x3b] sm:$0xff]
  %v3603 = vld [vmem:[#allocation2 + $0x4b] sm:$0xff]
  %v3604 = vld [vmem:[#allocation2 + $0x53] sm:$0xff]
  %v3605 = vld [vmem:[#allocation2 + $0x63] sm:$0xff]
  %v3606 = vld [vmem:[#allocation2 + $0x6b] sm:$0xff]
  %v3607 = vld [vmem:[#allocation2 + $0x7b] sm:$0xff]
  %v3608 = vld [vmem:[#allocation2 + $0x83] sm:$0xff]
  %v3609 = vld [vmem:[#allocation2 + $0x93] sm:$0xff]
  %v3610 = vld [vmem:[#allocation2 + $0x9b] sm:$0xff]
  %v3611 = vld [vmem:[#allocation2 + $0xab] sm:$0xff]
  %v3612 = vld [vmem:[#allocation2 + $0xb3] sm:$0xff]
  %v3613 = vld [vmem:[#allocation2 + $0xc3] sm:$0xff]
  %v3614 = vld [vmem:[#allocation2 + $0xcb] sm:$0xff]
  %v3615 = vld [vmem:[#allocation2 + $0xdb] sm:$0xff]
  %v3616 = vld [vmem:[#allocation2 + $0xe3] sm:$0xff]
  %v3617 = vld [vmem:[#allocation2 + $0xf3] sm:$0xff]
  %v3618 = vld [vmem:[#allocation2 + $0xfb] sm:$0xff]
  %v3619 = vld [vmem:[#allocation2 + $0x10b] sm:$0xff]
  %v3620 = vld [vmem:[#allocation2 + $0x113] sm:$0xff]
  %v3621 = vld [vmem:[#allocation2 + $0x123] sm:$0xff]
  %v3622 = vld [vmem:[#allocation2 + $0x12b] sm:$0xff]
  %v3623 = vld [vmem:[#allocation2 + $0x13b] sm:$0xff]
  %v3624 = vld [vmem:[#allocation2 + $0x143] sm:$0xff]
  %v3625 = vld [vmem:[#allocation2 + $0x153] sm:$0xff]
  %v3626 = vld [vmem:[#allocation2 + $0x15b] sm:$0xff]
  %v3627 = vld [vmem:[#allocation2 + $0x16b] sm:$0xff]
  %v3628 = vld [vmem:[#allocation2 + $0x173] sm:$0xff]
  %s3629 = scalar_lea.vmem %s5, 96
  %v3630 = vld [vmem:[%s3629] sm:$0xff]
  %v3631 = vld [vmem:[%s3629 + $0x8] sm:$0xff]
  %v3632 = vld [vmem:[%s3629 + $0x10] sm:$0xff]
  %v3633 = vld [vmem:[%s3629 + $0x18] sm:$0xff]
  %v3635 = vsel %vm471, %v3597, 0
  %v3638 = vsel %vm471, %v3598, 0
  %v3641 = vsel %vm471, %v3599, 0
  %v3644 = vsel %vm471, %v3600, 0
  %v3647 = vsel %vm471, %v3601, 0
  %v3650 = vsel %vm471, %v3602, 0
  %v3653 = vsel %vm471, %v3603, 0
  %v3656 = vsel %vm471, %v3604, 0
  %v3659 = vsel %vm471, %v3605, 0
  %v3662 = vsel %vm471, %v3606, 0
  %v3665 = vsel %vm471, %v3607, 0
  %v3668 = vsel %vm471, %v3608, 0
  %v3671 = vsel %vm471, %v3609, 0
  %v3674 = vsel %vm471, %v3610, 0
  %v3677 = vsel %vm471, %v3611, 0
  %v3680 = vsel %vm471, %v3612, 0
  %v3683 = vsel %vm471, %v3613, 0
  %v3686 = vsel %vm471, %v3614, 0
  %v3689 = vsel %vm471, %v3615, 0
  %v3692 = vsel %vm471, %v3616, 0
  %v3695 = vsel %vm471, %v3617, 0
  %v3698 = vsel %vm471, %v3618, 0
  %v3701 = vsel %vm471, %v3619, 0
  %v3704 = vsel %vm471, %v3620, 0
  %v3707 = vsel %vm471, %v3621, 0
  %v3710 = vsel %vm471, %v3622, 0
  %v3713 = vsel %vm471, %v3623, 0
  %v3716 = vsel %vm471, %v3624, 0
  %v3719 = vsel %vm471, %v3625, 0
  %v3722 = vsel %vm471, %v3626, 0
  %v3725 = vsel %vm471, %v3627, 0
  %v3728 = vsel %vm471, %v3628, 0
  %3730 = vmatprep.subr.mxu0 0.0
  %3731 = vmatpush1.msra.mxu0 0.0
  %3732 = vmatprep.subr.mxu0 0.0
  %3733 = vmatpush1.msra.mxu0 0.0
  %3734 = vmatprep.subr.mxu0 0.0
  %3735 = vmatpush1.msra.mxu0 0.0
  %3736 = vmatprep.subr.mxu0 0.0
  %3737 = vmatpush1.msra.mxu0 0.0
  %3738 = vmatprep.subr.mxu0 0.0
  %3739 = vmatpush1.msra.mxu0 0.0
  %3740 = vmatprep.subr.mxu0 0.0
  %3741 = vmatpush1.msra.mxu0 0.0
  %3742 = vmatprep.subr.mxu0 0.0
  %3743 = vmatpush1.msra.mxu0 0.0
  %3744 = vmatprep.subr.mxu0 0.0
  %3745 = vmatpush1.msra.mxu0 0.0
  %3746 = vmatprep.subr.mxu0 0.0
  %3747 = vmatpush1.msra.mxu0 0.0
  %3748 = vmatprep.subr.mxu0 0.0
  %3749 = vmatpush1.msra.mxu0 0.0
  %3750 = vmatprep.subr.mxu0 0.0
  %3751 = vmatpush1.msra.mxu0 0.0
  %3752 = vmatprep.subr.mxu0 0.0
  %3753 = vmatpush1.msra.mxu0 0.0
  %3754 = vmatprep.subr.mxu0 0.0
  %3755 = vmatpush1.msra.mxu0 %v3633
  %3756 = vmatprep.subr.mxu0 0.0
  %3757 = vmatpush1.msra.mxu0 %v3632
  %3758 = vmatprep.subr.mxu0 0.0
  %3759 = vmatpush1.msra.mxu0 %v3631
  %3760 = vmatprep.subr.mxu0 0.0
  %3761 = vmatpush1.msra.mxu0 %v3630
  %3762 = vmatprep.subr.mxu0 0.0
  %3763 = vmatpush2.msra.mxu0 0.0
  %3764 = vmatprep.subr.mxu0 0.0
  %3765 = vmatpush2.msra.mxu0 0.0
  %3766 = vmatprep.subr.mxu0 0.0
  %3767 = vmatpush2.msra.mxu0 0.0
  %3768 = vmatprep.subr.mxu0 0.0
  %3769 = vmatpush2.msra.mxu0 0.0
  %3770 = vmatprep.subr.mxu0 0.0
  %3771 = vmatpush2.msra.mxu0 0.0
  %3772 = vmatprep.subr.mxu0 0.0
  %3773 = vmatpush2.msra.mxu0 0.0
  %3774 = vmatprep.subr.mxu0 0.0
  %3775 = vmatpush2.msra.mxu0 0.0
  %3776 = vmatprep.subr.mxu0 0.0
  %3777 = vmatpush2.msra.mxu0 0.0
  %3778 = vmatprep.subr.mxu0 0.0
  %3779 = vmatpush2.msra.mxu0 0.0
  %3780 = vmatprep.subr.mxu0 0.0
  %3781 = vmatpush2.msra.mxu0 0.0
  %3782 = vmatprep.subr.mxu0 0.0
  %3783 = vmatpush2.msra.mxu0 0.0
  %3784 = vmatprep.subr.mxu0 0.0
  %3785 = vmatpush2.msra.mxu0 0.0
  %3786 = vmatprep.subr.mxu0 0.0
  %3787 = vmatpush2.msra.mxu0 0.0
  %3788 = vmatprep.subr.mxu0 0.0
  %3789 = vmatpush2.msra.mxu0 0.0
  %3790 = vmatprep.subr.mxu0 0.0
  %3791 = vmatpush2.msra.mxu0 0.0
  %3792 = vmatprep.subr.mxu0 0.0
  %3793 = vmatpush2.msra.mxu0 0.0
  %3794 = vmatprep.mubr.f32.mxu0 0.0
  %3795 = vmatmul.mubr.f32.gmra.mxu0 %v3635
  %v3796 = vpop.f32.mrf.mxu0
  %v3797 = vadd.f32 0.0, %v3796
  %v3798 = vpop.f32.mrf.mxu0
  %3799 = vmatprep.mubr.f32.mxu0 0.0
  %3800 = vmatmul.mubr.f32.gmra.mxu0 %v3638
  %v3801 = vpop.f32.mrf.mxu0
  %v3802 = vadd.f32 0.0, %v3801
  %v3803 = vpop.f32.mrf.mxu0
  %3804 = vmatprep.mubr.f32.mxu0 0.0
  %3805 = vmatmul.mubr.f32.gmra.mxu0 %v3641
  %v3806 = vpop.f32.mrf.mxu0
  %v3807 = vadd.f32 0.0, %v3806
  %v3808 = vpop.f32.mrf.mxu0
  %3809 = vmatprep.mubr.f32.mxu0 0.0
  %3810 = vmatmul.mubr.f32.gmra.mxu0 %v3644
  %v3811 = vpop.f32.mrf.mxu0
  %v3812 = vadd.f32 0.0, %v3811
  %v3813 = vpop.f32.mrf.mxu0
  %3814 = vmatprep.mubr.f32.mxu0 0.0
  %3815 = vmatmul.mubr.f32.gmra.mxu0 %v3647
  %v3816 = vpop.f32.mrf.mxu0
  %v3817 = vadd.f32 0.0, %v3816
  %v3818 = vpop.f32.mrf.mxu0
  %3819 = vmatprep.mubr.f32.mxu0 0.0
  %3820 = vmatmul.mubr.f32.gmra.mxu0 %v3650
  %v3821 = vpop.f32.mrf.mxu0
  %v3822 = vadd.f32 0.0, %v3821
  %v3823 = vpop.f32.mrf.mxu0
  %3824 = vmatprep.mubr.f32.mxu0 0.0
  %3825 = vmatmul.mubr.f32.gmra.mxu0 %v3653
  %v3826 = vpop.f32.mrf.mxu0
  %v3827 = vadd.f32 0.0, %v3826
  %v3828 = vpop.f32.mrf.mxu0
  %3829 = vmatprep.mubr.f32.mxu0 0.0
  %3830 = vmatmul.mubr.f32.gmra.mxu0 %v3656
  %v3831 = vpop.f32.mrf.mxu0
  %v3832 = vadd.f32 0.0, %v3831
  %v3833 = vpop.f32.mrf.mxu0
  %3834 = vmatprep.mubr.f32.mxu0 0.0
  %3835 = vmatmul.mubr.f32.gmra.mxu0 %v3659
  %v3836 = vpop.f32.mrf.mxu0
  %v3837 = vadd.f32 0.0, %v3836
  %v3838 = vpop.f32.mrf.mxu0
  %3839 = vmatprep.mubr.f32.mxu0 0.0
  %3840 = vmatmul.mubr.f32.gmra.mxu0 %v3662
  %v3841 = vpop.f32.mrf.mxu0
  %v3842 = vadd.f32 0.0, %v3841
  %v3843 = vpop.f32.mrf.mxu0
  %3844 = vmatprep.mubr.f32.mxu0 0.0
  %3845 = vmatmul.mubr.f32.gmra.mxu0 %v3665
  %v3846 = vpop.f32.mrf.mxu0
  %v3847 = vadd.f32 0.0, %v3846
  %v3848 = vpop.f32.mrf.mxu0
  %3849 = vmatprep.mubr.f32.mxu0 0.0
  %3850 = vmatmul.mubr.f32.gmra.mxu0 %v3668
  %v3851 = vpop.f32.mrf.mxu0
  %v3852 = vadd.f32 0.0, %v3851
  %v3853 = vpop.f32.mrf.mxu0
  %3854 = vmatprep.mubr.f32.mxu0 0.0
  %3855 = vmatmul.mubr.f32.gmra.mxu0 %v3671
  %v3856 = vpop.f32.mrf.mxu0
  %v3857 = vadd.f32 0.0, %v3856
  %v3858 = vpop.f32.mrf.mxu0
  %3859 = vmatprep.mubr.f32.mxu0 0.0
  %3860 = vmatmul.mubr.f32.gmra.mxu0 %v3674
  %v3861 = vpop.f32.mrf.mxu0
  %v3862 = vadd.f32 0.0, %v3861
  %v3863 = vpop.f32.mrf.mxu0
  %3864 = vmatprep.mubr.f32.mxu0 0.0
  %3865 = vmatmul.mubr.f32.gmra.mxu0 %v3677
  %v3866 = vpop.f32.mrf.mxu0
  %v3867 = vadd.f32 0.0, %v3866
  %v3868 = vpop.f32.mrf.mxu0
  %3869 = vmatprep.mubr.f32.mxu0 0.0
  %3870 = vmatmul.mubr.f32.gmra.mxu0 %v3680
  %v3871 = vpop.f32.mrf.mxu0
  %v3872 = vadd.f32 0.0, %v3871
  %v3873 = vpop.f32.mrf.mxu0
  %3874 = vmatprep.mubr.f32.mxu0 0.0
  %3875 = vmatmul.mubr.f32.gmra.mxu0 %v3683
  %v3876 = vpop.f32.mrf.mxu0
  %v3877 = vadd.f32 0.0, %v3876
  %v3878 = vpop.f32.mrf.mxu0
  %3879 = vmatprep.mubr.f32.mxu0 0.0
  %3880 = vmatmul.mubr.f32.gmra.mxu0 %v3686
  %v3881 = vpop.f32.mrf.mxu0
  %v3882 = vadd.f32 0.0, %v3881
  %v3883 = vpop.f32.mrf.mxu0
  %3884 = vmatprep.mubr.f32.mxu0 0.0
  %3885 = vmatmul.mubr.f32.gmra.mxu0 %v3689
  %v3886 = vpop.f32.mrf.mxu0
  %v3887 = vadd.f32 0.0, %v3886
  %v3888 = vpop.f32.mrf.mxu0
  %3889 = vmatprep.mubr.f32.mxu0 0.0
  %3890 = vmatmul.mubr.f32.gmra.mxu0 %v3692
  %v3891 = vpop.f32.mrf.mxu0
  %v3892 = vadd.f32 0.0, %v3891
  %v3893 = vpop.f32.mrf.mxu0
  %3894 = vmatprep.mubr.f32.mxu0 0.0
  %3895 = vmatmul.mubr.f32.gmra.mxu0 %v3695
  %v3896 = vpop.f32.mrf.mxu0
  %v3897 = vadd.f32 0.0, %v3896
  %v3898 = vpop.f32.mrf.mxu0
  %3899 = vmatprep.mubr.f32.mxu0 0.0
  %3900 = vmatmul.mubr.f32.gmra.mxu0 %v3698
  %v3901 = vpop.f32.mrf.mxu0
  %v3902 = vadd.f32 0.0, %v3901
  %v3903 = vpop.f32.mrf.mxu0
  %3904 = vmatprep.mubr.f32.mxu0 0.0
  %3905 = vmatmul.mubr.f32.gmra.mxu0 %v3701
  %v3906 = vpop.f32.mrf.mxu0
  %v3907 = vadd.f32 0.0, %v3906
  %v3908 = vpop.f32.mrf.mxu0
  %3909 = vmatprep.mubr.f32.mxu0 0.0
  %3910 = vmatmul.mubr.f32.gmra.mxu0 %v3704
  %v3911 = vpop.f32.mrf.mxu0
  %v3912 = vadd.f32 0.0, %v3911
  %v3913 = vpop.f32.mrf.mxu0
  %3914 = vmatprep.mubr.f32.mxu0 0.0
  %3915 = vmatmul.mubr.f32.gmra.mxu0 %v3707
  %v3916 = vpop.f32.mrf.mxu0
  %v3917 = vadd.f32 0.0, %v3916
  %v3918 = vpop.f32.mrf.mxu0
  %3919 = vmatprep.mubr.f32.mxu0 0.0
  %3920 = vmatmul.mubr.f32.gmra.mxu0 %v3710
  %v3921 = vpop.f32.mrf.mxu0
  %v3922 = vadd.f32 0.0, %v3921
  %v3923 = vpop.f32.mrf.mxu0
  %3924 = vmatprep.mubr.f32.mxu0 0.0
  %3925 = vmatmul.mubr.f32.gmra.mxu0 %v3713
  %v3926 = vpop.f32.mrf.mxu0
  %v3927 = vadd.f32 0.0, %v3926
  %v3928 = vpop.f32.mrf.mxu0
  %3929 = vmatprep.mubr.f32.mxu0 0.0
  %3930 = vmatmul.mubr.f32.gmra.mxu0 %v3716
  %v3931 = vpop.f32.mrf.mxu0
  %v3932 = vadd.f32 0.0, %v3931
  %v3933 = vpop.f32.mrf.mxu0
  %3934 = vmatprep.mubr.f32.mxu0 0.0
  %3935 = vmatmul.mubr.f32.gmra.mxu0 %v3719
  %v3936 = vpop.f32.mrf.mxu0
  %v3937 = vadd.f32 0.0, %v3936
  %v3938 = vpop.f32.mrf.mxu0
  %3939 = vmatprep.mubr.f32.mxu0 0.0
  %3940 = vmatmul.mubr.f32.gmra.mxu0 %v3722
  %v3941 = vpop.f32.mrf.mxu0
  %v3942 = vadd.f32 0.0, %v3941
  %v3943 = vpop.f32.mrf.mxu0
  %3944 = vmatprep.mubr.f32.mxu0 0.0
  %3945 = vmatmul.mubr.f32.gmra.mxu0 %v3725
  %v3946 = vpop.f32.mrf.mxu0
  %v3947 = vadd.f32 0.0, %v3946
  %v3948 = vpop.f32.mrf.mxu0
  %3949 = vmatprep.mubr.f32.mxu0 0.0
  %3950 = vmatmul.mubr.f32.gmra.mxu0 %v3728
  %v3951 = vpop.f32.mrf.mxu0
  %v3952 = vadd.f32 0.0, %v3951
  %v3953 = vpop.f32.mrf.mxu0
  %3954 = vdwg.mxu0
  %v3955 = vadd.f32 %v3565, %v3797
  %v3956 = vadd.f32 %v3566, %v3802
  %v3957 = vadd.f32 %v3567, %v3807
  %v3958 = vadd.f32 %v3568, %v3812
  %v3959 = vadd.f32 %v3569, %v3817
  %v3960 = vadd.f32 %v3570, %v3822
  %v3961 = vadd.f32 %v3571, %v3827
  %v3962 = vadd.f32 %v3572, %v3832
  %v3963 = vadd.f32 %v3573, %v3837
  %v3964 = vadd.f32 %v3574, %v3842
  %v3965 = vadd.f32 %v3575, %v3847
  %v3966 = vadd.f32 %v3576, %v3852
  %v3967 = vadd.f32 %v3577, %v3857
  %v3968 = vadd.f32 %v3578, %v3862
  %v3969 = vadd.f32 %v3579, %v3867
  %v3970 = vadd.f32 %v3580, %v3872
  %v3971 = vadd.f32 %v3581, %v3877
  %v3972 = vadd.f32 %v3582, %v3882
  %v3973 = vadd.f32 %v3583, %v3887
  %v3974 = vadd.f32 %v3584, %v3892
  %v3975 = vadd.f32 %v3585, %v3897
  %v3976 = vadd.f32 %v3586, %v3902
  %v3977 = vadd.f32 %v3587, %v3907
  %v3978 = vadd.f32 %v3588, %v3912
  %v3979 = vadd.f32 %v3589, %v3917
  %v3980 = vadd.f32 %v3590, %v3922
  %v3981 = vadd.f32 %v3591, %v3927
  %v3982 = vadd.f32 %v3592, %v3932
  %v3983 = vadd.f32 %v3593, %v3937
  %v3984 = vadd.f32 %v3594, %v3942
  %v3985 = vadd.f32 %v3595, %v3947
  %v3986 = vadd.f32 %v3596, %v3952
  %v3987 = vld [vmem:[#allocation2 + $0x4] sm:$0xff]
  %v3988 = vld [vmem:[#allocation2 + $0xc] sm:$0xff]
  %v3989 = vld [vmem:[#allocation2 + $0x1c] sm:$0xff]
  %v3990 = vld [vmem:[#allocation2 + $0x24] sm:$0xff]
  %v3991 = vld [vmem:[#allocation2 + $0x34] sm:$0xff]
  %v3992 = vld [vmem:[#allocation2 + $0x3c] sm:$0xff]
  %v3993 = vld [vmem:[#allocation2 + $0x4c] sm:$0xff]
  %v3994 = vld [vmem:[#allocation2 + $0x54] sm:$0xff]
  %v3995 = vld [vmem:[#allocation2 + $0x64] sm:$0xff]
  %v3996 = vld [vmem:[#allocation2 + $0x6c] sm:$0xff]
  %v3997 = vld [vmem:[#allocation2 + $0x7c] sm:$0xff]
  %v3998 = vld [vmem:[#allocation2 + $0x84] sm:$0xff]
  %v3999 = vld [vmem:[#allocation2 + $0x94] sm:$0xff]
  %v4000 = vld [vmem:[#allocation2 + $0x9c] sm:$0xff]
  %v4001 = vld [vmem:[#allocation2 + $0xac] sm:$0xff]
  %v4002 = vld [vmem:[#allocation2 + $0xb4] sm:$0xff]
  %v4003 = vld [vmem:[#allocation2 + $0xc4] sm:$0xff]
  %v4004 = vld [vmem:[#allocation2 + $0xcc] sm:$0xff]
  %v4005 = vld [vmem:[#allocation2 + $0xdc] sm:$0xff]
  %v4006 = vld [vmem:[#allocation2 + $0xe4] sm:$0xff]
  %v4007 = vld [vmem:[#allocation2 + $0xf4] sm:$0xff]
  %v4008 = vld [vmem:[#allocation2 + $0xfc] sm:$0xff]
  %v4009 = vld [vmem:[#allocation2 + $0x10c] sm:$0xff]
  %v4010 = vld [vmem:[#allocation2 + $0x114] sm:$0xff]
  %v4011 = vld [vmem:[#allocation2 + $0x124] sm:$0xff]
  %v4012 = vld [vmem:[#allocation2 + $0x12c] sm:$0xff]
  %v4013 = vld [vmem:[#allocation2 + $0x13c] sm:$0xff]
  %v4014 = vld [vmem:[#allocation2 + $0x144] sm:$0xff]
  %v4015 = vld [vmem:[#allocation2 + $0x154] sm:$0xff]
  %v4016 = vld [vmem:[#allocation2 + $0x15c] sm:$0xff]
  %v4017 = vld [vmem:[#allocation2 + $0x16c] sm:$0xff]
  %v4018 = vld [vmem:[#allocation2 + $0x174] sm:$0xff]
  %s4019 = scalar_lea.vmem %s5, 128
  %v4020 = vld [vmem:[%s4019] sm:$0xff]
  %v4021 = vld [vmem:[%s4019 + $0x8] sm:$0xff]
  %v4022 = vld [vmem:[%s4019 + $0x10] sm:$0xff]
  %v4023 = vld [vmem:[%s4019 + $0x18] sm:$0xff]
  %v4025 = vsel %vm471, %v3987, 0
  %v4028 = vsel %vm471, %v3988, 0
  %v4031 = vsel %vm471, %v3989, 0
  %v4034 = vsel %vm471, %v3990, 0
  %v4037 = vsel %vm471, %v3991, 0
  %v4040 = vsel %vm471, %v3992, 0
  %v4043 = vsel %vm471, %v3993, 0
  %v4046 = vsel %vm471, %v3994, 0
  %v4049 = vsel %vm471, %v3995, 0
  %v4052 = vsel %vm471, %v3996, 0
  %v4055 = vsel %vm471, %v3997, 0
  %v4058 = vsel %vm471, %v3998, 0
  %v4061 = vsel %vm471, %v3999, 0
  %v4064 = vsel %vm471, %v4000, 0
  %v4067 = vsel %vm471, %v4001, 0
  %v4070 = vsel %vm471, %v4002, 0
  %v4073 = vsel %vm471, %v4003, 0
  %v4076 = vsel %vm471, %v4004, 0
  %v4079 = vsel %vm471, %v4005, 0
  %v4082 = vsel %vm471, %v4006, 0
  %v4085 = vsel %vm471, %v4007, 0
  %v4088 = vsel %vm471, %v4008, 0
  %v4091 = vsel %vm471, %v4009, 0
  %v4094 = vsel %vm471, %v4010, 0
  %v4097 = vsel %vm471, %v4011, 0
  %v4100 = vsel %vm471, %v4012, 0
  %v4103 = vsel %vm471, %v4013, 0
  %v4106 = vsel %vm471, %v4014, 0
  %v4109 = vsel %vm471, %v4015, 0
  %v4112 = vsel %vm471, %v4016, 0
  %v4115 = vsel %vm471, %v4017, 0
  %v4118 = vsel %vm471, %v4018, 0
  %4120 = vmatprep.subr.mxu0 0.0
  %4121 = vmatpush1.msra.mxu0 0.0
  %4122 = vmatprep.subr.mxu0 0.0
  %4123 = vmatpush1.msra.mxu0 0.0
  %4124 = vmatprep.subr.mxu0 0.0
  %4125 = vmatpush1.msra.mxu0 0.0
  %4126 = vmatprep.subr.mxu0 0.0
  %4127 = vmatpush1.msra.mxu0 0.0
  %4128 = vmatprep.subr.mxu0 0.0
  %4129 = vmatpush1.msra.mxu0 0.0
  %4130 = vmatprep.subr.mxu0 0.0
  %4131 = vmatpush1.msra.mxu0 0.0
  %4132 = vmatprep.subr.mxu0 0.0
  %4133 = vmatpush1.msra.mxu0 0.0
  %4134 = vmatprep.subr.mxu0 0.0
  %4135 = vmatpush1.msra.mxu0 0.0
  %4136 = vmatprep.subr.mxu0 0.0
  %4137 = vmatpush1.msra.mxu0 0.0
  %4138 = vmatprep.subr.mxu0 0.0
  %4139 = vmatpush1.msra.mxu0 0.0
  %4140 = vmatprep.subr.mxu0 0.0
  %4141 = vmatpush1.msra.mxu0 0.0
  %4142 = vmatprep.subr.mxu0 0.0
  %4143 = vmatpush1.msra.mxu0 0.0
  %4144 = vmatprep.subr.mxu0 0.0
  %4145 = vmatpush1.msra.mxu0 %v4023
  %4146 = vmatprep.subr.mxu0 0.0
  %4147 = vmatpush1.msra.mxu0 %v4022
  %4148 = vmatprep.subr.mxu0 0.0
  %4149 = vmatpush1.msra.mxu0 %v4021
  %4150 = vmatprep.subr.mxu0 0.0
  %4151 = vmatpush1.msra.mxu0 %v4020
  %4152 = vmatprep.subr.mxu0 0.0
  %4153 = vmatpush2.msra.mxu0 0.0
  %4154 = vmatprep.subr.mxu0 0.0
  %4155 = vmatpush2.msra.mxu0 0.0
  %4156 = vmatprep.subr.mxu0 0.0
  %4157 = vmatpush2.msra.mxu0 0.0
  %4158 = vmatprep.subr.mxu0 0.0
  %4159 = vmatpush2.msra.mxu0 0.0
  %4160 = vmatprep.subr.mxu0 0.0
  %4161 = vmatpush2.msra.mxu0 0.0
  %4162 = vmatprep.subr.mxu0 0.0
  %4163 = vmatpush2.msra.mxu0 0.0
  %4164 = vmatprep.subr.mxu0 0.0
  %4165 = vmatpush2.msra.mxu0 0.0
  %4166 = vmatprep.subr.mxu0 0.0
  %4167 = vmatpush2.msra.mxu0 0.0
  %4168 = vmatprep.subr.mxu0 0.0
  %4169 = vmatpush2.msra.mxu0 0.0
  %4170 = vmatprep.subr.mxu0 0.0
  %4171 = vmatpush2.msra.mxu0 0.0
  %4172 = vmatprep.subr.mxu0 0.0
  %4173 = vmatpush2.msra.mxu0 0.0
  %4174 = vmatprep.subr.mxu0 0.0
  %4175 = vmatpush2.msra.mxu0 0.0
  %4176 = vmatprep.subr.mxu0 0.0
  %4177 = vmatpush2.msra.mxu0 0.0
  %4178 = vmatprep.subr.mxu0 0.0
  %4179 = vmatpush2.msra.mxu0 0.0
  %4180 = vmatprep.subr.mxu0 0.0
  %4181 = vmatpush2.msra.mxu0 0.0
  %4182 = vmatprep.subr.mxu0 0.0
  %4183 = vmatpush2.msra.mxu0 0.0
  %4184 = vmatprep.mubr.f32.mxu0 0.0
  %4185 = vmatmul.mubr.f32.gmra.mxu0 %v4025
  %v4186 = vpop.f32.mrf.mxu0
  %v4187 = vadd.f32 0.0, %v4186
  %v4188 = vpop.f32.mrf.mxu0
  %4189 = vmatprep.mubr.f32.mxu0 0.0
  %4190 = vmatmul.mubr.f32.gmra.mxu0 %v4028
  %v4191 = vpop.f32.mrf.mxu0
  %v4192 = vadd.f32 0.0, %v4191
  %v4193 = vpop.f32.mrf.mxu0
  %4194 = vmatprep.mubr.f32.mxu0 0.0
  %4195 = vmatmul.mubr.f32.gmra.mxu0 %v4031
  %v4196 = vpop.f32.mrf.mxu0
  %v4197 = vadd.f32 0.0, %v4196
  %v4198 = vpop.f32.mrf.mxu0
  %4199 = vmatprep.mubr.f32.mxu0 0.0
  %4200 = vmatmul.mubr.f32.gmra.mxu0 %v4034
  %v4201 = vpop.f32.mrf.mxu0
  %v4202 = vadd.f32 0.0, %v4201
  %v4203 = vpop.f32.mrf.mxu0
  %4204 = vmatprep.mubr.f32.mxu0 0.0
  %4205 = vmatmul.mubr.f32.gmra.mxu0 %v4037
  %v4206 = vpop.f32.mrf.mxu0
  %v4207 = vadd.f32 0.0, %v4206
  %v4208 = vpop.f32.mrf.mxu0
  %4209 = vmatprep.mubr.f32.mxu0 0.0
  %4210 = vmatmul.mubr.f32.gmra.mxu0 %v4040
  %v4211 = vpop.f32.mrf.mxu0
  %v4212 = vadd.f32 0.0, %v4211
  %v4213 = vpop.f32.mrf.mxu0
  %4214 = vmatprep.mubr.f32.mxu0 0.0
  %4215 = vmatmul.mubr.f32.gmra.mxu0 %v4043
  %v4216 = vpop.f32.mrf.mxu0
  %v4217 = vadd.f32 0.0, %v4216
  %v4218 = vpop.f32.mrf.mxu0
  %4219 = vmatprep.mubr.f32.mxu0 0.0
  %4220 = vmatmul.mubr.f32.gmra.mxu0 %v4046
  %v4221 = vpop.f32.mrf.mxu0
  %v4222 = vadd.f32 0.0, %v4221
  %v4223 = vpop.f32.mrf.mxu0
  %4224 = vmatprep.mubr.f32.mxu0 0.0
  %4225 = vmatmul.mubr.f32.gmra.mxu0 %v4049
  %v4226 = vpop.f32.mrf.mxu0
  %v4227 = vadd.f32 0.0, %v4226
  %v4228 = vpop.f32.mrf.mxu0
  %4229 = vmatprep.mubr.f32.mxu0 0.0
  %4230 = vmatmul.mubr.f32.gmra.mxu0 %v4052
  %v4231 = vpop.f32.mrf.mxu0
  %v4232 = vadd.f32 0.0, %v4231
  %v4233 = vpop.f32.mrf.mxu0
  %4234 = vmatprep.mubr.f32.mxu0 0.0
  %4235 = vmatmul.mubr.f32.gmra.mxu0 %v4055
  %v4236 = vpop.f32.mrf.mxu0
  %v4237 = vadd.f32 0.0, %v4236
  %v4238 = vpop.f32.mrf.mxu0
  %4239 = vmatprep.mubr.f32.mxu0 0.0
  %4240 = vmatmul.mubr.f32.gmra.mxu0 %v4058
  %v4241 = vpop.f32.mrf.mxu0
  %v4242 = vadd.f32 0.0, %v4241
  %v4243 = vpop.f32.mrf.mxu0
  %4244 = vmatprep.mubr.f32.mxu0 0.0
  %4245 = vmatmul.mubr.f32.gmra.mxu0 %v4061
  %v4246 = vpop.f32.mrf.mxu0
  %v4247 = vadd.f32 0.0, %v4246
  %v4248 = vpop.f32.mrf.mxu0
  %4249 = vmatprep.mubr.f32.mxu0 0.0
  %4250 = vmatmul.mubr.f32.gmra.mxu0 %v4064
  %v4251 = vpop.f32.mrf.mxu0
  %v4252 = vadd.f32 0.0, %v4251
  %v4253 = vpop.f32.mrf.mxu0
  %4254 = vmatprep.mubr.f32.mxu0 0.0
  %4255 = vmatmul.mubr.f32.gmra.mxu0 %v4067
  %v4256 = vpop.f32.mrf.mxu0
  %v4257 = vadd.f32 0.0, %v4256
  %v4258 = vpop.f32.mrf.mxu0
  %4259 = vmatprep.mubr.f32.mxu0 0.0
  %4260 = vmatmul.mubr.f32.gmra.mxu0 %v4070
  %v4261 = vpop.f32.mrf.mxu0
  %v4262 = vadd.f32 0.0, %v4261
  %v4263 = vpop.f32.mrf.mxu0
  %4264 = vmatprep.mubr.f32.mxu0 0.0
  %4265 = vmatmul.mubr.f32.gmra.mxu0 %v4073
  %v4266 = vpop.f32.mrf.mxu0
  %v4267 = vadd.f32 0.0, %v4266
  %v4268 = vpop.f32.mrf.mxu0
  %4269 = vmatprep.mubr.f32.mxu0 0.0
  %4270 = vmatmul.mubr.f32.gmra.mxu0 %v4076
  %v4271 = vpop.f32.mrf.mxu0
  %v4272 = vadd.f32 0.0, %v4271
  %v4273 = vpop.f32.mrf.mxu0
  %4274 = vmatprep.mubr.f32.mxu0 0.0
  %4275 = vmatmul.mubr.f32.gmra.mxu0 %v4079
  %v4276 = vpop.f32.mrf.mxu0
  %v4277 = vadd.f32 0.0, %v4276
  %v4278 = vpop.f32.mrf.mxu0
  %4279 = vmatprep.mubr.f32.mxu0 0.0
  %4280 = vmatmul.mubr.f32.gmra.mxu0 %v4082
  %v4281 = vpop.f32.mrf.mxu0
  %v4282 = vadd.f32 0.0, %v4281
  %v4283 = vpop.f32.mrf.mxu0
  %4284 = vmatprep.mubr.f32.mxu0 0.0
  %4285 = vmatmul.mubr.f32.gmra.mxu0 %v4085
  %v4286 = vpop.f32.mrf.mxu0
  %v4287 = vadd.f32 0.0, %v4286
  %v4288 = vpop.f32.mrf.mxu0
  %4289 = vmatprep.mubr.f32.mxu0 0.0
  %4290 = vmatmul.mubr.f32.gmra.mxu0 %v4088
  %v4291 = vpop.f32.mrf.mxu0
  %v4292 = vadd.f32 0.0, %v4291
  %v4293 = vpop.f32.mrf.mxu0
  %4294 = vmatprep.mubr.f32.mxu0 0.0
  %4295 = vmatmul.mubr.f32.gmra.mxu0 %v4091
  %v4296 = vpop.f32.mrf.mxu0
  %v4297 = vadd.f32 0.0, %v4296
  %v4298 = vpop.f32.mrf.mxu0
  %4299 = vmatprep.mubr.f32.mxu0 0.0
  %4300 = vmatmul.mubr.f32.gmra.mxu0 %v4094
  %v4301 = vpop.f32.mrf.mxu0
  %v4302 = vadd.f32 0.0, %v4301
  %v4303 = vpop.f32.mrf.mxu0
  %4304 = vmatprep.mubr.f32.mxu0 0.0
  %4305 = vmatmul.mubr.f32.gmra.mxu0 %v4097
  %v4306 = vpop.f32.mrf.mxu0
  %v4307 = vadd.f32 0.0, %v4306
  %v4308 = vpop.f32.mrf.mxu0
  %4309 = vmatprep.mubr.f32.mxu0 0.0
  %4310 = vmatmul.mubr.f32.gmra.mxu0 %v4100
  %v4311 = vpop.f32.mrf.mxu0
  %v4312 = vadd.f32 0.0, %v4311
  %v4313 = vpop.f32.mrf.mxu0
  %4314 = vmatprep.mubr.f32.mxu0 0.0
  %4315 = vmatmul.mubr.f32.gmra.mxu0 %v4103
  %v4316 = vpop.f32.mrf.mxu0
  %v4317 = vadd.f32 0.0, %v4316
  %v4318 = vpop.f32.mrf.mxu0
  %4319 = vmatprep.mubr.f32.mxu0 0.0
  %4320 = vmatmul.mubr.f32.gmra.mxu0 %v4106
  %v4321 = vpop.f32.mrf.mxu0
  %v4322 = vadd.f32 0.0, %v4321
  %v4323 = vpop.f32.mrf.mxu0
  %4324 = vmatprep.mubr.f32.mxu0 0.0
  %4325 = vmatmul.mubr.f32.gmra.mxu0 %v4109
  %v4326 = vpop.f32.mrf.mxu0
  %v4327 = vadd.f32 0.0, %v4326
  %v4328 = vpop.f32.mrf.mxu0
  %4329 = vmatprep.mubr.f32.mxu0 0.0
  %4330 = vmatmul.mubr.f32.gmra.mxu0 %v4112
  %v4331 = vpop.f32.mrf.mxu0
  %v4332 = vadd.f32 0.0, %v4331
  %v4333 = vpop.f32.mrf.mxu0
  %4334 = vmatprep.mubr.f32.mxu0 0.0
  %4335 = vmatmul.mubr.f32.gmra.mxu0 %v4115
  %v4336 = vpop.f32.mrf.mxu0
  %v4337 = vadd.f32 0.0, %v4336
  %v4338 = vpop.f32.mrf.mxu0
  %4339 = vmatprep.mubr.f32.mxu0 0.0
  %4340 = vmatmul.mubr.f32.gmra.mxu0 %v4118
  %v4341 = vpop.f32.mrf.mxu0
  %v4342 = vadd.f32 0.0, %v4341
  %v4343 = vpop.f32.mrf.mxu0
  %4344 = vdwg.mxu0
  %v4345 = vadd.f32 %v3955, %v4187
  %v4346 = vadd.f32 %v3956, %v4192
  %v4347 = vadd.f32 %v3957, %v4197
  %v4348 = vadd.f32 %v3958, %v4202
  %v4349 = vadd.f32 %v3959, %v4207
  %v4350 = vadd.f32 %v3960, %v4212
  %v4351 = vadd.f32 %v3961, %v4217
  %v4352 = vadd.f32 %v3962, %v4222
  %v4353 = vadd.f32 %v3963, %v4227
  %v4354 = vadd.f32 %v3964, %v4232
  %v4355 = vadd.f32 %v3965, %v4237
  %v4356 = vadd.f32 %v3966, %v4242
  %v4357 = vadd.f32 %v3967, %v4247
  %v4358 = vadd.f32 %v3968, %v4252
  %v4359 = vadd.f32 %v3969, %v4257
  %v4360 = vadd.f32 %v3970, %v4262
  %v4361 = vadd.f32 %v3971, %v4267
  %v4362 = vadd.f32 %v3972, %v4272
  %v4363 = vadd.f32 %v3973, %v4277
  %v4364 = vadd.f32 %v3974, %v4282
  %v4365 = vadd.f32 %v3975, %v4287
  %v4366 = vadd.f32 %v3976, %v4292
  %v4367 = vadd.f32 %v3977, %v4297
  %v4368 = vadd.f32 %v3978, %v4302
  %v4369 = vadd.f32 %v3979, %v4307
  %v4370 = vadd.f32 %v3980, %v4312
  %v4371 = vadd.f32 %v3981, %v4317
  %v4372 = vadd.f32 %v3982, %v4322
  %v4373 = vadd.f32 %v3983, %v4327
  %v4374 = vadd.f32 %v3984, %v4332
  %v4375 = vadd.f32 %v3985, %v4337
  %v4376 = vadd.f32 %v3986, %v4342
  %v4377 = vld [vmem:[%s6] sm:$0x1]
  %v4379 = vlaneseq
  %v4380 = vshrl.u32 %v4379, 7
  %v4381 = vsub.s32 0, %v4380
  %v4382 = vrot.slane %v4377, %v4381
  %v4384 = vadd.f32 %v4345, %v4382
  %v4385 = vadd.f32 %v4346, %v4382
  %v4386 = vadd.f32 %v4347, %v4382
  %v4387 = vadd.f32 %v4348, %v4382
  %v4388 = vadd.f32 %v4349, %v4382
  %v4389 = vadd.f32 %v4350, %v4382
  %v4390 = vadd.f32 %v4351, %v4382
  %v4391 = vadd.f32 %v4352, %v4382
  %v4392 = vadd.f32 %v4353, %v4382
  %v4393 = vadd.f32 %v4354, %v4382
  %v4394 = vadd.f32 %v4355, %v4382
  %v4395 = vadd.f32 %v4356, %v4382
  %v4396 = vadd.f32 %v4357, %v4382
  %v4397 = vadd.f32 %v4358, %v4382
  %v4398 = vadd.f32 %v4359, %v4382
  %v4399 = vadd.f32 %v4360, %v4382
  %v4400 = vadd.f32 %v4361, %v4382
  %v4401 = vadd.f32 %v4362, %v4382
  %v4402 = vadd.f32 %v4363, %v4382
  %v4403 = vadd.f32 %v4364, %v4382
  %v4404 = vadd.f32 %v4365, %v4382
  %v4405 = vadd.f32 %v4366, %v4382
  %v4406 = vadd.f32 %v4367, %v4382
  %v4407 = vadd.f32 %v4368, %v4382
  %v4408 = vadd.f32 %v4369, %v4382
  %v4409 = vadd.f32 %v4370, %v4382
  %v4410 = vadd.f32 %v4371, %v4382
  %v4411 = vadd.f32 %v4372, %v4382
  %v4412 = vadd.f32 %v4373, %v4382
  %v4413 = vadd.f32 %v4374, %v4382
  %v4414 = vadd.f32 %v4375, %v4382
  %v4415 = vadd.f32 %v4376, %v4382
  %v4416 = vmax.f32 %v4384, 0.0
  %v4417 = vmax.f32 %v4385, 0.0
  %v4418 = vmax.f32 %v4386, 0.0
  %v4419 = vmax.f32 %v4387, 0.0
  %v4420 = vmax.f32 %v4388, 0.0
  %v4421 = vmax.f32 %v4389, 0.0
  %v4422 = vmax.f32 %v4390, 0.0
  %v4423 = vmax.f32 %v4391, 0.0
  %v4424 = vmax.f32 %v4392, 0.0
  %v4425 = vmax.f32 %v4393, 0.0
  %v4426 = vmax.f32 %v4394, 0.0
  %v4427 = vmax.f32 %v4395, 0.0
  %v4428 = vmax.f32 %v4396, 0.0
  %v4429 = vmax.f32 %v4397, 0.0
  %v4430 = vmax.f32 %v4398, 0.0
  %v4431 = vmax.f32 %v4399, 0.0
  %v4432 = vmax.f32 %v4400, 0.0
  %v4433 = vmax.f32 %v4401, 0.0
  %v4434 = vmax.f32 %v4402, 0.0
  %v4435 = vmax.f32 %v4403, 0.0
  %v4436 = vmax.f32 %v4404, 0.0
  %v4437 = vmax.f32 %v4405, 0.0
  %v4438 = vmax.f32 %v4406, 0.0
  %v4439 = vmax.f32 %v4407, 0.0
  %v4440 = vmax.f32 %v4408, 0.0
  %v4441 = vmax.f32 %v4409, 0.0
  %v4442 = vmax.f32 %v4410, 0.0
  %v4443 = vmax.f32 %v4411, 0.0
  %v4444 = vmax.f32 %v4412, 0.0
  %v4445 = vmax.f32 %v4413, 0.0
  %v4446 = vmax.f32 %v4414, 0.0
  %v4447 = vmax.f32 %v4415, 0.0
  %v4448 = vld [vmem:[%s7] sm:$0xff]
  %v4449 = vld [vmem:[%s7 + $0x8] sm:$0xff]
  %v4450 = vld [vmem:[%s7 + $0x10] sm:$0xff]
  %v4451 = vld [vmem:[%s7 + $0x18] sm:$0xff]
  %v4452 = vld [vmem:[%s8] sm:$0x1]
  %v4454 = vlaneseq
  %v4455 = vshrl.u32 %v4454, 7
  %v4456 = vsub.s32 0, %v4455
  %v4457 = vrot.slane %v4452, %v4456
  %v4460 = vsel %vm471, %v4416, 0
  %v4463 = vsel %vm471, %v4417, 0
  %v4466 = vsel %vm471, %v4418, 0
  %v4469 = vsel %vm471, %v4419, 0
  %v4472 = vsel %vm471, %v4420, 0
  %v4475 = vsel %vm471, %v4421, 0
  %v4478 = vsel %vm471, %v4422, 0
  %v4481 = vsel %vm471, %v4423, 0
  %v4484 = vsel %vm471, %v4424, 0
  %v4487 = vsel %vm471, %v4425, 0
  %v4490 = vsel %vm471, %v4426, 0
  %v4493 = vsel %vm471, %v4427, 0
  %v4496 = vsel %vm471, %v4428, 0
  %v4499 = vsel %vm471, %v4429, 0
  %v4502 = vsel %vm471, %v4430, 0
  %v4505 = vsel %vm471, %v4431, 0
  %v4508 = vsel %vm471, %v4432, 0
  %v4511 = vsel %vm471, %v4433, 0
  %v4514 = vsel %vm471, %v4434, 0
  %v4517 = vsel %vm471, %v4435, 0
  %v4520 = vsel %vm471, %v4436, 0
  %v4523 = vsel %vm471, %v4437, 0
  %v4526 = vsel %vm471, %v4438, 0
  %v4529 = vsel %vm471, %v4439, 0
  %v4532 = vsel %vm471, %v4440, 0
  %v4535 = vsel %vm471, %v4441, 0
  %v4538 = vsel %vm471, %v4442, 0
  %v4541 = vsel %vm471, %v4443, 0
  %v4544 = vsel %vm471, %v4444, 0
  %v4547 = vsel %vm471, %v4445, 0
  %v4550 = vsel %vm471, %v4446, 0
  %v4553 = vsel %vm471, %v4447, 0
  %4555 = vmatprep.subr.mxu0 0.0
  %4556 = vmatpush1.msra.mxu0 0.0
  %4557 = vmatprep.subr.mxu0 0.0
  %4558 = vmatpush1.msra.mxu0 0.0
  %4559 = vmatprep.subr.mxu0 0.0
  %4560 = vmatpush1.msra.mxu0 0.0
  %4561 = vmatprep.subr.mxu0 0.0
  %4562 = vmatpush1.msra.mxu0 0.0
  %4563 = vmatprep.subr.mxu0 0.0
  %4564 = vmatpush1.msra.mxu0 0.0
  %4565 = vmatprep.subr.mxu0 0.0
  %4566 = vmatpush1.msra.mxu0 0.0
  %4567 = vmatprep.subr.mxu0 0.0
  %4568 = vmatpush1.msra.mxu0 0.0
  %4569 = vmatprep.subr.mxu0 0.0
  %4570 = vmatpush1.msra.mxu0 0.0
  %4571 = vmatprep.subr.mxu0 0.0
  %4572 = vmatpush1.msra.mxu0 0.0
  %4573 = vmatprep.subr.mxu0 0.0
  %4574 = vmatpush1.msra.mxu0 0.0
  %4575 = vmatprep.subr.mxu0 0.0
  %4576 = vmatpush1.msra.mxu0 0.0
  %4577 = vmatprep.subr.mxu0 0.0
  %4578 = vmatpush1.msra.mxu0 0.0
  %4579 = vmatprep.subr.mxu0 0.0
  %4580 = vmatpush1.msra.mxu0 %v4451
  %4581 = vmatprep.subr.mxu0 0.0
  %4582 = vmatpush1.msra.mxu0 %v4450
  %4583 = vmatprep.subr.mxu0 0.0
  %4584 = vmatpush1.msra.mxu0 %v4449
  %4585 = vmatprep.subr.mxu0 0.0
  %4586 = vmatpush1.msra.mxu0 %v4448
  %4587 = vmatprep.subr.mxu0 0.0
  %4588 = vmatpush2.msra.mxu0 0.0
  %4589 = vmatprep.subr.mxu0 0.0
  %4590 = vmatpush2.msra.mxu0 0.0
  %4591 = vmatprep.subr.mxu0 0.0
  %4592 = vmatpush2.msra.mxu0 0.0
  %4593 = vmatprep.subr.mxu0 0.0
  %4594 = vmatpush2.msra.mxu0 0.0
  %4595 = vmatprep.subr.mxu0 0.0
  %4596 = vmatpush2.msra.mxu0 0.0
  %4597 = vmatprep.subr.mxu0 0.0
  %4598 = vmatpush2.msra.mxu0 0.0
  %4599 = vmatprep.subr.mxu0 0.0
  %4600 = vmatpush2.msra.mxu0 0.0
  %4601 = vmatprep.subr.mxu0 0.0
  %4602 = vmatpush2.msra.mxu0 0.0
  %4603 = vmatprep.subr.mxu0 0.0
  %4604 = vmatpush2.msra.mxu0 0.0
  %4605 = vmatprep.subr.mxu0 0.0
  %4606 = vmatpush2.msra.mxu0 0.0
  %4607 = vmatprep.subr.mxu0 0.0
  %4608 = vmatpush2.msra.mxu0 0.0
  %4609 = vmatprep.subr.mxu0 0.0
  %4610 = vmatpush2.msra.mxu0 0.0
  %4611 = vmatprep.subr.mxu0 0.0
  %4612 = vmatpush2.msra.mxu0 0.0
  %4613 = vmatprep.subr.mxu0 0.0
  %4614 = vmatpush2.msra.mxu0 0.0
  %4615 = vmatprep.subr.mxu0 0.0
  %4616 = vmatpush2.msra.mxu0 0.0
  %4617 = vmatprep.subr.mxu0 0.0
  %4618 = vmatpush2.msra.mxu0 0.0
  %4619 = vmatprep.mubr.f32.mxu0 0.0
  %4620 = vmatmul.mubr.f32.gmra.mxu0 %v4460
  %v4621 = vpop.f32.mrf.mxu0
  %v4622 = vadd.f32 %v4457, %v4621
  %v4623 = vpop.f32.mrf.mxu0
  %4624 = vmatprep.mubr.f32.mxu0 0.0
  %4625 = vmatmul.mubr.f32.gmra.mxu0 %v4463
  %v4626 = vpop.f32.mrf.mxu0
  %v4627 = vadd.f32 %v4457, %v4626
  %v4628 = vpop.f32.mrf.mxu0
  %4629 = vmatprep.mubr.f32.mxu0 0.0
  %4630 = vmatmul.mubr.f32.gmra.mxu0 %v4466
  %v4631 = vpop.f32.mrf.mxu0
  %v4632 = vadd.f32 %v4457, %v4631
  %v4633 = vpop.f32.mrf.mxu0
  %4634 = vmatprep.mubr.f32.mxu0 0.0
  %4635 = vmatmul.mubr.f32.gmra.mxu0 %v4469
  %v4636 = vpop.f32.mrf.mxu0
  %v4637 = vadd.f32 %v4457, %v4636
  %v4638 = vpop.f32.mrf.mxu0
  %4639 = vmatprep.mubr.f32.mxu0 0.0
  %4640 = vmatmul.mubr.f32.gmra.mxu0 %v4472
  %v4641 = vpop.f32.mrf.mxu0
  %v4642 = vadd.f32 %v4457, %v4641
  %v4643 = vpop.f32.mrf.mxu0
  %4644 = vmatprep.mubr.f32.mxu0 0.0
  %4645 = vmatmul.mubr.f32.gmra.mxu0 %v4475
  %v4646 = vpop.f32.mrf.mxu0
  %v4647 = vadd.f32 %v4457, %v4646
  %v4648 = vpop.f32.mrf.mxu0
  %4649 = vmatprep.mubr.f32.mxu0 0.0
  %4650 = vmatmul.mubr.f32.gmra.mxu0 %v4478
  %v4651 = vpop.f32.mrf.mxu0
  %v4652 = vadd.f32 %v4457, %v4651
  %v4653 = vpop.f32.mrf.mxu0
  %4654 = vmatprep.mubr.f32.mxu0 0.0
  %4655 = vmatmul.mubr.f32.gmra.mxu0 %v4481
  %v4656 = vpop.f32.mrf.mxu0
  %v4657 = vadd.f32 %v4457, %v4656
  %v4658 = vpop.f32.mrf.mxu0
  %4659 = vmatprep.mubr.f32.mxu0 0.0
  %4660 = vmatmul.mubr.f32.gmra.mxu0 %v4484
  %v4661 = vpop.f32.mrf.mxu0
  %v4662 = vadd.f32 %v4457, %v4661
  %v4663 = vpop.f32.mrf.mxu0
  %4664 = vmatprep.mubr.f32.mxu0 0.0
  %4665 = vmatmul.mubr.f32.gmra.mxu0 %v4487
  %v4666 = vpop.f32.mrf.mxu0
  %v4667 = vadd.f32 %v4457, %v4666
  %v4668 = vpop.f32.mrf.mxu0
  %4669 = vmatprep.mubr.f32.mxu0 0.0
  %4670 = vmatmul.mubr.f32.gmra.mxu0 %v4490
  %v4671 = vpop.f32.mrf.mxu0
  %v4672 = vadd.f32 %v4457, %v4671
  %v4673 = vpop.f32.mrf.mxu0
  %4674 = vmatprep.mubr.f32.mxu0 0.0
  %4675 = vmatmul.mubr.f32.gmra.mxu0 %v4493
  %v4676 = vpop.f32.mrf.mxu0
  %v4677 = vadd.f32 %v4457, %v4676
  %v4678 = vpop.f32.mrf.mxu0
  %4679 = vmatprep.mubr.f32.mxu0 0.0
  %4680 = vmatmul.mubr.f32.gmra.mxu0 %v4496
  %v4681 = vpop.f32.mrf.mxu0
  %v4682 = vadd.f32 %v4457, %v4681
  %v4683 = vpop.f32.mrf.mxu0
  %4684 = vmatprep.mubr.f32.mxu0 0.0
  %4685 = vmatmul.mubr.f32.gmra.mxu0 %v4499
  %v4686 = vpop.f32.mrf.mxu0
  %v4687 = vadd.f32 %v4457, %v4686
  %v4688 = vpop.f32.mrf.mxu0
  %4689 = vmatprep.mubr.f32.mxu0 0.0
  %4690 = vmatmul.mubr.f32.gmra.mxu0 %v4502
  %v4691 = vpop.f32.mrf.mxu0
  %v4692 = vadd.f32 %v4457, %v4691
  %v4693 = vpop.f32.mrf.mxu0
  %4694 = vmatprep.mubr.f32.mxu0 0.0
  %4695 = vmatmul.mubr.f32.gmra.mxu0 %v4505
  %v4696 = vpop.f32.mrf.mxu0
  %v4697 = vadd.f32 %v4457, %v4696
  %v4698 = vpop.f32.mrf.mxu0
  %4699 = vmatprep.mubr.f32.mxu0 0.0
  %4700 = vmatmul.mubr.f32.gmra.mxu0 %v4508
  %v4701 = vpop.f32.mrf.mxu0
  %v4702 = vadd.f32 %v4457, %v4701
  %v4703 = vpop.f32.mrf.mxu0
  %4704 = vmatprep.mubr.f32.mxu0 0.0
  %4705 = vmatmul.mubr.f32.gmra.mxu0 %v4511
  %v4706 = vpop.f32.mrf.mxu0
  %v4707 = vadd.f32 %v4457, %v4706
  %v4708 = vpop.f32.mrf.mxu0
  %4709 = vmatprep.mubr.f32.mxu0 0.0
  %4710 = vmatmul.mubr.f32.gmra.mxu0 %v4514
  %v4711 = vpop.f32.mrf.mxu0
  %v4712 = vadd.f32 %v4457, %v4711
  %v4713 = vpop.f32.mrf.mxu0
  %4714 = vmatprep.mubr.f32.mxu0 0.0
  %4715 = vmatmul.mubr.f32.gmra.mxu0 %v4517
  %v4716 = vpop.f32.mrf.mxu0
  %v4717 = vadd.f32 %v4457, %v4716
  %v4718 = vpop.f32.mrf.mxu0
  %4719 = vmatprep.mubr.f32.mxu0 0.0
  %4720 = vmatmul.mubr.f32.gmra.mxu0 %v4520
  %v4721 = vpop.f32.mrf.mxu0
  %v4722 = vadd.f32 %v4457, %v4721
  %v4723 = vpop.f32.mrf.mxu0
  %4724 = vmatprep.mubr.f32.mxu0 0.0
  %4725 = vmatmul.mubr.f32.gmra.mxu0 %v4523
  %v4726 = vpop.f32.mrf.mxu0
  %v4727 = vadd.f32 %v4457, %v4726
  %v4728 = vpop.f32.mrf.mxu0
  %4729 = vmatprep.mubr.f32.mxu0 0.0
  %4730 = vmatmul.mubr.f32.gmra.mxu0 %v4526
  %v4731 = vpop.f32.mrf.mxu0
  %v4732 = vadd.f32 %v4457, %v4731
  %v4733 = vpop.f32.mrf.mxu0
  %4734 = vmatprep.mubr.f32.mxu0 0.0
  %4735 = vmatmul.mubr.f32.gmra.mxu0 %v4529
  %v4736 = vpop.f32.mrf.mxu0
  %v4737 = vadd.f32 %v4457, %v4736
  %v4738 = vpop.f32.mrf.mxu0
  %4739 = vmatprep.mubr.f32.mxu0 0.0
  %4740 = vmatmul.mubr.f32.gmra.mxu0 %v4532
  %v4741 = vpop.f32.mrf.mxu0
  %v4742 = vadd.f32 %v4457, %v4741
  %v4743 = vpop.f32.mrf.mxu0
  %4744 = vmatprep.mubr.f32.mxu0 0.0
  %4745 = vmatmul.mubr.f32.gmra.mxu0 %v4535
  %v4746 = vpop.f32.mrf.mxu0
  %v4747 = vadd.f32 %v4457, %v4746
  %v4748 = vpop.f32.mrf.mxu0
  %4749 = vmatprep.mubr.f32.mxu0 0.0
  %4750 = vmatmul.mubr.f32.gmra.mxu0 %v4538
  %v4751 = vpop.f32.mrf.mxu0
  %v4752 = vadd.f32 %v4457, %v4751
  %v4753 = vpop.f32.mrf.mxu0
  %4754 = vmatprep.mubr.f32.mxu0 0.0
  %4755 = vmatmul.mubr.f32.gmra.mxu0 %v4541
  %v4756 = vpop.f32.mrf.mxu0
  %v4757 = vadd.f32 %v4457, %v4756
  %v4758 = vpop.f32.mrf.mxu0
  %4759 = vmatprep.mubr.f32.mxu0 0.0
  %4760 = vmatmul.mubr.f32.gmra.mxu0 %v4544
  %v4761 = vpop.f32.mrf.mxu0
  %v4762 = vadd.f32 %v4457, %v4761
  %v4763 = vpop.f32.mrf.mxu0
  %4764 = vmatprep.mubr.f32.mxu0 0.0
  %4765 = vmatmul.mubr.f32.gmra.mxu0 %v4547
  %v4766 = vpop.f32.mrf.mxu0
  %v4767 = vadd.f32 %v4457, %v4766
  %v4768 = vpop.f32.mrf.mxu0
  %4769 = vmatprep.mubr.f32.mxu0 0.0
  %4770 = vmatmul.mubr.f32.gmra.mxu0 %v4550
  %v4771 = vpop.f32.mrf.mxu0
  %v4772 = vadd.f32 %v4457, %v4771
  %v4773 = vpop.f32.mrf.mxu0
  %4774 = vmatprep.mubr.f32.mxu0 0.0
  %4775 = vmatmul.mubr.f32.gmra.mxu0 %v4553
  %v4776 = vpop.f32.mrf.mxu0
  %v4777 = vadd.f32 %v4457, %v4776
  %v4778 = vpop.f32.mrf.mxu0
  %4779 = vdwg.mxu0
  %v4780 = vmax.f32 %v4622, 0.0
  %v4781 = vmax.f32 %v4627, 0.0
  %v4782 = vmax.f32 %v4632, 0.0
  %v4783 = vmax.f32 %v4637, 0.0
  %v4784 = vmax.f32 %v4642, 0.0
  %v4785 = vmax.f32 %v4647, 0.0
  %v4786 = vmax.f32 %v4652, 0.0
  %v4787 = vmax.f32 %v4657, 0.0
  %v4788 = vmax.f32 %v4662, 0.0
  %v4789 = vmax.f32 %v4667, 0.0
  %v4790 = vmax.f32 %v4672, 0.0
  %v4791 = vmax.f32 %v4677, 0.0
  %v4792 = vmax.f32 %v4682, 0.0
  %v4793 = vmax.f32 %v4687, 0.0
  %v4794 = vmax.f32 %v4692, 0.0
  %v4795 = vmax.f32 %v4697, 0.0
  %v4796 = vmax.f32 %v4702, 0.0
  %v4797 = vmax.f32 %v4707, 0.0
  %v4798 = vmax.f32 %v4712, 0.0
  %v4799 = vmax.f32 %v4717, 0.0
  %v4800 = vmax.f32 %v4722, 0.0
  %v4801 = vmax.f32 %v4727, 0.0
  %v4802 = vmax.f32 %v4732, 0.0
  %v4803 = vmax.f32 %v4737, 0.0
  %v4804 = vmax.f32 %v4742, 0.0
  %v4805 = vmax.f32 %v4747, 0.0
  %v4806 = vmax.f32 %v4752, 0.0
  %v4807 = vmax.f32 %v4757, 0.0
  %v4808 = vmax.f32 %v4762, 0.0
  %v4809 = vmax.f32 %v4767, 0.0
  %v4810 = vmax.f32 %v4772, 0.0
  %v4811 = vmax.f32 %v4777, 0.0
  %v4812 = vld [vmem:[%s9] sm:$0xff]
  %v4813 = vld [vmem:[%s9 + $0x8] sm:$0xff]
  %v4814 = vld [vmem:[%s9 + $0x10] sm:$0xff]
  %v4815 = vld [vmem:[%s9 + $0x18] sm:$0xff]
  %v4816 = vld [vmem:[%s9 + $0x20] sm:$0xff]
  %v4817 = vld [vmem:[%s9 + $0x28] sm:$0xff]
  %v4818 = vld [vmem:[%s9 + $0x30] sm:$0xff]
  %v4819 = vld [vmem:[%s9 + $0x38] sm:$0xff]
  %v4820 = vld [vmem:[%s9 + $0x40] sm:$0xff]
  %v4821 = vld [vmem:[%s9 + $0x48] sm:$0xff]
  %v4822 = vld [vmem:[%s9 + $0x50] sm:$0xff]
  %v4823 = vld [vmem:[%s9 + $0x58] sm:$0xff]
  %v4824 = vld [vmem:[%s9 + $0x60] sm:$0xff]
  %v4825 = vld [vmem:[%s9 + $0x68] sm:$0xff]
  %v4826 = vld [vmem:[%s9 + $0x70] sm:$0xff]
  %v4827 = vld [vmem:[%s9 + $0x78] sm:$0xff]
  %v4828 = vld [vmem:[%s10] sm:$0x1]
  %v4830 = vlaneseq
  %v4831 = vshrl.u32 %v4830, 7
  %v4832 = vsub.s32 0, %v4831
  %v4833 = vrot.slane %v4828, %v4832
  %4835 = vmatprep.subr.mxu0 0.0
  %4836 = vmatpush1.msra.mxu0 %v4827
  %4837 = vmatprep.subr.mxu0 0.0
  %4838 = vmatpush1.msra.mxu0 %v4826
  %4839 = vmatprep.subr.mxu0 0.0
  %4840 = vmatpush1.msra.mxu0 %v4825
  %4841 = vmatprep.subr.mxu0 0.0
  %4842 = vmatpush1.msra.mxu0 %v4824
  %4843 = vmatprep.subr.mxu0 0.0
  %4844 = vmatpush1.msra.mxu0 %v4823
  %4845 = vmatprep.subr.mxu0 0.0
  %4846 = vmatpush1.msra.mxu0 %v4822
  %4847 = vmatprep.subr.mxu0 0.0
  %4848 = vmatpush1.msra.mxu0 %v4821
  %4849 = vmatprep.subr.mxu0 0.0
  %4850 = vmatpush1.msra.mxu0 %v4820
  %4851 = vmatprep.subr.mxu0 0.0
  %4852 = vmatpush1.msra.mxu0 %v4819
  %4853 = vmatprep.subr.mxu0 0.0
  %4854 = vmatpush1.msra.mxu0 %v4818
  %4855 = vmatprep.subr.mxu0 0.0
  %4856 = vmatpush1.msra.mxu0 %v4817
  %4857 = vmatprep.subr.mxu0 0.0
  %4858 = vmatpush1.msra.mxu0 %v4816
  %4859 = vmatprep.subr.mxu0 0.0
  %4860 = vmatpush1.msra.mxu0 %v4815
  %4861 = vmatprep.subr.mxu0 0.0
  %4862 = vmatpush1.msra.mxu0 %v4814
  %4863 = vmatprep.subr.mxu0 0.0
  %4864 = vmatpush1.msra.mxu0 %v4813
  %4865 = vmatprep.subr.mxu0 0.0
  %4866 = vmatpush1.msra.mxu0 %v4812
  %4867 = vmatprep.subr.mxu0 0.0
  %4868 = vmatpush2.msra.mxu0 0.0
  %4869 = vmatprep.subr.mxu0 0.0
  %4870 = vmatpush2.msra.mxu0 0.0
  %4871 = vmatprep.subr.mxu0 0.0
  %4872 = vmatpush2.msra.mxu0 0.0
  %4873 = vmatprep.subr.mxu0 0.0
  %4874 = vmatpush2.msra.mxu0 0.0
  %4875 = vmatprep.subr.mxu0 0.0
  %4876 = vmatpush2.msra.mxu0 0.0
  %4877 = vmatprep.subr.mxu0 0.0
  %4878 = vmatpush2.msra.mxu0 0.0
  %4879 = vmatprep.subr.mxu0 0.0
  %4880 = vmatpush2.msra.mxu0 0.0
  %4881 = vmatprep.subr.mxu0 0.0
  %4882 = vmatpush2.msra.mxu0 0.0
  %4883 = vmatprep.subr.mxu0 0.0
  %4884 = vmatpush2.msra.mxu0 0.0
  %4885 = vmatprep.subr.mxu0 0.0
  %4886 = vmatpush2.msra.mxu0 0.0
  %4887 = vmatprep.subr.mxu0 0.0
  %4888 = vmatpush2.msra.mxu0 0.0
  %4889 = vmatprep.subr.mxu0 0.0
  %4890 = vmatpush2.msra.mxu0 0.0
  %4891 = vmatprep.subr.mxu0 0.0
  %4892 = vmatpush2.msra.mxu0 0.0
  %4893 = vmatprep.subr.mxu0 0.0
  %4894 = vmatpush2.msra.mxu0 0.0
  %4895 = vmatprep.subr.mxu0 0.0
  %4896 = vmatpush2.msra.mxu0 0.0
  %4897 = vmatprep.subr.mxu0 0.0
  %4898 = vmatpush2.msra.mxu0 0.0
  %4899 = vmatprep.mubr.f32.mxu0 0.0
  %4900 = vmatmul.mubr.f32.gmra.mxu0 %v4780
  %v4901 = vpop.f32.mrf.mxu0
  %v4902 = vadd.f32 %v4833, %v4901
  %v4903 = vpop.f32.mrf.mxu0
  %4904 = vmatprep.mubr.f32.mxu0 0.0
  %4905 = vmatmul.mubr.f32.gmra.mxu0 %v4781
  %v4906 = vpop.f32.mrf.mxu0
  %v4907 = vadd.f32 %v4833, %v4906
  %v4908 = vpop.f32.mrf.mxu0
  %4909 = vmatprep.mubr.f32.mxu0 0.0
  %4910 = vmatmul.mubr.f32.gmra.mxu0 %v4782
  %v4911 = vpop.f32.mrf.mxu0
  %v4912 = vadd.f32 %v4833, %v4911
  %v4913 = vpop.f32.mrf.mxu0
  %4914 = vmatprep.mubr.f32.mxu0 0.0
  %4915 = vmatmul.mubr.f32.gmra.mxu0 %v4783
  %v4916 = vpop.f32.mrf.mxu0
  %v4917 = vadd.f32 %v4833, %v4916
  %v4918 = vpop.f32.mrf.mxu0
  %4919 = vmatprep.mubr.f32.mxu0 0.0
  %4920 = vmatmul.mubr.f32.gmra.mxu0 %v4784
  %v4921 = vpop.f32.mrf.mxu0
  %v4922 = vadd.f32 %v4833, %v4921
  %v4923 = vpop.f32.mrf.mxu0
  %4924 = vmatprep.mubr.f32.mxu0 0.0
  %4925 = vmatmul.mubr.f32.gmra.mxu0 %v4785
  %v4926 = vpop.f32.mrf.mxu0
  %v4927 = vadd.f32 %v4833, %v4926
  %v4928 = vpop.f32.mrf.mxu0
  %4929 = vmatprep.mubr.f32.mxu0 0.0
  %4930 = vmatmul.mubr.f32.gmra.mxu0 %v4786
  %v4931 = vpop.f32.mrf.mxu0
  %v4932 = vadd.f32 %v4833, %v4931
  %v4933 = vpop.f32.mrf.mxu0
  %4934 = vmatprep.mubr.f32.mxu0 0.0
  %4935 = vmatmul.mubr.f32.gmra.mxu0 %v4787
  %v4936 = vpop.f32.mrf.mxu0
  %v4937 = vadd.f32 %v4833, %v4936
  %v4938 = vpop.f32.mrf.mxu0
  %4939 = vmatprep.mubr.f32.mxu0 0.0
  %4940 = vmatmul.mubr.f32.gmra.mxu0 %v4788
  %v4941 = vpop.f32.mrf.mxu0
  %v4942 = vadd.f32 %v4833, %v4941
  %v4943 = vpop.f32.mrf.mxu0
  %4944 = vmatprep.mubr.f32.mxu0 0.0
  %4945 = vmatmul.mubr.f32.gmra.mxu0 %v4789
  %v4946 = vpop.f32.mrf.mxu0
  %v4947 = vadd.f32 %v4833, %v4946
  %v4948 = vpop.f32.mrf.mxu0
  %4949 = vmatprep.mubr.f32.mxu0 0.0
  %4950 = vmatmul.mubr.f32.gmra.mxu0 %v4790
  %v4951 = vpop.f32.mrf.mxu0
  %v4952 = vadd.f32 %v4833, %v4951
  %v4953 = vpop.f32.mrf.mxu0
  %4954 = vmatprep.mubr.f32.mxu0 0.0
  %4955 = vmatmul.mubr.f32.gmra.mxu0 %v4791
  %v4956 = vpop.f32.mrf.mxu0
  %v4957 = vadd.f32 %v4833, %v4956
  %v4958 = vpop.f32.mrf.mxu0
  %4959 = vmatprep.mubr.f32.mxu0 0.0
  %4960 = vmatmul.mubr.f32.gmra.mxu0 %v4792
  %v4961 = vpop.f32.mrf.mxu0
  %v4962 = vadd.f32 %v4833, %v4961
  %v4963 = vpop.f32.mrf.mxu0
  %4964 = vmatprep.mubr.f32.mxu0 0.0
  %4965 = vmatmul.mubr.f32.gmra.mxu0 %v4793
  %v4966 = vpop.f32.mrf.mxu0
  %v4967 = vadd.f32 %v4833, %v4966
  %v4968 = vpop.f32.mrf.mxu0
  %4969 = vmatprep.mubr.f32.mxu0 0.0
  %4970 = vmatmul.mubr.f32.gmra.mxu0 %v4794
  %v4971 = vpop.f32.mrf.mxu0
  %v4972 = vadd.f32 %v4833, %v4971
  %v4973 = vpop.f32.mrf.mxu0
  %4974 = vmatprep.mubr.f32.mxu0 0.0
  %4975 = vmatmul.mubr.f32.gmra.mxu0 %v4795
  %v4976 = vpop.f32.mrf.mxu0
  %v4977 = vadd.f32 %v4833, %v4976
  %v4978 = vpop.f32.mrf.mxu0
  %4979 = vmatprep.mubr.f32.mxu0 0.0
  %4980 = vmatmul.mubr.f32.gmra.mxu0 %v4796
  %v4981 = vpop.f32.mrf.mxu0
  %v4982 = vadd.f32 %v4833, %v4981
  %v4983 = vpop.f32.mrf.mxu0
  %4984 = vmatprep.mubr.f32.mxu0 0.0
  %4985 = vmatmul.mubr.f32.gmra.mxu0 %v4797
  %v4986 = vpop.f32.mrf.mxu0
  %v4987 = vadd.f32 %v4833, %v4986
  %v4988 = vpop.f32.mrf.mxu0
  %4989 = vmatprep.mubr.f32.mxu0 0.0
  %4990 = vmatmul.mubr.f32.gmra.mxu0 %v4798
  %v4991 = vpop.f32.mrf.mxu0
  %v4992 = vadd.f32 %v4833, %v4991
  %v4993 = vpop.f32.mrf.mxu0
  %4994 = vmatprep.mubr.f32.mxu0 0.0
  %4995 = vmatmul.mubr.f32.gmra.mxu0 %v4799
  %v4996 = vpop.f32.mrf.mxu0
  %v4997 = vadd.f32 %v4833, %v4996
  %v4998 = vpop.f32.mrf.mxu0
  %4999 = vmatprep.mubr.f32.mxu0 0.0
  %5000 = vmatmul.mubr.f32.gmra.mxu0 %v4800
  %v5001 = vpop.f32.mrf.mxu0
  %v5002 = vadd.f32 %v4833, %v5001
  %v5003 = vpop.f32.mrf.mxu0
  %5004 = vmatprep.mubr.f32.mxu0 0.0
  %5005 = vmatmul.mubr.f32.gmra.mxu0 %v4801
  %v5006 = vpop.f32.mrf.mxu0
  %v5007 = vadd.f32 %v4833, %v5006
  %v5008 = vpop.f32.mrf.mxu0
  %5009 = vmatprep.mubr.f32.mxu0 0.0
  %5010 = vmatmul.mubr.f32.gmra.mxu0 %v4802
  %v5011 = vpop.f32.mrf.mxu0
  %v5012 = vadd.f32 %v4833, %v5011
  %v5013 = vpop.f32.mrf.mxu0
  %5014 = vmatprep.mubr.f32.mxu0 0.0
  %5015 = vmatmul.mubr.f32.gmra.mxu0 %v4803
  %v5016 = vpop.f32.mrf.mxu0
  %v5017 = vadd.f32 %v4833, %v5016
  %v5018 = vpop.f32.mrf.mxu0
  %5019 = vmatprep.mubr.f32.mxu0 0.0
  %5020 = vmatmul.mubr.f32.gmra.mxu0 %v4804
  %v5021 = vpop.f32.mrf.mxu0
  %v5022 = vadd.f32 %v4833, %v5021
  %v5023 = vpop.f32.mrf.mxu0
  %5024 = vmatprep.mubr.f32.mxu0 0.0
  %5025 = vmatmul.mubr.f32.gmra.mxu0 %v4805
  %v5026 = vpop.f32.mrf.mxu0
  %v5027 = vadd.f32 %v4833, %v5026
  %v5028 = vpop.f32.mrf.mxu0
  %5029 = vmatprep.mubr.f32.mxu0 0.0
  %5030 = vmatmul.mubr.f32.gmra.mxu0 %v4806
  %v5031 = vpop.f32.mrf.mxu0
  %v5032 = vadd.f32 %v4833, %v5031
  %v5033 = vpop.f32.mrf.mxu0
  %5034 = vmatprep.mubr.f32.mxu0 0.0
  %5035 = vmatmul.mubr.f32.gmra.mxu0 %v4807
  %v5036 = vpop.f32.mrf.mxu0
  %v5037 = vadd.f32 %v4833, %v5036
  %v5038 = vpop.f32.mrf.mxu0
  %5039 = vmatprep.mubr.f32.mxu0 0.0
  %5040 = vmatmul.mubr.f32.gmra.mxu0 %v4808
  %v5041 = vpop.f32.mrf.mxu0
  %v5042 = vadd.f32 %v4833, %v5041
  %v5043 = vpop.f32.mrf.mxu0
  %5044 = vmatprep.mubr.f32.mxu0 0.0
  %5045 = vmatmul.mubr.f32.gmra.mxu0 %v4809
  %v5046 = vpop.f32.mrf.mxu0
  %v5047 = vadd.f32 %v4833, %v5046
  %v5048 = vpop.f32.mrf.mxu0
  %5049 = vmatprep.mubr.f32.mxu0 0.0
  %5050 = vmatmul.mubr.f32.gmra.mxu0 %v4810
  %v5051 = vpop.f32.mrf.mxu0
  %v5052 = vadd.f32 %v4833, %v5051
  %v5053 = vpop.f32.mrf.mxu0
  %5054 = vmatprep.mubr.f32.mxu0 0.0
  %5055 = vmatmul.mubr.f32.gmra.mxu0 %v4811
  %v5056 = vpop.f32.mrf.mxu0
  %v5057 = vadd.f32 %v4833, %v5056
  %v5058 = vpop.f32.mrf.mxu0
  %5059 = vdwg.mxu0
  %v5060 = vsel %vm471, %v4902, -inf
  %5061 = vmax.xlane.f32.xlu0 %v5060
  %v5062 = vpop.xlane.xlu0 %5061
  %v5063 = vsel %vm471, %v4907, -inf
  %5064 = vmax.xlane.f32.xlu0 %v5063
  %v5065 = vpop.xlane.xlu0 %5064
  %v5066 = vsel %vm471, %v4912, -inf
  %5067 = vmax.xlane.f32.xlu0 %v5066
  %v5068 = vpop.xlane.xlu0 %5067
  %v5069 = vsel %vm471, %v4917, -inf
  %5070 = vmax.xlane.f32.xlu0 %v5069
  %v5071 = vpop.xlane.xlu0 %5070
  %v5072 = vsel %vm471, %v4922, -inf
  %5073 = vmax.xlane.f32.xlu0 %v5072
  %v5074 = vpop.xlane.xlu0 %5073
  %v5075 = vsel %vm471, %v4927, -inf
  %5076 = vmax.xlane.f32.xlu0 %v5075
  %v5077 = vpop.xlane.xlu0 %5076
  %v5078 = vsel %vm471, %v4932, -inf
  %5079 = vmax.xlane.f32.xlu0 %v5078
  %v5080 = vpop.xlane.xlu0 %5079
  %v5081 = vsel %vm471, %v4937, -inf
  %5082 = vmax.xlane.f32.xlu0 %v5081
  %v5083 = vpop.xlane.xlu0 %5082
  %v5084 = vsel %vm471, %v4942, -inf
  %5085 = vmax.xlane.f32.xlu0 %v5084
  %v5086 = vpop.xlane.xlu0 %5085
  %v5087 = vsel %vm471, %v4947, -inf
  %5088 = vmax.xlane.f32.xlu0 %v5087
  %v5089 = vpop.xlane.xlu0 %5088
  %v5090 = vsel %vm471, %v4952, -inf
  %5091 = vmax.xlane.f32.xlu0 %v5090
  %v5092 = vpop.xlane.xlu0 %5091
  %v5093 = vsel %vm471, %v4957, -inf
  %5094 = vmax.xlane.f32.xlu0 %v5093
  %v5095 = vpop.xlane.xlu0 %5094
  %v5096 = vsel %vm471, %v4962, -inf
  %5097 = vmax.xlane.f32.xlu0 %v5096
  %v5098 = vpop.xlane.xlu0 %5097
  %v5099 = vsel %vm471, %v4967, -inf
  %5100 = vmax.xlane.f32.xlu0 %v5099
  %v5101 = vpop.xlane.xlu0 %5100
  %v5102 = vsel %vm471, %v4972, -inf
  %5103 = vmax.xlane.f32.xlu0 %v5102
  %v5104 = vpop.xlane.xlu0 %5103
  %v5105 = vsel %vm471, %v4977, -inf
  %5106 = vmax.xlane.f32.xlu0 %v5105
  %v5107 = vpop.xlane.xlu0 %5106
  %v5108 = vsel %vm471, %v4982, -inf
  %5109 = vmax.xlane.f32.xlu0 %v5108
  %v5110 = vpop.xlane.xlu0 %5109
  %v5111 = vsel %vm471, %v4987, -inf
  %5112 = vmax.xlane.f32.xlu0 %v5111
  %v5113 = vpop.xlane.xlu0 %5112
  %v5114 = vsel %vm471, %v4992, -inf
  %5115 = vmax.xlane.f32.xlu0 %v5114
  %v5116 = vpop.xlane.xlu0 %5115
  %v5117 = vsel %vm471, %v4997, -inf
  %5118 = vmax.xlane.f32.xlu0 %v5117
  %v5119 = vpop.xlane.xlu0 %5118
  %v5120 = vsel %vm471, %v5002, -inf
  %5121 = vmax.xlane.f32.xlu0 %v5120
  %v5122 = vpop.xlane.xlu0 %5121
  %v5123 = vsel %vm471, %v5007, -inf
  %5124 = vmax.xlane.f32.xlu0 %v5123
  %v5125 = vpop.xlane.xlu0 %5124
  %v5126 = vsel %vm471, %v5012, -inf
  %5127 = vmax.xlane.f32.xlu0 %v5126
  %v5128 = vpop.xlane.xlu0 %5127
  %v5129 = vsel %vm471, %v5017, -inf
  %5130 = vmax.xlane.f32.xlu0 %v5129
  %v5131 = vpop.xlane.xlu0 %5130
  %v5132 = vsel %vm471, %v5022, -inf
  %5133 = vmax.xlane.f32.xlu0 %v5132
  %v5134 = vpop.xlane.xlu0 %5133
  %v5135 = vsel %vm471, %v5027, -inf
  %5136 = vmax.xlane.f32.xlu0 %v5135
  %v5137 = vpop.xlane.xlu0 %5136
  %v5138 = vsel %vm471, %v5032, -inf
  %5139 = vmax.xlane.f32.xlu0 %v5138
  %v5140 = vpop.xlane.xlu0 %5139
  %v5141 = vsel %vm471, %v5037, -inf
  %5142 = vmax.xlane.f32.xlu0 %v5141
  %v5143 = vpop.xlane.xlu0 %5142
  %v5144 = vsel %vm471, %v5042, -inf
  %5145 = vmax.xlane.f32.xlu0 %v5144
  %v5146 = vpop.xlane.xlu0 %5145
  %v5147 = vsel %vm471, %v5047, -inf
  %5148 = vmax.xlane.f32.xlu0 %v5147
  %v5149 = vpop.xlane.xlu0 %5148
  %v5150 = vsel %vm471, %v5052, -inf
  %5151 = vmax.xlane.f32.xlu0 %v5150
  %v5152 = vpop.xlane.xlu0 %5151
  %v5153 = vsel %vm471, %v5057, -inf
  %5154 = vmax.xlane.f32.xlu0 %v5153
  %v5155 = vpop.xlane.xlu0 %5154
  %v5156 = vsub.f32 %v4902, %v5062
  %v5157 = vsub.f32 %v4907, %v5065
  %v5158 = vsub.f32 %v4912, %v5068
  %v5159 = vsub.f32 %v4917, %v5071
  %v5160 = vsub.f32 %v4922, %v5074
  %v5161 = vsub.f32 %v4927, %v5077
  %v5162 = vsub.f32 %v4932, %v5080
  %v5163 = vsub.f32 %v4937, %v5083
  %v5164 = vsub.f32 %v4942, %v5086
  %v5165 = vsub.f32 %v4947, %v5089
  %v5166 = vsub.f32 %v4952, %v5092
  %v5167 = vsub.f32 %v4957, %v5095
  %v5168 = vsub.f32 %v4962, %v5098
  %v5169 = vsub.f32 %v4967, %v5101
  %v5170 = vsub.f32 %v4972, %v5104
  %v5171 = vsub.f32 %v4977, %v5107
  %v5172 = vsub.f32 %v4982, %v5110
  %v5173 = vsub.f32 %v4987, %v5113
  %v5174 = vsub.f32 %v4992, %v5116
  %v5175 = vsub.f32 %v4997, %v5119
  %v5176 = vsub.f32 %v5002, %v5122
  %v5177 = vsub.f32 %v5007, %v5125
  %v5178 = vsub.f32 %v5012, %v5128
  %v5179 = vsub.f32 %v5017, %v5131
  %v5180 = vsub.f32 %v5022, %v5134
  %v5181 = vsub.f32 %v5027, %v5137
  %v5182 = vsub.f32 %v5032, %v5140
  %v5183 = vsub.f32 %v5037, %v5143
  %v5184 = vsub.f32 %v5042, %v5146
  %v5185 = vsub.f32 %v5047, %v5149
  %v5186 = vsub.f32 %v5052, %v5152
  %v5187 = vsub.f32 %v5057, %v5155
  %v5188 = vmul.f32 %v5156, 1.442695
  %v5189 = vpow.pop %v5188
  %v5190 = vmul.f32 %v5157, 1.442695
  %v5191 = vpow.pop %v5190
  %v5192 = vmul.f32 %v5158, 1.442695
  %v5193 = vpow.pop %v5192
  %v5194 = vmul.f32 %v5159, 1.442695
  %v5195 = vpow.pop %v5194
  %v5196 = vmul.f32 %v5160, 1.442695
  %v5197 = vpow.pop %v5196
  %v5198 = vmul.f32 %v5161, 1.442695
  %v5199 = vpow.pop %v5198
  %v5200 = vmul.f32 %v5162, 1.442695
  %v5201 = vpow.pop %v5200
  %v5202 = vmul.f32 %v5163, 1.442695
  %v5203 = vpow.pop %v5202
  %v5204 = vmul.f32 %v5164, 1.442695
  %v5205 = vpow.pop %v5204
  %v5206 = vmul.f32 %v5165, 1.442695
  %v5207 = vpow.pop %v5206
  %v5208 = vmul.f32 %v5166, 1.442695
  %v5209 = vpow.pop %v5208
  %v5210 = vmul.f32 %v5167, 1.442695
  %v5211 = vpow.pop %v5210
  %v5212 = vmul.f32 %v5168, 1.442695
  %v5213 = vpow.pop %v5212
  %v5214 = vmul.f32 %v5169, 1.442695
  %v5215 = vpow.pop %v5214
  %v5216 = vmul.f32 %v5170, 1.442695
  %v5217 = vpow.pop %v5216
  %v5218 = vmul.f32 %v5171, 1.442695
  %v5219 = vpow.pop %v5218
  %v5220 = vmul.f32 %v5172, 1.442695
  %v5221 = vpow.pop %v5220
  %v5222 = vmul.f32 %v5173, 1.442695
  %v5223 = vpow.pop %v5222
  %v5224 = vmul.f32 %v5174, 1.442695
  %v5225 = vpow.pop %v5224
  %v5226 = vmul.f32 %v5175, 1.442695
  %v5227 = vpow.pop %v5226
  %v5228 = vmul.f32 %v5176, 1.442695
  %v5229 = vpow.pop %v5228
  %v5230 = vmul.f32 %v5177, 1.442695
  %v5231 = vpow.pop %v5230
  %v5232 = vmul.f32 %v5178, 1.442695
  %v5233 = vpow.pop %v5232
  %v5234 = vmul.f32 %v5179, 1.442695
  %v5235 = vpow.pop %v5234
  %v5236 = vmul.f32 %v5180, 1.442695
  %v5237 = vpow.pop %v5236
  %v5238 = vmul.f32 %v5181, 1.442695
  %v5239 = vpow.pop %v5238
  %v5240 = vmul.f32 %v5182, 1.442695
  %v5241 = vpow.pop %v5240
  %v5242 = vmul.f32 %v5183, 1.442695
  %v5243 = vpow.pop %v5242
  %v5244 = vmul.f32 %v5184, 1.442695
  %v5245 = vpow.pop %v5244
  %v5246 = vmul.f32 %v5185, 1.442695
  %v5247 = vpow.pop %v5246
  %v5248 = vmul.f32 %v5186, 1.442695
  %v5249 = vpow.pop %v5248
  %v5250 = vmul.f32 %v5187, 1.442695
  %v5251 = vpow.pop %v5250
  %v5252 = vsel %vm471, %v5189, 0.0
  %5253 = vadd.xlane.f32.xlu0 %v5252
  %v5254 = vpop.xlane.xlu0 %5253
  %v5255 = vsel %vm471, %v5191, 0.0
  %5256 = vadd.xlane.f32.xlu0 %v5255
  %v5257 = vpop.xlane.xlu0 %5256
  %v5258 = vsel %vm471, %v5193, 0.0
  %5259 = vadd.xlane.f32.xlu0 %v5258
  %v5260 = vpop.xlane.xlu0 %5259
  %v5261 = vsel %vm471, %v5195, 0.0
  %5262 = vadd.xlane.f32.xlu0 %v5261
  %v5263 = vpop.xlane.xlu0 %5262
  %v5264 = vsel %vm471, %v5197, 0.0
  %5265 = vadd.xlane.f32.xlu0 %v5264
  %v5266 = vpop.xlane.xlu0 %5265
  %v5267 = vsel %vm471, %v5199, 0.0
  %5268 = vadd.xlane.f32.xlu0 %v5267
  %v5269 = vpop.xlane.xlu0 %5268
  %v5270 = vsel %vm471, %v5201, 0.0
  %5271 = vadd.xlane.f32.xlu0 %v5270
  %v5272 = vpop.xlane.xlu0 %5271
  %v5273 = vsel %vm471, %v5203, 0.0
  %5274 = vadd.xlane.f32.xlu0 %v5273
  %v5275 = vpop.xlane.xlu0 %5274
  %v5276 = vsel %vm471, %v5205, 0.0
  %5277 = vadd.xlane.f32.xlu0 %v5276
  %v5278 = vpop.xlane.xlu0 %5277
  %v5279 = vsel %vm471, %v5207, 0.0
  %5280 = vadd.xlane.f32.xlu0 %v5279
  %v5281 = vpop.xlane.xlu0 %5280
  %v5282 = vsel %vm471, %v5209, 0.0
  %5283 = vadd.xlane.f32.xlu0 %v5282
  %v5284 = vpop.xlane.xlu0 %5283
  %v5285 = vsel %vm471, %v5211, 0.0
  %5286 = vadd.xlane.f32.xlu0 %v5285
  %v5287 = vpop.xlane.xlu0 %5286
  %v5288 = vsel %vm471, %v5213, 0.0
  %5289 = vadd.xlane.f32.xlu0 %v5288
  %v5290 = vpop.xlane.xlu0 %5289
  %v5291 = vsel %vm471, %v5215, 0.0
  %5292 = vadd.xlane.f32.xlu0 %v5291
  %v5293 = vpop.xlane.xlu0 %5292
  %v5294 = vsel %vm471, %v5217, 0.0
  %5295 = vadd.xlane.f32.xlu0 %v5294
  %v5296 = vpop.xlane.xlu0 %5295
  %v5297 = vsel %vm471, %v5219, 0.0
  %5298 = vadd.xlane.f32.xlu0 %v5297
  %v5299 = vpop.xlane.xlu0 %5298
  %v5300 = vsel %vm471, %v5221, 0.0
  %5301 = vadd.xlane.f32.xlu0 %v5300
  %v5302 = vpop.xlane.xlu0 %5301
  %v5303 = vsel %vm471, %v5223, 0.0
  %5304 = vadd.xlane.f32.xlu0 %v5303
  %v5305 = vpop.xlane.xlu0 %5304
  %v5306 = vsel %vm471, %v5225, 0.0
  %5307 = vadd.xlane.f32.xlu0 %v5306
  %v5308 = vpop.xlane.xlu0 %5307
  %v5309 = vsel %vm471, %v5227, 0.0
  %5310 = vadd.xlane.f32.xlu0 %v5309
  %v5311 = vpop.xlane.xlu0 %5310
  %v5312 = vsel %vm471, %v5229, 0.0
  %5313 = vadd.xlane.f32.xlu0 %v5312
  %v5314 = vpop.xlane.xlu0 %5313
  %v5315 = vsel %vm471, %v5231, 0.0
  %5316 = vadd.xlane.f32.xlu0 %v5315
  %v5317 = vpop.xlane.xlu0 %5316
  %v5318 = vsel %vm471, %v5233, 0.0
  %5319 = vadd.xlane.f32.xlu0 %v5318
  %v5320 = vpop.xlane.xlu0 %5319
  %v5321 = vsel %vm471, %v5235, 0.0
  %5322 = vadd.xlane.f32.xlu0 %v5321
  %v5323 = vpop.xlane.xlu0 %5322
  %v5324 = vsel %vm471, %v5237, 0.0
  %5325 = vadd.xlane.f32.xlu0 %v5324
  %v5326 = vpop.xlane.xlu0 %5325
  %v5327 = vsel %vm471, %v5239, 0.0
  %5328 = vadd.xlane.f32.xlu0 %v5327
  %v5329 = vpop.xlane.xlu0 %5328
  %v5330 = vsel %vm471, %v5241, 0.0
  %5331 = vadd.xlane.f32.xlu0 %v5330
  %v5332 = vpop.xlane.xlu0 %5331
  %v5333 = vsel %vm471, %v5243, 0.0
  %5334 = vadd.xlane.f32.xlu0 %v5333
  %v5335 = vpop.xlane.xlu0 %5334
  %v5336 = vsel %vm471, %v5245, 0.0
  %5337 = vadd.xlane.f32.xlu0 %v5336
  %v5338 = vpop.xlane.xlu0 %5337
  %v5339 = vsel %vm471, %v5247, 0.0
  %5340 = vadd.xlane.f32.xlu0 %v5339
  %v5341 = vpop.xlane.xlu0 %5340
  %v5342 = vsel %vm471, %v5249, 0.0
  %5343 = vadd.xlane.f32.xlu0 %v5342
  %v5344 = vpop.xlane.xlu0 %5343
  %v5345 = vsel %vm471, %v5251, 0.0
  %5346 = vadd.xlane.f32.xlu0 %v5345
  %v5347 = vpop.xlane.xlu0 %5346
  %v5348 = vlog2.pop %v5254
  %v5349 = vmul.f32 %v5348, 0.6931472
  %v5350 = vlog2.pop %v5257
  %v5351 = vmul.f32 %v5350, 0.6931472
  %v5352 = vlog2.pop %v5260
  %v5353 = vmul.f32 %v5352, 0.6931472
  %v5354 = vlog2.pop %v5263
  %v5355 = vmul.f32 %v5354, 0.6931472
  %v5356 = vlog2.pop %v5266
  %v5357 = vmul.f32 %v5356, 0.6931472
  %v5358 = vlog2.pop %v5269
  %v5359 = vmul.f32 %v5358, 0.6931472
  %v5360 = vlog2.pop %v5272
  %v5361 = vmul.f32 %v5360, 0.6931472
  %v5362 = vlog2.pop %v5275
  %v5363 = vmul.f32 %v5362, 0.6931472
  %v5364 = vlog2.pop %v5278
  %v5365 = vmul.f32 %v5364, 0.6931472
  %v5366 = vlog2.pop %v5281
  %v5367 = vmul.f32 %v5366, 0.6931472
  %v5368 = vlog2.pop %v5284
  %v5369 = vmul.f32 %v5368, 0.6931472
  %v5370 = vlog2.pop %v5287
  %v5371 = vmul.f32 %v5370, 0.6931472
  %v5372 = vlog2.pop %v5290
  %v5373 = vmul.f32 %v5372, 0.6931472
  %v5374 = vlog2.pop %v5293
  %v5375 = vmul.f32 %v5374, 0.6931472
  %v5376 = vlog2.pop %v5296
  %v5377 = vmul.f32 %v5376, 0.6931472
  %v5378 = vlog2.pop %v5299
  %v5379 = vmul.f32 %v5378, 0.6931472
  %v5380 = vlog2.pop %v5302
  %v5381 = vmul.f32 %v5380, 0.6931472
  %v5382 = vlog2.pop %v5305
  %v5383 = vmul.f32 %v5382, 0.6931472
  %v5384 = vlog2.pop %v5308
  %v5385 = vmul.f32 %v5384, 0.6931472
  %v5386 = vlog2.pop %v5311
  %v5387 = vmul.f32 %v5386, 0.6931472
  %v5388 = vlog2.pop %v5314
  %v5389 = vmul.f32 %v5388, 0.6931472
  %v5390 = vlog2.pop %v5317
  %v5391 = vmul.f32 %v5390, 0.6931472
  %v5392 = vlog2.pop %v5320
  %v5393 = vmul.f32 %v5392, 0.6931472
  %v5394 = vlog2.pop %v5323
  %v5395 = vmul.f32 %v5394, 0.6931472
  %v5396 = vlog2.pop %v5326
  %v5397 = vmul.f32 %v5396, 0.6931472
  %v5398 = vlog2.pop %v5329
  %v5399 = vmul.f32 %v5398, 0.6931472
  %v5400 = vlog2.pop %v5332
  %v5401 = vmul.f32 %v5400, 0.6931472
  %v5402 = vlog2.pop %v5335
  %v5403 = vmul.f32 %v5402, 0.6931472
  %v5404 = vlog2.pop %v5338
  %v5405 = vmul.f32 %v5404, 0.6931472
  %v5406 = vlog2.pop %v5341
  %v5407 = vmul.f32 %v5406, 0.6931472
  %v5408 = vlog2.pop %v5344
  %v5409 = vmul.f32 %v5408, 0.6931472
  %v5410 = vlog2.pop %v5347
  %v5411 = vmul.f32 %v5410, 0.6931472
  %v5412 = vsub.f32 %v5156, %v5349
  %v5413 = vsub.f32 %v5157, %v5351
  %v5414 = vsub.f32 %v5158, %v5353
  %v5415 = vsub.f32 %v5159, %v5355
  %v5416 = vsub.f32 %v5160, %v5357
  %v5417 = vsub.f32 %v5161, %v5359
  %v5418 = vsub.f32 %v5162, %v5361
  %v5419 = vsub.f32 %v5163, %v5363
  %v5420 = vsub.f32 %v5164, %v5365
  %v5421 = vsub.f32 %v5165, %v5367
  %v5422 = vsub.f32 %v5166, %v5369
  %v5423 = vsub.f32 %v5167, %v5371
  %v5424 = vsub.f32 %v5168, %v5373
  %v5425 = vsub.f32 %v5169, %v5375
  %v5426 = vsub.f32 %v5170, %v5377
  %v5427 = vsub.f32 %v5171, %v5379
  %v5428 = vsub.f32 %v5172, %v5381
  %v5429 = vsub.f32 %v5173, %v5383
  %v5430 = vsub.f32 %v5174, %v5385
  %v5431 = vsub.f32 %v5175, %v5387
  %v5432 = vsub.f32 %v5176, %v5389
  %v5433 = vsub.f32 %v5177, %v5391
  %v5434 = vsub.f32 %v5178, %v5393
  %v5435 = vsub.f32 %v5179, %v5395
  %v5436 = vsub.f32 %v5180, %v5397
  %v5437 = vsub.f32 %v5181, %v5399
  %v5438 = vsub.f32 %v5182, %v5401
  %v5439 = vsub.f32 %v5183, %v5403
  %v5440 = vsub.f32 %v5184, %v5405
  %v5441 = vsub.f32 %v5185, %v5407
  %v5442 = vsub.f32 %v5186, %v5409
  %v5443 = vsub.f32 %v5187, %v5411
  %5444 = vst.msk [vmem:[%s11] sm:$0xff] %vm471, %v5412
  %5445 = vst.msk [vmem:[%s11 + $0x8] sm:$0xff] %vm471, %v5413
  %5446 = vst.msk [vmem:[%s11 + $0x10] sm:$0xff] %vm471, %v5414
  %5447 = vst.msk [vmem:[%s11 + $0x18] sm:$0xff] %vm471, %v5415
  %5448 = vst.msk [vmem:[%s11 + $0x20] sm:$0xff] %vm471, %v5416
  %5449 = vst.msk [vmem:[%s11 + $0x28] sm:$0xff] %vm471, %v5417
  %5450 = vst.msk [vmem:[%s11 + $0x30] sm:$0xff] %vm471, %v5418
  %5451 = vst.msk [vmem:[%s11 + $0x38] sm:$0xff] %vm471, %v5419
  %5452 = vst.msk [vmem:[%s11 + $0x40] sm:$0xff] %vm471, %v5420
  %5453 = vst.msk [vmem:[%s11 + $0x48] sm:$0xff] %vm471, %v5421
  %5454 = vst.msk [vmem:[%s11 + $0x50] sm:$0xff] %vm471, %v5422
  %5455 = vst.msk [vmem:[%s11 + $0x58] sm:$0xff] %vm471, %v5423
  %5456 = vst.msk [vmem:[%s11 + $0x60] sm:$0xff] %vm471, %v5424
  %5457 = vst.msk [vmem:[%s11 + $0x68] sm:$0xff] %vm471, %v5425
  %5458 = vst.msk [vmem:[%s11 + $0x70] sm:$0xff] %vm471, %v5426
  %5459 = vst.msk [vmem:[%s11 + $0x78] sm:$0xff] %vm471, %v5427
  %5460 = vst.msk [vmem:[%s11 + $0x80] sm:$0xff] %vm471, %v5428
  %5461 = vst.msk [vmem:[%s11 + $0x88] sm:$0xff] %vm471, %v5429
  %5462 = vst.msk [vmem:[%s11 + $0x90] sm:$0xff] %vm471, %v5430
  %5463 = vst.msk [vmem:[%s11 + $0x98] sm:$0xff] %vm471, %v5431
  %5464 = vst.msk [vmem:[%s11 + $0xa0] sm:$0xff] %vm471, %v5432
  %5465 = vst.msk [vmem:[%s11 + $0xa8] sm:$0xff] %vm471, %v5433
  %5466 = vst.msk [vmem:[%s11 + $0xb0] sm:$0xff] %vm471, %v5434
  %5467 = vst.msk [vmem:[%s11 + $0xb8] sm:$0xff] %vm471, %v5435
  %5468 = vst.msk [vmem:[%s11 + $0xc0] sm:$0xff] %vm471, %v5436
  %5469 = vst.msk [vmem:[%s11 + $0xc8] sm:$0xff] %vm471, %v5437
  %5470 = vst.msk [vmem:[%s11 + $0xd0] sm:$0xff] %vm471, %v5438
  %5471 = vst.msk [vmem:[%s11 + $0xd8] sm:$0xff] %vm471, %v5439
  %5472 = vst.msk [vmem:[%s11 + $0xe0] sm:$0xff] %vm471, %v5440
  %5473 = vst.msk [vmem:[%s11 + $0xe8] sm:$0xff] %vm471, %v5441
  %5474 = vst.msk [vmem:[%s11 + $0xf0] sm:$0xff] %vm471, %v5442
  %5475 = vst.msk [vmem:[%s11 + $0xf8] sm:$0xff] %vm471, %v5443
  // Predicated region
  $region46: #{tpu_custom_call.1} parent=0 // pred_check
    _
  $region47: #{tpu_custom_call.1} parent=0 // pred_check_branch
    %5477 = sbr.rel (0) target = $region49
  $region48: #{tpu_custom_call.1} parent=0 // pred_region
    _
  $region49: #{tpu_custom_call.1} parent=0 // pred_fallthru
    _
  // Predicated region
  $region50: #{tpu_custom_call.1} parent=0 // pred_check
    _
  $region51: #{tpu_custom_call.1} parent=0 // pred_check_branch
    %5479 = sbr.rel (0) target = $region53
  $region52: #{tpu_custom_call.1} parent=0 // pred_region
    _
  $region53: #{tpu_custom_call.1} parent=0 // pred_fallthru
    _

</llo_original>
